<compile_context>
chip_gen: v7x
topology: tpu7x:2x2x1
jax: 0.10.0
libtpu: 0.0.40
codegen_flags: <defaults>
</compile_context>

<pallas_src>
import numpy as np
import jax
import jax.numpy as jnp
from jax.experimental import pallas as pl
from jax.experimental.pallas import tpu as pltpu

# ---------------- synthetic "config" ----------------
HIDDEN = 32            # config.hidden_dim
EMB = 16               # config.emb_dim
VOCAB = 128            # config.vocab_size
POINTER_GEN = True     # config.pointer_gen
N = 2 * HIDDEN         # 2*hidden_dim = 64

VMEM = pltpu.MemorySpace.VMEM
_EPS = 1e-12


def _round_up(x, m):
    return ((x + m - 1) // m) * m


def _vspec():
    return pl.BlockSpec(memory_space=VMEM)


def _pad_to(a, shape):
    pads = [(0, t - s) for s, t in zip(a.shape, shape)]
    if all(p == (0, 0) for p in pads):
        return a
    return jnp.pad(a, pads)


# ---------------- the single fused decoder-step kernel ----------------
def _decoder_step_kernel(
        # data
        xc_ref, h0_ref, c0_ref,
        enc_out_ref, enc_feat_ref, sent_feat_ref,
        w_mask_ref, sent_mask_ref,
        m_ds_ref, m_sd_ref, m_local_ref, shift_ref,
        # weights (pre-transposed / pre-fused at init, p_gen columns folded in)
        wx_ref, bx_ref,
        wih_ref, whh_ref, blstm_ref,
        wproj_ref, bproj_ref, v_ref,
        wo1_ref, bo1_ref, wo2_ref, bo2_ref,
        # outputs
        misc_out, vocab_out,
        # scratch
        hc_ref):
    f32 = jnp.float32
    H = h0_ref.shape[1]
    Nd = 2 * H
    EMBd = wih_ref.shape[0]
    L = shift_ref.shape[2]

    # ---- x = x_context(cat(c_t_1, y_emb)); extra column = p_gen's x-term ----
    x_full = jnp.dot(xc_ref[...], wx_ref[...], preferred_element_type=f32) + bx_ref[...]
    x = x_full[:, 0:EMBd]
    pg_x = x_full[:, EMBd:EMBd + 1]

    # ---- single-step LSTM cell, PyTorch gate order (i, f, g, o) ----
    gates = (jnp.dot(x, wih_ref[...], preferred_element_type=f32)
             + jnp.dot(h0_ref[...], whh_ref[...], preferred_element_type=f32)
             + blstm_ref[...])
    i_g = jax.nn.sigmoid(gates[:, 0:H])
    f_g = jax.nn.sigmoid(gates[:, H:2 * H])
    g_g = jnp.tanh(gates[:, 2 * H:3 * H])
    o_g = jax.nn.sigmoid(gates[:, 3 * H:4 * H])
    c1 = f_g * c0_ref[...] + i_g * g_g
    h1 = o_g * jnp.tanh(c1)

    # ---- s_t_hat = [h1 | c1] built in a VMEM scratch so decode_proj and
    #      sent_decode_proj (and the p_gen s_t_hat column) are ONE K=2H matmul ----
    hc_ref[:, 0:H] = h1
    hc_ref[:, H:2 * H] = c1
    proj = (jnp.dot(hc_ref[:, 0:2 * H], wproj_ref[...], preferred_element_type=f32)
            + bproj_ref[...])
    dec_fea = proj[:, 0:Nd]                 # [Dp, N]
    sent_dec_fea = proj[:, Nd:2 * Nd]       # [Dp, N]
    pg_s = proj[:, 2 * Nd:2 * Nd + 1]       # [Dp, 1]

    # ---- word-level attention over each sentence's words ----
    dec_fea_sent = jnp.dot(m_ds_ref[...], dec_fea, preferred_element_type=f32)   # [bp, N]
    e_w = jnp.tanh(enc_feat_ref[...].astype(f32) + dec_fea_sent[:, None, :])     # [bp,t_k,N]
    # TODO(synk): at production N (512) turn this lane reduction into an MXU dot
    # against a [N, 1] v-column; at N=64 the XLU reduce is cheaper than a relayout.
    scores_w = jnp.sum(e_w * v_ref[0, :][None, None, :], axis=-1)                # [bp, t_k]
    p_w = jnp.exp(scores_w - jnp.max(scores_w, axis=-1, keepdims=True))
    w_att_un = p_w * w_mask_ref[...]        # softmax Z cancels in the renorm below
    w_att = w_att_un / jnp.maximum(jnp.sum(w_att_un, axis=-1, keepdims=True), _EPS)

    # ---- sentence-level attention ----
    e_s = jnp.tanh(sent_feat_ref[...].astype(f32) + sent_dec_fea[:, None, :])    # [Dp,St,N]
    scores_s = jnp.sum(e_s * v_ref[1, :][None, None, :], axis=-1)                # [Dp, St]
    p_s = jnp.exp(scores_s - jnp.max(scores_s, axis=-1, keepdims=True))
    s_att_un = p_s * sent_mask_ref[...]
    s_att = s_att_un / jnp.maximum(jnp.sum(s_att_un, axis=-1, keepdims=True), _EPS)

    # ---- sentence weight broadcast back onto sentence rows (MXU + tiny pick):
    #      sent_w[s] = s_att[doc(s), local(s)] ----
    picked = jnp.dot(m_ds_ref[...], s_att, preferred_element_type=f32)           # [bp, St]
    sent_w = jnp.sum(picked * m_local_ref[...], axis=-1, keepdims=True)          # [bp, 1]

    combined = w_att * sent_w                                                    # [bp, t_k]

    # ---- ragged (sentence, word) -> (doc, position) re-pack as MXU matmuls:
    #      per-sentence shift into doc positions, then doc combine ----
    attn_ps = jnp.einsum('bqw,bwl->bql', combined[:, None, :], shift_ref[...],
                         preferred_element_type=f32)[:, 0, :]                    # [bp, L]
    attn_sw = jnp.dot(m_sd_ref[...], attn_ps, preferred_element_type=f32)        # [Dp, L]

    # ---- context c_t: per-sentence contexts (batched MXU) + doc combine.
    #      Equals bmm(attn_dist_sw, enc_output2); enc_output2 never materialized ----
    enc_out = enc_out_ref[...]
    ctx_s = jnp.einsum('bqk,bkn->bqn', w_att[:, None, :].astype(enc_out.dtype),
                       enc_out, preferred_element_type=f32)[:, 0, :]             # [bp, N]
    c_t = jnp.dot(m_sd_ref[...], sent_w * ctx_s, preferred_element_type=f32)     # [Dp, N]

    # ---- out1 on [h1 | c_t] (reuse scratch; c_t overwrites c1's columns);
    #      extra column = p_gen's c_t-term (+ p_gen bias) ----
    hc_ref[:, H:H + Nd] = c_t
    hid_full = (jnp.dot(hc_ref[...], wo1_ref[...], preferred_element_type=f32)
                + bo1_ref[...])
    hid = hid_full[:, 0:H]
    pg_c = hid_full[:, H:H + 1]

    p_gen = jax.nn.sigmoid(pg_x + pg_s + pg_c)                                   # [Dp, 1]

    # ---- vocab head: out2 -> exact softmax, pre-scaled by p_gen ----
    logits = jnp.dot(hid, wo2_ref[...], preferred_element_type=f32) + bo2_ref[...]
    p_v = jnp.exp(logits - jnp.max(logits, axis=-1, keepdims=True))
    vocab = p_v / jnp.sum(p_v, axis=-1, keepdims=True)
    vocab_out[...] = p_gen * vocab

    # ---- pack the small outputs into one lane-dense slab ----
    misc_out[...] = jnp.zeros_like(misc_out)
    misc_out[:, 0:H] = h1
    misc_out[:, H:2 * H] = c1
    misc_out[:, 2 * H:2 * H + Nd] = c_t
    misc_out[:, 2 * H + Nd:2 * H + Nd + L] = attn_sw
    misc_out[:, 2 * H + Nd + L:2 * H + Nd + 2 * L] = (1.0 - p_gen) * attn_sw
    misc_out[:, 2 * H + Nd + 2 * L:2 * H + Nd + 2 * L + 1] = p_gen


# ---------------- parameters (pre-transposed / pre-fused once) ----------------
def init_params(key):
    ks = jax.random.split(key, 16)
    std, mag = 0.05, 0.02
    emb = jax.random.normal(ks[0], (VOCAB, EMB)) * std
    x_context_w = jax.random.normal(ks[1], (EMB, N + EMB)) * std      # torch [out,in]
    x_context_b = jax.random.normal(ks[2], (EMB,)) * std
    # LSTM (init_lstm_wt): uniform weights, forget-gate bias = 1, others 0
    w_ih = jax.random.uniform(ks[3], (4 * HIDDEN, EMB), minval=-mag, maxval=mag)
    w_hh = jax.random.uniform(ks[4], (4 * HIDDEN, HIDDEN), minval=-mag, maxval=mag)
    bvec = np.zeros((4 * HIDDEN,), np.float32)
    bvec[HIDDEN:2 * HIDDEN] = 1.0
    b_lstm = jnp.asarray(bvec) * 2.0                                   # b_ih + b_hh
    decode_proj_w = jax.random.normal(ks[5], (N, N)) * std
    decode_proj_b = jax.random.normal(ks[6], (N,)) * std
    v_w = jax.random.normal(ks[7], (1, N)) * std
    sent_decode_proj_w = jax.random.normal(ks[8], (N, N)) * std
    sent_decode_proj_b = jax.random.normal(ks[9], (N,)) * std
    sent_v_w = jax.random.normal(ks[10], (1, N)) * std
    p_gen_w = jax.random.normal(ks[11], (1, 4 * HIDDEN + EMB)) * std
    p_gen_b = jax.random.normal(ks[12], (1,)) * std
    out1_w = jax.random.normal(ks[13], (HIDDEN, 3 * HIDDEN)) * std
    out1_b = jnp.zeros((HIDDEN,))
    out2_w = jax.random.normal(ks[14], (VOCAB, HIDDEN)) * std
    out2_b = jax.random.normal(ks[15], (VOCAB,)) * std

    # p_gen weight split (torch layout: [c_t (N) | s_t_hat (2H) | x (EMB)])
    wpg_c = p_gen_w[:, 0:N]                      # [1, N]
    wpg_s = p_gen_w[:, N:N + 2 * HIDDEN]         # [1, 2H]
    wpg_x = p_gen_w[:, N + 2 * HIDDEN:]          # [1, EMB]

    # x_context with the p_gen x-term fused as an extra output column
    WxT = x_context_w.T                                                 # [N+EMB, EMB]
    Wx_aug = jnp.concatenate([WxT, WxT @ wpg_x.T], axis=1)              # [N+EMB, EMB+1]
    bx_extra = jnp.dot(x_context_b, wpg_x[0]).reshape(1)
    bx_aug = jnp.concatenate([x_context_b, bx_extra]).reshape(1, -1)

    # decode_proj + sent_decode_proj + p_gen s_t_hat-term fused: [2H, 2N+1]
    W_proj = jnp.concatenate(
        [decode_proj_w.T, sent_decode_proj_w.T, wpg_s.T], axis=1)
    b_proj = jnp.concatenate(
        [decode_proj_b, sent_decode_proj_b, jnp.zeros((1,))]).reshape(1, -1)

    # out1 + p_gen c_t-term fused: [3H, H+1]; rows = [h1(H); c_t(2H)]
    pg_col = jnp.concatenate([jnp.zeros((HIDDEN, 1)), wpg_c.T], axis=0)  # [3H, 1]
    W_o1 = jnp.concatenate([out1_w.T, pg_col], axis=1)                   # [3H, H+1]
    b_o1 = jnp.concatenate([out1_b, p_gen_b]).reshape(1, -1)

    p = {
        'embedding': emb,
        'Wx': Wx_aug, 'bx': bx_aug,
        'W_ih_T': w_ih.T, 'W_hh_T': w_hh.T, 'b_lstm': b_lstm.reshape(1, -1),
        'W_proj': W_proj, 'b_proj': b_proj,
        'v_both': jnp.concatenate([v_w, sent_v_w], axis=0),              # [2, N]
        'W_o1': W_o1, 'b_o1': b_o1,
        'Wo2': out2_w.T, 'b_o2': out2_b.reshape(1, -1),
    }
    return jax.tree_util.tree_map(lambda a: jnp.asarray(a, jnp.float32), p)


# ---------------- static index / re-pack tables (built ONCE per batch) ----------------
def build_decoder_tables(D, b, t_k, sent_t_k, max_doc_len, sent_lens, seq_lens2):
    sent_lens = [int(x) for x in sent_lens]
    seq_lens2 = [int(x) for x in seq_lens2]
    Dp = _round_up(max(D, 1), 8)
    bp = _round_up(max(b, 1), 8)
    L = int(max_doc_len)

    doc_of_sent = np.repeat(np.arange(D), sent_lens)
    local_of_sent = np.concatenate([np.arange(l) for l in sent_lens])
    m_ds = np.zeros((bp, Dp), np.float32)       # sentence row -> its doc (one-hot)
    m_local = np.zeros((bp, sent_t_k), np.float32)
    m_ds[np.arange(b), doc_of_sent] = 1.0
    m_local[np.arange(b), local_of_sent] = 1.0
    m_sd = np.ascontiguousarray(m_ds.T)         # doc -> its sentences (one-hot)

    w_mask = np.zeros((bp, t_k), np.float32)
    for s, l in enumerate(seq_lens2):
        w_mask[s, :l] = 1.0

    # shift[s, w, l] = 1 iff doc position l == offset_in_doc(s) + w and w < len(s).
    # Factor-D smaller than the old dense [D, L, b, t_k] table (v7x VMEM fix) and
    # consumed as a batched MXU matmul in the kernel.
    shift = np.zeros((bp, t_k, L), np.float32)
    s = 0
    for ln in sent_lens:
        off = 0
        for _ in range(ln):
            l1 = seq_lens2[s]
            for w in range(l1):
                shift[s, w, off + w] = 1.0
            off += l1
            s += 1

    return {
        'm_ds': jnp.asarray(m_ds), 'm_sd': jnp.asarray(m_sd),
        'm_local': jnp.asarray(m_local), 'w_mask': jnp.asarray(w_mask),
        'shift': jnp.asarray(shift), 'Dp': Dp, 'bp': bp,
    }


# ---------------- Decoder.forward ----------------
def decoder_forward(params, y_t_1, s_t_1, encoder_outputs, encoder_feature,
                    enc_padding_mask, seq_lens2, sent_s_t_1, sent_enc_outputs,
                    sent_enc_feature, sent_enc_padding_mask, sent_lens,
                    max_doc_len, c_t_1, extra_zeros, enc_batch_extend_vocab,
                    coverage, step, training=True, tables=None,
                    feature_dtype=jnp.float32):
    # NOTE: the `not self.training and step == 0` warm-up branch is skipped
    # (module assumed in training mode, the nn.Module default).
    # feature_dtype=jnp.bfloat16 is recommended on v6e/v7x (halves feature DMA /
    # VMEM, f32 MXU accumulation kept); keep f32 on v5e.
    b, t_k, n = encoder_outputs.shape
    D = c_t_1.shape[0]
    sent_t_k = sent_enc_outputs.shape[1]
    L = int(max_doc_len)
    H = HIDDEN

    if tables is None:   # convenience fallback; hoist out of the decode loop!
        tables = build_decoder_tables(D, b, t_k, sent_t_k, L, sent_lens, seq_lens2)
    Dp, bp = tables['Dp'], tables['bp']

    # XLA glue: embedding gather + input packing / sublane padding (D->Dp, b->bp)
    y_emb = params['embedding'][y_t_1]                                   # [D, EMB]
    xc = jnp.concatenate([c_t_1, y_emb], axis=1)                         # [D, N+EMB]
    h0, c0 = sent_s_t_1[0][0], sent_s_t_1[1][0]                          # [D, H]

    xc_p = _pad_to(xc, (Dp, N + EMB))
    h0_p = _pad_to(h0, (Dp, H))
    c0_p = _pad_to(c0, (Dp, H))
    enc_out_p = _pad_to(encoder_outputs, (bp, t_k, n)).astype(feature_dtype)
    enc_feat_p = _pad_to(encoder_feature.reshape(b, t_k, n), (bp, t_k, n)).astype(feature_dtype)
    sent_feat_p = _pad_to(sent_enc_feature.reshape(D, sent_t_k, n),
                          (Dp, sent_t_k, n)).astype(feature_dtype)
    sent_mask_p = _pad_to(sent_enc_padding_mask, (Dp, sent_t_k))

    misc_w = 2 * H + n + 2 * L + 1
    misc_pad = _round_up(misc_w, 128)

    args = (
        xc_p, h0_p, c0_p,
        enc_out_p, enc_feat_p, sent_feat_p,
        tables['w_mask'], sent_mask_p,
        tables['m_ds'], tables['m_sd'], tables['m_local'], tables['shift'],
        params['Wx'], params['bx'],
        params['W_ih_T'], params['W_hh_T'], params['b_lstm'],
        params['W_proj'], params['b_proj'], params['v_both'],
        params['W_o1'], params['b_o1'], params['Wo2'], params['b_o2'],
    )
    out_shapes = (
        jax.ShapeDtypeStruct((Dp, misc_pad), jnp.float32),   # packed small outputs
        jax.ShapeDtypeStruct((Dp, VOCAB), jnp.float32),      # p_gen * vocab_dist
    )
    # TODO(synk): at production batch (Dp >= 128) add a doc-axis grid with
    # dimension_semantics=("parallel",) (2nd v7x TensorCore) and set
    # vmem_limit_bytes; at Dp=8 a grid only adds per-step overhead.
    misc, vocab_scaled_p = pl.pallas_call(
        _decoder_step_kernel,
        out_shape=out_shapes,
        in_specs=[_vspec() for _ in args],
        out_specs=tuple(_vspec() for _ in out_shapes),
        scratch_shapes=[pltpu.VMEM((Dp, 3 * H), jnp.float32)],
    )(*args)

    h1 = misc[:D, 0:H]
    c1 = misc[:D, H:2 * H]
    c_t = misc[:D, 2 * H:2 * H + n]
    attn_dist = misc[:D, 2 * H + n:2 * H + n + L]
    attn_scaled = misc[:D, 2 * H + n + L:2 * H + n + 2 * L]
    p_gen = misc[:D, 2 * H + n + 2 * L:2 * H + n + 2 * L + 1]
    vocab_scaled = vocab_scaled_p[:D]

    s_t = (h1[None], c1[None])
    # coverage passes through unchanged (is_coverage branch disabled in this config)

    if POINTER_GEN:
        vocab_dist_ = vocab_scaled
        if extra_zeros is not None:
            vocab_dist_ = jnp.concatenate([vocab_dist_, extra_zeros], axis=1)
        # TODO(synk): scatter-add into the extended vocab has no clean Pallas TPU
        # equivalent; done with XLA .at[].add.  Padded word positions carry
        # attn_scaled == 0, so their arbitrary index values are harmless.
        rows = jnp.arange(D)[:, None]
        final_dist = vocab_dist_.at[rows, enc_batch_extend_vocab].add(attn_scaled)
    else:
        final_dist = vocab_scaled

    return final_dist, s_t, c_t, attn_dist, p_gen, coverage


# ---------------- driver ----------------
if __name__ == "__main__":
    key = jax.random.PRNGKey(0)
    pkey, dkey = jax.random.split(key)
    params = init_params(pkey)

    D = 2                          # documents (decoder batch)
    sent_lens = [3, 2]             # sentences per document
    b = sum(sent_lens)             # 5 total sentences
    t_k = 8                        # max words per sentence
    seq_lens2 = [8, 5, 3, 6, 4]    # words per sentence
    sent_t_k = max(sent_lens)      # 3
    max_doc_len = 16               # max total words per document (8+5+3)
    n_extra = 3

    # Built once per batch and reused for every decode step.
    tables = build_decoder_tables(D, b, t_k, sent_t_k, max_doc_len, sent_lens, seq_lens2)

    ks = jax.random.split(dkey, 10)
    y_t_1 = jax.random.randint(ks[0], (D,), 0, VOCAB)
    h0 = jax.random.normal(ks[1], (1, D, HIDDEN), jnp.float32) * 0.1
    c0 = jax.random.normal(ks[2], (1, D, HIDDEN), jnp.float32) * 0.1
    sent_s_t_1 = (h0, c0)
    encoder_outputs = jax.random.normal(ks[3], (b, t_k, N), jnp.float32) * 0.1
    encoder_feature = jax.random.normal(ks[4], (b * t_k, N), jnp.float32) * 0.1
    enc_padding_mask = jnp.ones((b, t_k), jnp.float32)
    sent_enc_outputs = jax.random.normal(ks[5], (D, sent_t_k, N), jnp.float32) * 0.1
    sent_enc_feature = jax.random.normal(ks[6], (D * sent_t_k, N), jnp.float32) * 0.1
    sent_enc_padding_mask = jnp.array(
        [[1.0] * l + [0.0] * (sent_t_k - l) for l in sent_lens], jnp.float32)
    c_t_1 = jax.random.normal(ks[7], (D, N), jnp.float32) * 0.1
    extra_zeros = jnp.zeros((D, n_extra), jnp.float32)
    enc_batch_extend_vocab = jax.random.randint(ks[8], (D, max_doc_len), 0, VOCAB + n_extra)
    coverage = jnp.zeros((b, t_k), jnp.float32)
    step = 1

    outs = decoder_forward(params, y_t_1, sent_s_t_1, encoder_outputs,
                           encoder_feature, enc_padding_mask, seq_lens2,
                           sent_s_t_1, sent_enc_outputs, sent_enc_feature,
                           sent_enc_padding_mask, sent_lens, max_doc_len,
                           c_t_1, extra_zeros, enc_batch_extend_vocab,
                           coverage, step, tables=tables)
    final_dist, s_t, c_t, attn_dist, p_gen, coverage_out = outs
    jax.block_until_ready((final_dist, s_t, c_t, attn_dist, p_gen, coverage_out))

    assert final_dist.shape == (D, VOCAB + n_extra)
    assert attn_dist.shape == (D, max_doc_len)
    assert c_t.shape == (D, N)
    assert p_gen.shape == (D, 1)
    assert s_t[0].shape == (1, D, HIDDEN) and s_t[1].shape == (1, D, HIDDEN)
    print("KERNEL_OK")
</pallas_src>

<mosaic_0001>
module attributes {stable_mosaic.version = 11 : i64} {
  func.func @_decoder_step_kernel(%arg0: memref<8x80xf32, #tpu.memory_space<vmem>>, %arg1: memref<8x32xf32, #tpu.memory_space<vmem>>, %arg2: memref<8x32xf32, #tpu.memory_space<vmem>>, %arg3: memref<8x8x64xf32, #tpu.memory_space<vmem>>, %arg4: memref<8x8x64xf32, #tpu.memory_space<vmem>>, %arg5: memref<8x3x64xf32, #tpu.memory_space<vmem>>, %arg6: memref<8x8xf32, #tpu.memory_space<vmem>>, %arg7: memref<8x3xf32, #tpu.memory_space<vmem>>, %arg8: memref<8x8xf32, #tpu.memory_space<vmem>>, %arg9: memref<8x8xf32, #tpu.memory_space<vmem>>, %arg10: memref<8x3xf32, #tpu.memory_space<vmem>>, %arg11: memref<8x8x16xf32, #tpu.memory_space<vmem>>, %arg12: memref<80x17xf32, #tpu.memory_space<vmem>>, %arg13: memref<1x17xf32, #tpu.memory_space<vmem>>, %arg14: memref<16x128xf32, #tpu.memory_space<vmem>>, %arg15: memref<32x128xf32, #tpu.memory_space<vmem>>, %arg16: memref<1x128xf32, #tpu.memory_space<vmem>>, %arg17: memref<64x129xf32, #tpu.memory_space<vmem>>, %arg18: memref<1x129xf32, #tpu.memory_space<vmem>>, %arg19: memref<2x64xf32, #tpu.memory_space<vmem>>, %arg20: memref<96x33xf32, #tpu.memory_space<vmem>>, %arg21: memref<1x33xf32, #tpu.memory_space<vmem>>, %arg22: memref<32x128xf32, #tpu.memory_space<vmem>>, %arg23: memref<1x128xf32, #tpu.memory_space<vmem>>, %arg24: memref<8x256xf32, #tpu.memory_space<vmem>>, %arg25: memref<8x128xf32, #tpu.memory_space<vmem>>, %arg26: memref<8x96xf32, #tpu.memory_space<vmem>>) attributes {dimension_semantics = [], scalar_prefetch = 0 : i64, scratch_operands = 1 : i64, tpu.core_type = #tpu.core_type<tc>} {
    %c0 = arith.constant 0 : index
    %c0_0 = arith.constant 0 : index
    %0 = vector.load %arg0[%c0, %c0_0] : memref<8x80xf32, #tpu.memory_space<vmem>>, vector<8x80xf32>
    %c0_1 = arith.constant 0 : index
    %c0_2 = arith.constant 0 : index
    %1 = vector.load %arg12[%c0_1, %c0_2] : memref<80x17xf32, #tpu.memory_space<vmem>>, vector<80x17xf32>
    %cst = arith.constant dense<0.000000e+00> : vector<8x17xf32>
    %2 = tpu.matmul %0, %1, %cst {dimension_numbers = #tpu.dot_dimension_numbers<[1], [0], [0], [1], [0, 0, 1, 1], [], []>} : vector<8x80xf32>, vector<80x17xf32>, vector<8x17xf32> -> vector<8x17xf32>
    %c0_3 = arith.constant 0 : index
    %c0_4 = arith.constant 0 : index
    %3 = vector.load %arg13[%c0_3, %c0_4] : memref<1x17xf32, #tpu.memory_space<vmem>>, vector<1x17xf32>
    %4 = vector.broadcast %3 : vector<1x17xf32> to vector<8x17xf32>
    %5 = arith.addf %2, %4 : vector<8x17xf32>
    %6 = vector.extract_strided_slice %5 {offsets = [0, 0], sizes = [8, 16], strides = [1, 1]} : vector<8x17xf32> to vector<8x16xf32>
    %7 = vector.extract_strided_slice %5 {offsets = [0, 16], sizes = [8, 1], strides = [1, 1]} : vector<8x17xf32> to vector<8x1xf32>
    %c0_5 = arith.constant 0 : index
    %c0_6 = arith.constant 0 : index
    %8 = vector.load %arg14[%c0_5, %c0_6] : memref<16x128xf32, #tpu.memory_space<vmem>>, vector<16x128xf32>
    %cst_7 = arith.constant dense<0.000000e+00> : vector<8x128xf32>
    %9 = tpu.matmul %6, %8, %cst_7 {dimension_numbers = #tpu.dot_dimension_numbers<[1], [0], [0], [1], [0, 0, 1, 1], [], []>} : vector<8x16xf32>, vector<16x128xf32>, vector<8x128xf32> -> vector<8x128xf32>
    %c0_8 = arith.constant 0 : index
    %c0_9 = arith.constant 0 : index
    %10 = vector.load %arg1[%c0_8, %c0_9] : memref<8x32xf32, #tpu.memory_space<vmem>>, vector<8x32xf32>
    %c0_10 = arith.constant 0 : index
    %c0_11 = arith.constant 0 : index
    %11 = vector.load %arg15[%c0_10, %c0_11] : memref<32x128xf32, #tpu.memory_space<vmem>>, vector<32x128xf32>
    %cst_12 = arith.constant dense<0.000000e+00> : vector<8x128xf32>
    %12 = tpu.matmul %10, %11, %cst_12 {dimension_numbers = #tpu.dot_dimension_numbers<[1], [0], [0], [1], [0, 0, 1, 1], [], []>} : vector<8x32xf32>, vector<32x128xf32>, vector<8x128xf32> -> vector<8x128xf32>
    %13 = arith.addf %9, %12 : vector<8x128xf32>
    %c0_13 = arith.constant 0 : index
    %c0_14 = arith.constant 0 : index
    %14 = vector.load %arg16[%c0_13, %c0_14] : memref<1x128xf32, #tpu.memory_space<vmem>>, vector<1x128xf32>
    %15 = vector.broadcast %14 : vector<1x128xf32> to vector<8x128xf32>
    %16 = arith.addf %13, %15 : vector<8x128xf32>
    %17 = vector.extract_strided_slice %16 {offsets = [0, 0], sizes = [8, 32], strides = [1, 1]} : vector<8x128xf32> to vector<8x32xf32>
    %18 = arith.negf %17 : vector<8x32xf32>
    %19 = math.exp %18 : vector<8x32xf32>
    %cst_15 = arith.constant 1.000000e+00 : f32
    %20 = vector.broadcast %cst_15 : f32 to vector<8x32xf32>
    %21 = arith.addf %20, %19 : vector<8x32xf32>
    %22 = arith.divf %20, %21 : vector<8x32xf32>
    %23 = vector.extract_strided_slice %16 {offsets = [0, 32], sizes = [8, 32], strides = [1, 1]} : vector<8x128xf32> to vector<8x32xf32>
    %24 = arith.negf %23 : vector<8x32xf32>
    %25 = math.exp %24 : vector<8x32xf32>
    %cst_16 = arith.constant 1.000000e+00 : f32
    %26 = vector.broadcast %cst_16 : f32 to vector<8x32xf32>
    %27 = arith.addf %26, %25 : vector<8x32xf32>
    %28 = arith.divf %26, %27 : vector<8x32xf32>
    %29 = vector.extract_strided_slice %16 {offsets = [0, 64], sizes = [8, 32], strides = [1, 1]} : vector<8x128xf32> to vector<8x32xf32>
    %30 = math.tanh %29 : vector<8x32xf32>
    %31 = vector.extract_strided_slice %16 {offsets = [0, 96], sizes = [8, 32], strides = [1, 1]} : vector<8x128xf32> to vector<8x32xf32>
    %32 = arith.negf %31 : vector<8x32xf32>
    %33 = math.exp %32 : vector<8x32xf32>
    %cst_17 = arith.constant 1.000000e+00 : f32
    %34 = vector.broadcast %cst_17 : f32 to vector<8x32xf32>
    %35 = arith.addf %34, %33 : vector<8x32xf32>
    %36 = arith.divf %34, %35 : vector<8x32xf32>
    %c0_18 = arith.constant 0 : index
    %c0_19 = arith.constant 0 : index
    %37 = vector.load %arg2[%c0_18, %c0_19] : memref<8x32xf32, #tpu.memory_space<vmem>>, vector<8x32xf32>
    %38 = arith.mulf %28, %37 : vector<8x32xf32>
    %39 = arith.mulf %22, %30 : vector<8x32xf32>
    %40 = arith.addf %38, %39 : vector<8x32xf32>
    %41 = math.tanh %40 : vector<8x32xf32>
    %42 = arith.mulf %36, %41 : vector<8x32xf32>
    %c0_20 = arith.constant 0 : index
    %c0_21 = arith.constant 0 : index
    %43 = vector.load %arg26[%c0_20, %c0_21] : memref<8x96xf32, #tpu.memory_space<vmem>>, vector<8x32xf32>
    tpu.vector_store %arg26[%c0_20, %c0_21], %42 {strides = array<i32>} : memref<8x96xf32, #tpu.memory_space<vmem>>, vector<8x32xf32>,
    %c0_22 = arith.constant 0 : index
    %c32 = arith.constant 32 : index
    %44 = vector.load %arg26[%c0_22, %c32] : memref<8x96xf32, #tpu.memory_space<vmem>>, vector<8x32xf32>
    tpu.vector_store %arg26[%c0_22, %c32], %40 {strides = array<i32>} : memref<8x96xf32, #tpu.memory_space<vmem>>, vector<8x32xf32>,
    %c0_23 = arith.constant 0 : index
    %c0_24 = arith.constant 0 : index
    %45 = vector.load %arg26[%c0_23, %c0_24] : memref<8x96xf32, #tpu.memory_space<vmem>>, vector<8x64xf32>
    %c0_25 = arith.constant 0 : index
    %c0_26 = arith.constant 0 : index
    %46 = vector.load %arg17[%c0_25, %c0_26] : memref<64x129xf32, #tpu.memory_space<vmem>>, vector<64x129xf32>
    %cst_27 = arith.constant dense<0.000000e+00> : vector<8x129xf32>
    %47 = tpu.matmul %45, %46, %cst_27 {dimension_numbers = #tpu.dot_dimension_numbers<[1], [0], [0], [1], [0, 0, 1, 1], [], []>} : vector<8x64xf32>, vector<64x129xf32>, vector<8x129xf32> -> vector<8x129xf32>
    %c0_28 = arith.constant 0 : index
    %c0_29 = arith.constant 0 : index
    %48 = vector.load %arg18[%c0_28, %c0_29] : memref<1x129xf32, #tpu.memory_space<vmem>>, vector<1x129xf32>
    %49 = vector.broadcast %48 : vector<1x129xf32> to vector<8x129xf32>
    %50 = arith.addf %47, %49 : vector<8x129xf32>
    %51 = vector.extract_strided_slice %50 {offsets = [0, 0], sizes = [8, 64], strides = [1, 1]} : vector<8x129xf32> to vector<8x64xf32>
    %52 = vector.extract_strided_slice %50 {offsets = [0, 64], sizes = [8, 64], strides = [1, 1]} : vector<8x129xf32> to vector<8x64xf32>
    %53 = vector.extract_strided_slice %50 {offsets = [0, 128], sizes = [8, 1], strides = [1, 1]} : vector<8x129xf32> to vector<8x1xf32>
    %c0_30 = arith.constant 0 : index
    %c0_31 = arith.constant 0 : index
    %54 = vector.load %arg8[%c0_30, %c0_31] : memref<8x8xf32, #tpu.memory_space<vmem>>, vector<8x8xf32>
    %cst_32 = arith.constant dense<0.000000e+00> : vector<8x64xf32>
    %55 = tpu.matmul %54, %51, %cst_32 {dimension_numbers = #tpu.dot_dimension_numbers<[1], [0], [0], [1], [0, 0, 1, 1], [], []>} : vector<8x8xf32>, vector<8x64xf32>, vector<8x64xf32> -> vector<8x64xf32>
    %c0_33 = arith.constant 0 : index
    %c0_34 = arith.constant 0 : index
    %c0_35 = arith.constant 0 : index
    %56 = vector.load %arg4[%c0_33, %c0_34, %c0_35] : memref<8x8x64xf32, #tpu.memory_space<vmem>>, vector<8x8x64xf32>
    %57 = vector.shape_cast %55 : vector<8x64xf32> to vector<8x1x64xf32>
    %58 = vector.broadcast %57 : vector<8x1x64xf32> to vector<8x8x64xf32>
    %59 = arith.addf %56, %58 : vector<8x8x64xf32>
    %60 = math.tanh %59 : vector<8x8x64xf32>
    %c0_36 = arith.constant 0 : index
    %c0_37 = arith.constant 0 : index
    %61 = vector.load %arg19[%c0_36, %c0_37] : memref<2x64xf32, #tpu.memory_space<vmem>>, vector<1x64xf32>
    %62 = vector.shape_cast %61 : vector<1x64xf32> to vector<64xf32>
    %63 = vector.shape_cast %62 : vector<64xf32> to vector<1x1x64xf32>
    %64 = vector.broadcast %63 : vector<1x1x64xf32> to vector<8x8x64xf32>
    %65 = arith.mulf %60, %64 : vector<8x8x64xf32>
    %cst_38 = arith.constant dense<0.000000e+00> : vector<8x8xf32>
    %66 = vector.multi_reduction <add>, %65, %cst_38 [2] : vector<8x8x64xf32> to vector<8x8xf32>
    %cst_39 = arith.constant dense<0xFF800000> : vector<8xf32>
    %67 = vector.multi_reduction <maximumf>, %66, %cst_39 [1] : vector<8x8xf32> to vector<8xf32>
    %68 = vector.shape_cast %67 : vector<8xf32> to vector<8x1xf32>
    %69 = vector.broadcast %68 : vector<8x1xf32> to vector<8x8xf32>
    %70 = arith.subf %66, %69 : vector<8x8xf32>
    %71 = math.exp %70 : vector<8x8xf32>
    %c0_40 = arith.constant 0 : index
    %c0_41 = arith.constant 0 : index
    %72 = vector.load %arg6[%c0_40, %c0_41] : memref<8x8xf32, #tpu.memory_space<vmem>>, vector<8x8xf32>
    %73 = arith.mulf %71, %72 : vector<8x8xf32>
    %cst_42 = arith.constant dense<0.000000e+00> : vector<8xf32>
    %74 = vector.multi_reduction <add>, %73, %cst_42 [1] : vector<8x8xf32> to vector<8xf32>
    %75 = vector.shape_cast %74 : vector<8xf32> to vector<8x1xf32>
    %cst_43 = arith.constant 9.99999996E-13 : f32
    %76 = vector.broadcast %cst_43 : f32 to vector<8x1xf32>
    %77 = arith.maximumf %75, %76 : vector<8x1xf32>
    %78 = vector.broadcast %77 : vector<8x1xf32> to vector<8x8xf32>
    %79 = arith.divf %73, %78 : vector<8x8xf32>
    %c0_44 = arith.constant 0 : index
    %c0_45 = arith.constant 0 : index
    %c0_46 = arith.constant 0 : index
    %80 = vector.load %arg5[%c0_44, %c0_45, %c0_46] : memref<8x3x64xf32, #tpu.memory_space<vmem>>, vector<8x3x64xf32>
    %81 = vector.shape_cast %52 : vector<8x64xf32> to vector<8x1x64xf32>
    %82 = vector.broadcast %81 : vector<8x1x64xf32> to vector<8x3x64xf32>
    %83 = arith.addf %80, %82 : vector<8x3x64xf32>
    %84 = math.tanh %83 : vector<8x3x64xf32>
    %c1 = arith.constant 1 : index
    %c0_47 = arith.constant 0 : index
    %85 = vector.load %arg19[%c1, %c0_47] : memref<2x64xf32, #tpu.memory_space<vmem>>, vector<1x64xf32>
    %86 = vector.shape_cast %85 : vector<1x64xf32> to vector<64xf32>
    %87 = vector.shape_cast %86 : vector<64xf32> to vector<1x1x64xf32>
    %88 = vector.broadcast %87 : vector<1x1x64xf32> to vector<8x3x64xf32>
    %89 = arith.mulf %84, %88 : vector<8x3x64xf32>
    %cst_48 = arith.constant dense<0.000000e+00> : vector<8x3xf32>
    %90 = vector.multi_reduction <add>, %89, %cst_48 [2] : vector<8x3x64xf32> to vector<8x3xf32>
    %cst_49 = arith.constant dense<0xFF800000> : vector<8xf32>
    %91 = vector.multi_reduction <maximumf>, %90, %cst_49 [1] : vector<8x3xf32> to vector<8xf32>
    %92 = vector.shape_cast %91 : vector<8xf32> to vector<8x1xf32>
    %93 = vector.broadcast %92 : vector<8x1xf32> to vector<8x3xf32>
    %94 = arith.subf %90, %93 : vector<8x3xf32>
    %95 = math.exp %94 : vector<8x3xf32>
    %c0_50 = arith.constant 0 : index
    %c0_51 = arith.constant 0 : index
    %96 = vector.load %arg7[%c0_50, %c0_51] : memref<8x3xf32, #tpu.memory_space<vmem>>, vector<8x3xf32>
    %97 = arith.mulf %95, %96 : vector<8x3xf32>
    %cst_52 = arith.constant dense<0.000000e+00> : vector<8xf32>
    %98 = vector.multi_reduction <add>, %97, %cst_52 [1] : vector<8x3xf32> to vector<8xf32>
    %99 = vector.shape_cast %98 : vector<8xf32> to vector<8x1xf32>
    %cst_53 = arith.constant 9.99999996E-13 : f32
    %100 = vector.broadcast %cst_53 : f32 to vector<8x1xf32>
    %101 = arith.maximumf %99, %100 : vector<8x1xf32>
    %102 = vector.broadcast %101 : vector<8x1xf32> to vector<8x3xf32>
    %103 = arith.divf %97, %102 : vector<8x3xf32>
    %c0_54 = arith.constant 0 : index
    %c0_55 = arith.constant 0 : index
    %104 = vector.load %arg8[%c0_54, %c0_55] : memref<8x8xf32, #tpu.memory_space<vmem>>, vector<8x8xf32>
    %cst_56 = arith.constant dense<0.000000e+00> : vector<8x3xf32>
    %105 = tpu.matmul %104, %103, %cst_56 {dimension_numbers = #tpu.dot_dimension_numbers<[1], [0], [0], [1], [0, 0, 1, 1], [], []>} : vector<8x8xf32>, vector<8x3xf32>, vector<8x3xf32> -> vector<8x3xf32>
    %c0_57 = arith.constant 0 : index
    %c0_58 = arith.constant 0 : index
    %106 = vector.load %arg10[%c0_57, %c0_58] : memref<8x3xf32, #tpu.memory_space<vmem>>, vector<8x3xf32>
    %107 = arith.mulf %105, %106 : vector<8x3xf32>
    %cst_59 = arith.constant dense<0.000000e+00> : vector<8xf32>
    %108 = vector.multi_reduction <add>, %107, %cst_59 [1] : vector<8x3xf32> to vector<8xf32>
    %109 = vector.shape_cast %108 : vector<8xf32> to vector<8x1xf32>
    %110 = vector.broadcast %109 : vector<8x1xf32> to vector<8x8xf32>
    %111 = arith.mulf %79, %110 : vector<8x8xf32>
    %112 = vector.shape_cast %111 : vector<8x8xf32> to vector<8x1x8xf32>
    %c0_60 = arith.constant 0 : index
    %c0_61 = arith.constant 0 : index
    %c0_62 = arith.constant 0 : index
    %113 = vector.load %arg11[%c0_60, %c0_61, %c0_62] : memref<8x8x16xf32, #tpu.memory_space<vmem>>, vector<8x8x16xf32>
    "tpu.trace_start"() <{level = 10 : i32, message = "bqw,bwl->bql"}> : () -> ()
    %cst_63 = arith.constant dense<0.000000e+00> : vector<8x1x16xf32>
    %114 = tpu.matmul %112, %113, %cst_63 {dimension_numbers = #tpu.dot_dimension_numbers<[2], [1], [1], [2], [0, 0, 0, 1, 1, 2], [0], [0]>} : vector<8x1x8xf32>, vector<8x8x16xf32>, vector<8x1x16xf32> -> vector<8x1x16xf32>
    "tpu.trace_stop"() : () -> ()
    %115 = vector.shape_cast %114 : vector<8x1x16xf32> to vector<8x16xf32>
    %c0_64 = arith.constant 0 : index
    %c0_65 = arith.constant 0 : index
    %116 = vector.load %arg9[%c0_64, %c0_65] : memref<8x8xf32, #tpu.memory_space<vmem>>, vector<8x8xf32>
    %cst_66 = arith.constant dense<0.000000e+00> : vector<8x16xf32>
    %117 = tpu.matmul %116, %115, %cst_66 {dimension_numbers = #tpu.dot_dimension_numbers<[1], [0], [0], [1], [0, 0, 1, 1], [], []>} : vector<8x8xf32>, vector<8x16xf32>, vector<8x16xf32> -> vector<8x16xf32>
    %c0_67 = arith.constant 0 : index
    %c0_68 = arith.constant 0 : index
    %c0_69 = arith.constant 0 : index
    %118 = vector.load %arg3[%c0_67, %c0_68, %c0_69] : memref<8x8x64xf32, #tpu.memory_space<vmem>>, vector<8x8x64xf32>
    %119 = vector.shape_cast %79 : vector<8x8xf32> to vector<8x1x8xf32>
    "tpu.trace_start"() <{level = 10 : i32, message = "bqk,bkn->bqn"}> : () -> ()
    %cst_70 = arith.constant dense<0.000000e+00> : vector<8x1x64xf32>
    %120 = tpu.matmul %119, %118, %cst_70 {dimension_numbers = #tpu.dot_dimension_numbers<[2], [1], [1], [2], [0, 0, 0, 1, 1, 2], [0], [0]>} : vector<8x1x8xf32>, vector<8x8x64xf32>, vector<8x1x64xf32> -> vector<8x1x64xf32>
    "tpu.trace_stop"() : () -> ()
    %121 = vector.shape_cast %120 : vector<8x1x64xf32> to vector<8x64xf32>
    %c0_71 = arith.constant 0 : index
    %c0_72 = arith.constant 0 : index
    %122 = vector.load %arg9[%c0_71, %c0_72] : memref<8x8xf32, #tpu.memory_space<vmem>>, vector<8x8xf32>
    %123 = vector.broadcast %109 : vector<8x1xf32> to vector<8x64xf32>
    %124 = arith.mulf %123, %121 : vector<8x64xf32>
    %cst_73 = arith.constant dense<0.000000e+00> : vector<8x64xf32>
    %125 = tpu.matmul %122, %124, %cst_73 {dimension_numbers = #tpu.dot_dimension_numbers<[1], [0], [0], [1], [0, 0, 1, 1], [], []>} : vector<8x8xf32>, vector<8x64xf32>, vector<8x64xf32> -> vector<8x64xf32>
    %c0_74 = arith.constant 0 : index
    %c32_75 = arith.constant 32 : index
    %126 = vector.load %arg26[%c0_74, %c32_75] : memref<8x96xf32, #tpu.memory_space<vmem>>, vector<8x64xf32>
    tpu.vector_store %arg26[%c0_74, %c32_75], %125 {strides = array<i32>} : memref<8x96xf32, #tpu.memory_space<vmem>>, vector<8x64xf32>,
    %c0_76 = arith.constant 0 : index
    %c0_77 = arith.constant 0 : index
    %127 = vector.load %arg26[%c0_76, %c0_77] : memref<8x96xf32, #tpu.memory_space<vmem>>, vector<8x96xf32>
    %c0_78 = arith.constant 0 : index
    %c0_79 = arith.constant 0 : index
    %128 = vector.load %arg20[%c0_78, %c0_79] : memref<96x33xf32, #tpu.memory_space<vmem>>, vector<96x33xf32>
    %cst_80 = arith.constant dense<0.000000e+00> : vector<8x33xf32>
    %129 = tpu.matmul %127, %128, %cst_80 {dimension_numbers = #tpu.dot_dimension_numbers<[1], [0], [0], [1], [0, 0, 1, 1], [], []>} : vector<8x96xf32>, vector<96x33xf32>, vector<8x33xf32> -> vector<8x33xf32>
    %c0_81 = arith.constant 0 : index
    %c0_82 = arith.constant 0 : index
    %130 = vector.load %arg21[%c0_81, %c0_82] : memref<1x33xf32, #tpu.memory_space<vmem>>, vector<1x33xf32>
    %131 = vector.broadcast %130 : vector<1x33xf32> to vector<8x33xf32>
    %132 = arith.addf %129, %131 : vector<8x33xf32>
    %133 = vector.extract_strided_slice %132 {offsets = [0, 0], sizes = [8, 32], strides = [1, 1]} : vector<8x33xf32> to vector<8x32xf32>
    %134 = vector.extract_strided_slice %132 {offsets = [0, 32], sizes = [8, 1], strides = [1, 1]} : vector<8x33xf32> to vector<8x1xf32>
    %135 = arith.addf %7, %53 : vector<8x1xf32>
    %136 = arith.addf %135, %134 : vector<8x1xf32>
    %137 = arith.negf %136 : vector<8x1xf32>
    %138 = math.exp %137 : vector<8x1xf32>
    %cst_83 = arith.constant 1.000000e+00 : f32
    %139 = vector.broadcast %cst_83 : f32 to vector<8x1xf32>
    %140 = arith.addf %139, %138 : vector<8x1xf32>
    %141 = arith.divf %139, %140 : vector<8x1xf32>
    %c0_84 = arith.constant 0 : index
    %c0_85 = arith.constant 0 : index
    %142 = vector.load %arg22[%c0_84, %c0_85] : memref<32x128xf32, #tpu.memory_space<vmem>>, vector<32x128xf32>
    %cst_86 = arith.constant dense<0.000000e+00> : vector<8x128xf32>
    %143 = tpu.matmul %133, %142, %cst_86 {dimension_numbers = #tpu.dot_dimension_numbers<[1], [0], [0], [1], [0, 0, 1, 1], [], []>} : vector<8x32xf32>, vector<32x128xf32>, vector<8x128xf32> -> vector<8x128xf32>
    %c0_87 = arith.constant 0 : index
    %c0_88 = arith.constant 0 : index
    %144 = vector.load %arg23[%c0_87, %c0_88] : memref<1x128xf32, #tpu.memory_space<vmem>>, vector<1x128xf32>
    %145 = vector.broadcast %144 : vector<1x128xf32> to vector<8x128xf32>
    %146 = arith.addf %143, %145 : vector<8x128xf32>
    %cst_89 = arith.constant dense<0xFF800000> : vector<8xf32>
    %147 = vector.multi_reduction <maximumf>, %146, %cst_89 [1] : vector<8x128xf32> to vector<8xf32>
    %148 = vector.shape_cast %147 : vector<8xf32> to vector<8x1xf32>
    %149 = vector.broadcast %148 : vector<8x1xf32> to vector<8x128xf32>
    %150 = arith.subf %146, %149 : vector<8x128xf32>
    %151 = math.exp %150 : vector<8x128xf32>
    %cst_90 = arith.constant dense<0.000000e+00> : vector<8xf32>
    %152 = vector.multi_reduction <add>, %151, %cst_90 [1] : vector<8x128xf32> to vector<8xf32>
    %153 = vector.shape_cast %152 : vector<8xf32> to vector<8x1xf32>
    %154 = vector.broadcast %153 : vector<8x1xf32> to vector<8x128xf32>
    %155 = arith.divf %151, %154 : vector<8x128xf32>
    %156 = vector.broadcast %141 : vector<8x1xf32> to vector<8x128xf32>
    %157 = arith.mulf %156, %155 : vector<8x128xf32>
    %c0_91 = arith.constant 0 : index
    %c0_92 = arith.constant 0 : index
    %158 = vector.load %arg25[%c0_91, %c0_92] : memref<8x128xf32, #tpu.memory_space<vmem>>, vector<8x128xf32>
    tpu.vector_store %arg25[%c0_91, %c0_92], %157 {strides = array<i32>} : memref<8x128xf32, #tpu.memory_space<vmem>>, vector<8x128xf32>,
    %cst_93 = arith.constant 0.000000e+00 : f32
    %159 = vector.broadcast %cst_93 : f32 to vector<8x256xf32>
    %c0_94 = arith.constant 0 : index
    %c0_95 = arith.constant 0 : index
    %160 = vector.load %arg24[%c0_94, %c0_95] : memref<8x256xf32, #tpu.memory_space<vmem>>, vector<8x256xf32>
    tpu.vector_store %arg24[%c0_94, %c0_95], %159 {strides = array<i32>} : memref<8x256xf32, #tpu.memory_space<vmem>>, vector<8x256xf32>,
    %c0_96 = arith.constant 0 : index
    %c0_97 = arith.constant 0 : index
    %161 = vector.load %arg24[%c0_96, %c0_97] : memref<8x256xf32, #tpu.memory_space<vmem>>, vector<8x32xf32>
    tpu.vector_store %arg24[%c0_96, %c0_97], %42 {strides = array<i32>} : memref<8x256xf32, #tpu.memory_space<vmem>>, vector<8x32xf32>,
    %c0_98 = arith.constant 0 : index
    %c32_99 = arith.constant 32 : index
    %162 = vector.load %arg24[%c0_98, %c32_99] : memref<8x256xf32, #tpu.memory_space<vmem>>, vector<8x32xf32>
    tpu.vector_store %arg24[%c0_98, %c32_99], %40 {strides = array<i32>} : memref<8x256xf32, #tpu.memory_space<vmem>>, vector<8x32xf32>,
    %c0_100 = arith.constant 0 : index
    %c64 = arith.constant 64 : index
    %163 = vector.load %arg24[%c0_100, %c64] : memref<8x256xf32, #tpu.memory_space<vmem>>, vector<8x64xf32>
    tpu.vector_store %arg24[%c0_100, %c64], %125 {strides = array<i32>} : memref<8x256xf32, #tpu.memory_space<vmem>>, vector<8x64xf32>,
    %c0_101 = arith.constant 0 : index
    %c128 = arith.constant 128 : index
    %164 = vector.load %arg24[%c0_101, %c128] : memref<8x256xf32, #tpu.memory_space<vmem>>, vector<8x16xf32>
    tpu.vector_store %arg24[%c0_101, %c128], %117 {strides = array<i32>} : memref<8x256xf32, #tpu.memory_space<vmem>>, vector<8x16xf32>,
    %cst_102 = arith.constant 1.000000e+00 : f32
    %165 = vector.broadcast %cst_102 : f32 to vector<8x1xf32>
    %166 = arith.subf %165, %141 : vector<8x1xf32>
    %167 = vector.broadcast %166 : vector<8x1xf32> to vector<8x16xf32>
    %168 = arith.mulf %167, %117 : vector<8x16xf32>
    %c0_103 = arith.constant 0 : index
    %c144 = arith.constant 144 : index
    %169 = vector.load %arg24[%c0_103, %c144] : memref<8x256xf32, #tpu.memory_space<vmem>>, vector<8x16xf32>
    tpu.vector_store %arg24[%c0_103, %c144], %168 {strides = array<i32>} : memref<8x256xf32, #tpu.memory_space<vmem>>, vector<8x16xf32>,
    %c0_104 = arith.constant 0 : index
    %c160 = arith.constant 160 : index
    %170 = vector.load %arg24[%c0_104, %c160] : memref<8x256xf32, #tpu.memory_space<vmem>>, vector<8x1xf32>
    tpu.vector_store %arg24[%c0_104, %c160], %141 {strides = array<i32>} : memref<8x256xf32, #tpu.memory_space<vmem>>, vector<8x1xf32>,
    return
  }
}

</mosaic_0001>

<llo_original>
// kernel: tpu_custom_call.1
$region0: #{tpu_custom_call.1}
  #allocation0 [shape = 'u32[]', space=smem, size = 0x4, offset = 0x4, fixed_abs, tag = 'smem constant byte address 0x4 - core index']
  #allocation1 [shape = 'u32[144,128]{1,0:T(1,128)}', space=vmem, size = 0x12000, scoped, tag = 'internal scratch']
  #allocation2 [shape = 'f32[8,96]{1,0:T(8,128)}', space=vmem, size = 0x1000, scoped, tag = 'scratch operand']
  %s0 = inlined_call_operand.hbm [shape: f32[8,80], index: 0, kind: input, shape index: {}]
  %s1 = inlined_call_operand.hbm [shape: f32[8,32], index: 1, kind: input, shape index: {}]
  %s2 = inlined_call_operand.hbm [shape: f32[8,32], index: 2, kind: input, shape index: {}]
  %s3 = inlined_call_operand.vmem [shape: f32[8,8,64], index: 3, kind: input, shape index: {}]
  %s4 = inlined_call_operand.vmem [shape: f32[8,8,64], index: 4, kind: input, shape index: {}]
  %s5 = inlined_call_operand.vmem [shape: f32[8,3,64], index: 5, kind: input, shape index: {}]
  %s6 = inlined_call_operand.hbm [shape: f32[8,8], index: 6, kind: input, shape index: {}]
  %s7 = inlined_call_operand.vmem [shape: f32[8,3], index: 7, kind: input, shape index: {}]
  %s8 = inlined_call_operand.hbm [shape: f32[8,8], index: 8, kind: input, shape index: {}]
  %s9 = inlined_call_operand.hbm [shape: f32[8,8], index: 9, kind: input, shape index: {}]
  %s10 = inlined_call_operand.vmem [shape: f32[8,3], index: 10, kind: input, shape index: {}]
  %s11 = inlined_call_operand.vmem [shape: f32[8,8,16], index: 11, kind: input, shape index: {}]
  %s12 = inlined_call_operand.vmem [shape: f32[80,17], index: 12, kind: input, shape index: {}]
  %s13 = inlined_call_operand.vmem [shape: f32[1,17], index: 13, kind: input, shape index: {}]
  %s14 = inlined_call_operand.hbm [shape: f32[16,128], index: 14, kind: input, shape index: {}]
  %s15 = inlined_call_operand.hbm [shape: f32[32,128], index: 15, kind: input, shape index: {}]
  %s16 = inlined_call_operand.hbm [shape: f32[1,128], index: 16, kind: input, shape index: {}]
  %s17 = inlined_call_operand.vmem [shape: f32[64,129], index: 17, kind: input, shape index: {}]
  %s18 = inlined_call_operand.vmem [shape: f32[1,129], index: 18, kind: input, shape index: {}]
  %s19 = inlined_call_operand.hbm [shape: f32[2,64], index: 19, kind: input, shape index: {}]
  %s20 = inlined_call_operand.vmem [shape: f32[96,33], index: 20, kind: input, shape index: {}]
  %s21 = inlined_call_operand.hbm [shape: f32[1,33], index: 21, kind: input, shape index: {}]
  %s22 = inlined_call_operand.vmem [shape: f32[32,128], index: 22, kind: input, shape index: {}]
  %s23 = inlined_call_operand.vmem [shape: f32[1,128], index: 23, kind: input, shape index: {}]
  %s24 = inlined_call_operand.hbm [shape: f32[8,256], index: 24, kind: output, shape index: {0}]
  %s25 = inlined_call_operand.hbm [shape: f32[8,128], index: 25, kind: output, shape index: {1}]
  %26 = xla_tuple %s24, %s25
  %s27 = sld [smem:[#allocation0]]
  $region158: #{tpu_custom_call.1} parent=0
    _
  %s29 = ssub.s32 1, %s27
  %s30 = scalar_select 0, %s29, %s27
  $region1: #{tpu_custom_call.1} parent=0
    #allocation3 [shape = 'u8[4096]{0}', space=vmem, size = 0x1000, scoped, tag = 'input window, operand 0, single buffered']
    #allocation4 [shape = 's32[1]{0}', space=sflag, size = 0x4, scoped, tag = 'scoped memory for tpu_custom_call.1']
    #allocation5 [shape = 's32[1]{0}', space=sflag, size = 0x4, scoped, tag = 'scoped memory for tpu_custom_call.1']
    #allocation6 [shape = 'u8[4096]{0}', space=vmem, size = 0x1000, scoped, tag = 'input window, operand 1, single buffered']
    #allocation7 [shape = 's32[1]{0}', space=sflag, size = 0x4, scoped, tag = 'scoped memory for tpu_custom_call.1']
    #allocation8 [shape = 'u8[4096]{0}', space=vmem, size = 0x1000, scoped, tag = 'input window, operand 2, single buffered']
    #allocation9 [shape = 'u8[4096]{0}', space=vmem, size = 0x1000, scoped, tag = 'input window, operand 6, single buffered']
    #allocation10 [shape = 's32[1]{0}', space=sflag, size = 0x4, scoped, tag = 'scoped memory for tpu_custom_call.1']
    #allocation11 [shape = 'u8[4096]{0}', space=vmem, size = 0x1000, scoped, tag = 'input window, operand 8, single buffered']
    #allocation12 [shape = 'u8[4096]{0}', space=vmem, size = 0x1000, scoped, tag = 'input window, operand 9, single buffered']
    #allocation13 [shape = 's32[1]{0}', space=sflag, size = 0x4, scoped, tag = 'scoped memory for tpu_custom_call.1']
    #allocation14 [shape = 'u8[8192]{0}', space=vmem, size = 0x2000, scoped, tag = 'input window, operand 14, single buffered']
    #allocation15 [shape = 'u8[16384]{0}', space=vmem, size = 0x4000, scoped, tag = 'input window, operand 15, single buffered']
    #allocation16 [shape = 's32[1]{0}', space=sflag, size = 0x4, scoped, tag = 'scoped memory for tpu_custom_call.1']
    #allocation17 [shape = 'u8[512]{0}', space=vmem, size = 0x400, scoped, tag = 'input window, operand 16, single buffered']
    #allocation18 [shape = 'u8[1024]{0}', space=vmem, size = 0x400, scoped, tag = 'input window, operand 19, single buffered']
    #allocation19 [shape = 's32[1]{0}', space=sflag, size = 0x4, scoped, tag = 'scoped memory for tpu_custom_call.1']
    #allocation20 [shape = 'u8[512]{0}', space=vmem, size = 0x400, scoped, tag = 'input window, operand 21, single buffered']
    #allocation21 [shape = 'u8[8192]{0}', space=vmem, size = 0x2000, scoped, tag = 'output window, operand 0, single buffered']
    #allocation22 [shape = 'u8[4096]{0}', space=vmem, size = 0x1000, scoped, tag = 'output window, operand 1, single buffered']
    #allocation23 [shape = 's32[1]{0}', space=sflag, size = 0x4, scoped, tag = 'scoped memory for tpu_custom_call.1']
    %31 = vsyncpa [#allocation4], 0
    %32 = vsyncpa [#allocation7], 0
    %33 = vsyncpa [#allocation10], 0
    %34 = vsyncpa [#allocation13], 0
    %35 = vsyncpa [#allocation16], 0
    %36 = vsyncpa [#allocation19], 0
    %37 = vsyncpa [#allocation5], 0
    %38 = vsyncpa [#allocation23], 0
    // Predicated region
    $region2: #{tpu_custom_call.1} parent=1 // pred_check
      _
    $region3: #{tpu_custom_call.1} parent=1 // pred_check_branch
      %40 = sbr.rel (0) target = $region5
    $region4: #{tpu_custom_call.1} parent=1 // pred_region
      %s42 = ssub.s32 128, 128
      %43 = vsyncadd [#allocation4], %s42
      %s45 = sshll.u32 [#allocation3], 4
      %s46 = int_to_ptr.vmem [resolvable:$true] %s45
      %48 = dma.hbm_to_vmem [thread:$0]  %s0, 128, %s46, [#allocation4]
    $region5: #{tpu_custom_call.1} parent=1 // pred_fallthru
      _
    // Predicated region
    $region6: #{tpu_custom_call.1} parent=1 // pred_check
      _
    $region7: #{tpu_custom_call.1} parent=1 // pred_check_branch
      %50 = sbr.rel (0) target = $region9
    $region8: #{tpu_custom_call.1} parent=1 // pred_region
      %s52 = ssub.s32 128, 128
      %53 = vsyncadd [#allocation7], %s52
      %s55 = sshll.u32 [#allocation6], 4
      %s56 = int_to_ptr.vmem [resolvable:$true] %s55
      %58 = dma.hbm_to_vmem [thread:$0]  %s1, 128, %s56, [#allocation7]
    $region9: #{tpu_custom_call.1} parent=1 // pred_fallthru
      _
    // Predicated region
    $region10: #{tpu_custom_call.1} parent=1 // pred_check
      _
    $region11: #{tpu_custom_call.1} parent=1 // pred_check_branch
      %60 = sbr.rel (0) target = $region13
    $region12: #{tpu_custom_call.1} parent=1 // pred_region
      %s62 = ssub.s32 128, 128
      %63 = vsyncadd [#allocation7], %s62
      %s65 = sshll.u32 [#allocation8], 4
      %s66 = int_to_ptr.vmem [resolvable:$true] %s65
      %68 = dma.hbm_to_vmem [thread:$0]  %s2, 128, %s66, [#allocation7]
    $region13: #{tpu_custom_call.1} parent=1 // pred_fallthru
      _
    // Predicated region
    $region14: #{tpu_custom_call.1} parent=1 // pred_check
      _
    $region15: #{tpu_custom_call.1} parent=1 // pred_check_branch
      %70 = sbr.rel (0) target = $region17
    $region16: #{tpu_custom_call.1} parent=1 // pred_region
      _
    $region17: #{tpu_custom_call.1} parent=1 // pred_fallthru
      _
    // Predicated region
    $region18: #{tpu_custom_call.1} parent=1 // pred_check
      _
    $region19: #{tpu_custom_call.1} parent=1 // pred_check_branch
      %72 = sbr.rel (0) target = $region21
    $region20: #{tpu_custom_call.1} parent=1 // pred_region
      _
    $region21: #{tpu_custom_call.1} parent=1 // pred_fallthru
      _
    // Predicated region
    $region22: #{tpu_custom_call.1} parent=1 // pred_check
      _
    $region23: #{tpu_custom_call.1} parent=1 // pred_check_branch
      %74 = sbr.rel (0) target = $region25
    $region24: #{tpu_custom_call.1} parent=1 // pred_region
      _
    $region25: #{tpu_custom_call.1} parent=1 // pred_fallthru
      _
    // Predicated region
    $region26: #{tpu_custom_call.1} parent=1 // pred_check
      _
    $region27: #{tpu_custom_call.1} parent=1 // pred_check_branch
      %76 = sbr.rel (0) target = $region29
    $region28: #{tpu_custom_call.1} parent=1 // pred_region
      %s78 = ssub.s32 128, 128
      %79 = vsyncadd [#allocation10], %s78
      %s81 = sshll.u32 [#allocation9], 4
      %s82 = int_to_ptr.vmem [resolvable:$true] %s81
      %84 = dma.hbm_to_vmem [thread:$0]  %s6, 128, %s82, [#allocation10]
    $region29: #{tpu_custom_call.1} parent=1 // pred_fallthru
      _
    // Predicated region
    $region30: #{tpu_custom_call.1} parent=1 // pred_check
      _
    $region31: #{tpu_custom_call.1} parent=1 // pred_check_branch
      %86 = sbr.rel (0) target = $region33
    $region32: #{tpu_custom_call.1} parent=1 // pred_region
      _
    $region33: #{tpu_custom_call.1} parent=1 // pred_fallthru
      _
    // Predicated region
    $region34: #{tpu_custom_call.1} parent=1 // pred_check
      _
    $region35: #{tpu_custom_call.1} parent=1 // pred_check_branch
      %88 = sbr.rel (0) target = $region37
    $region36: #{tpu_custom_call.1} parent=1 // pred_region
      %s90 = ssub.s32 128, 128
      %91 = vsyncadd [#allocation10], %s90
      %s93 = sshll.u32 [#allocation11], 4
      %s94 = int_to_ptr.vmem [resolvable:$true] %s93
      %96 = dma.hbm_to_vmem [thread:$0]  %s8, 128, %s94, [#allocation10]
    $region37: #{tpu_custom_call.1} parent=1 // pred_fallthru
      _
    // Predicated region
    $region38: #{tpu_custom_call.1} parent=1 // pred_check
      _
    $region39: #{tpu_custom_call.1} parent=1 // pred_check_branch
      %98 = sbr.rel (0) target = $region41
    $region40: #{tpu_custom_call.1} parent=1 // pred_region
      %s100 = ssub.s32 128, 128
      %101 = vsyncadd [#allocation13], %s100
      %s103 = sshll.u32 [#allocation12], 4
      %s104 = int_to_ptr.vmem [resolvable:$true] %s103
      %106 = dma.hbm_to_vmem [thread:$0]  %s9, 128, %s104, [#allocation13]
    $region41: #{tpu_custom_call.1} parent=1 // pred_fallthru
      _
    // Predicated region
    $region42: #{tpu_custom_call.1} parent=1 // pred_check
      _
    $region43: #{tpu_custom_call.1} parent=1 // pred_check_branch
      %108 = sbr.rel (0) target = $region45
    $region44: #{tpu_custom_call.1} parent=1 // pred_region
      _
    $region45: #{tpu_custom_call.1} parent=1 // pred_fallthru
      _
    // Predicated region
    $region46: #{tpu_custom_call.1} parent=1 // pred_check
      _
    $region47: #{tpu_custom_call.1} parent=1 // pred_check_branch
      %110 = sbr.rel (0) target = $region49
    $region48: #{tpu_custom_call.1} parent=1 // pred_region
      _
    $region49: #{tpu_custom_call.1} parent=1 // pred_fallthru
      _
    // Predicated region
    $region50: #{tpu_custom_call.1} parent=1 // pred_check
      _
    $region51: #{tpu_custom_call.1} parent=1 // pred_check_branch
      %112 = sbr.rel (0) target = $region53
    $region52: #{tpu_custom_call.1} parent=1 // pred_region
      _
    $region53: #{tpu_custom_call.1} parent=1 // pred_fallthru
      _
    // Predicated region
    $region54: #{tpu_custom_call.1} parent=1 // pred_check
      _
    $region55: #{tpu_custom_call.1} parent=1 // pred_check_branch
      %114 = sbr.rel (0) target = $region57
    $region56: #{tpu_custom_call.1} parent=1 // pred_region
      _
    $region57: #{tpu_custom_call.1} parent=1 // pred_fallthru
      _
    // Predicated region
    $region58: #{tpu_custom_call.1} parent=1 // pred_check
      _
    $region59: #{tpu_custom_call.1} parent=1 // pred_check_branch
      %116 = sbr.rel (0) target = $region61
    $region60: #{tpu_custom_call.1} parent=1 // pred_region
      %s118 = ssub.s32 256, 256
      %119 = vsyncadd [#allocation13], %s118
      %s120 = sshll.u32 [#allocation14], 4
      %s121 = int_to_ptr.vmem [resolvable:$true] %s120
      %126 = dma.hbm_to_vmem [thread:$0]  %s14, 256, %s121, [#allocation13], 128, 128, 8
    $region61: #{tpu_custom_call.1} parent=1 // pred_fallthru
      _
    // Predicated region
    $region62: #{tpu_custom_call.1} parent=1 // pred_check
      _
    $region63: #{tpu_custom_call.1} parent=1 // pred_check_branch
      %128 = sbr.rel (0) target = $region65
    $region64: #{tpu_custom_call.1} parent=1 // pred_region
      %s130 = ssub.s32 512, 512
      %131 = vsyncadd [#allocation16], %s130
      %s132 = sshll.u32 [#allocation15], 4
      %s133 = int_to_ptr.vmem [resolvable:$true] %s132
      %138 = dma.hbm_to_vmem [thread:$0]  %s15, 512, %s133, [#allocation16], 128, 128, 8
    $region65: #{tpu_custom_call.1} parent=1 // pred_fallthru
      _
    // Predicated region
    $region66: #{tpu_custom_call.1} parent=1 // pred_check
      _
    $region67: #{tpu_custom_call.1} parent=1 // pred_check_branch
      %140 = sbr.rel (0) target = $region69
    $region68: #{tpu_custom_call.1} parent=1 // pred_region
      %s142 = ssub.s32 16, 16
      %143 = vsyncadd [#allocation16], %s142
      %s145 = sshll.u32 [#allocation17], 4
      %s146 = int_to_ptr.vmem [resolvable:$true] %s145
      %148 = dma.hbm_to_vmem [thread:$0]  %s16, 16, %s146, [#allocation16]
    $region69: #{tpu_custom_call.1} parent=1 // pred_fallthru
      _
    // Predicated region
    $region70: #{tpu_custom_call.1} parent=1 // pred_check
      _
    $region71: #{tpu_custom_call.1} parent=1 // pred_check_branch
      %150 = sbr.rel (0) target = $region73
    $region72: #{tpu_custom_call.1} parent=1 // pred_region
      _
    $region73: #{tpu_custom_call.1} parent=1 // pred_fallthru
      _
    // Predicated region
    $region74: #{tpu_custom_call.1} parent=1 // pred_check
      _
    $region75: #{tpu_custom_call.1} parent=1 // pred_check_branch
      %152 = sbr.rel (0) target = $region77
    $region76: #{tpu_custom_call.1} parent=1 // pred_region
      _
    $region77: #{tpu_custom_call.1} parent=1 // pred_fallthru
      _
    // Predicated region
    $region78: #{tpu_custom_call.1} parent=1 // pred_check
      _
    $region79: #{tpu_custom_call.1} parent=1 // pred_check_branch
      %154 = sbr.rel (0) target = $region81
    $region80: #{tpu_custom_call.1} parent=1 // pred_region
      %s156 = ssub.s32 32, 32
      %157 = vsyncadd [#allocation19], %s156
      %s159 = sshll.u32 [#allocation18], 4
      %s160 = int_to_ptr.vmem [resolvable:$true] %s159
      %162 = dma.hbm_to_vmem [thread:$0]  %s19, 32, %s160, [#allocation19]
    $region81: #{tpu_custom_call.1} parent=1 // pred_fallthru
      _
    // Predicated region
    $region82: #{tpu_custom_call.1} parent=1 // pred_check
      _
    $region83: #{tpu_custom_call.1} parent=1 // pred_check_branch
      %164 = sbr.rel (0) target = $region85
    $region84: #{tpu_custom_call.1} parent=1 // pred_region
      _
    $region85: #{tpu_custom_call.1} parent=1 // pred_fallthru
      _
    // Predicated region
    $region86: #{tpu_custom_call.1} parent=1 // pred_check
      _
    $region87: #{tpu_custom_call.1} parent=1 // pred_check_branch
      %166 = sbr.rel (0) target = $region89
    $region88: #{tpu_custom_call.1} parent=1 // pred_region
      %s168 = ssub.s32 16, 16
      %169 = vsyncadd [#allocation19], %s168
      %s171 = sshll.u32 [#allocation20], 4
      %s172 = int_to_ptr.vmem [resolvable:$true] %s171
      %174 = dma.hbm_to_vmem [thread:$0]  %s21, 16, %s172, [#allocation19]
    $region89: #{tpu_custom_call.1} parent=1 // pred_fallthru
      _
    // Predicated region
    $region90: #{tpu_custom_call.1} parent=1 // pred_check
      _
    $region91: #{tpu_custom_call.1} parent=1 // pred_check_branch
      %176 = sbr.rel (0) target = $region93
    $region92: #{tpu_custom_call.1} parent=1 // pred_region
      _
    $region93: #{tpu_custom_call.1} parent=1 // pred_fallthru
      _
    // Predicated region
    $region94: #{tpu_custom_call.1} parent=1 // pred_check
      _
    $region95: #{tpu_custom_call.1} parent=1 // pred_check_branch
      %178 = sbr.rel (0) target = $region97
    $region96: #{tpu_custom_call.1} parent=1 // pred_region
      _
    $region97: #{tpu_custom_call.1} parent=1 // pred_fallthru
      _
    // Predicated region
    $region98: #{tpu_custom_call.1} parent=1 // pred_check
      _
    $region99: #{tpu_custom_call.1} parent=1 // pred_check_branch
      %180 = sbr.rel (0) target = $region101
    $region100: #{tpu_custom_call.1} parent=1 // pred_region
      %181 = dma.done [#allocation4], 128
    $region101: #{tpu_custom_call.1} parent=1 // pred_fallthru
      _
    // Predicated region
    $region102: #{tpu_custom_call.1} parent=1 // pred_check
      _
    $region103: #{tpu_custom_call.1} parent=1 // pred_check_branch
      %183 = sbr.rel (0) target = $region105
    $region104: #{tpu_custom_call.1} parent=1 // pred_region
      %184 = dma.done [#allocation7], 128
    $region105: #{tpu_custom_call.1} parent=1 // pred_fallthru
      _
    // Predicated region
    $region106: #{tpu_custom_call.1} parent=1 // pred_check
      _
    $region107: #{tpu_custom_call.1} parent=1 // pred_check_branch
      %186 = sbr.rel (0) target = $region109
    $region108: #{tpu_custom_call.1} parent=1 // pred_region
      %187 = dma.done [#allocation7], 128
    $region109: #{tpu_custom_call.1} parent=1 // pred_fallthru
      _
    // Predicated region
    $region110: #{tpu_custom_call.1} parent=1 // pred_check
      _
    $region111: #{tpu_custom_call.1} parent=1 // pred_check_branch
      %189 = sbr.rel (0) target = $region113
    $region112: #{tpu_custom_call.1} parent=1 // pred_region
      %190 = dma.done [#allocation10], 128
    $region113: #{tpu_custom_call.1} parent=1 // pred_fallthru
      _
    // Predicated region
    $region114: #{tpu_custom_call.1} parent=1 // pred_check
      _
    $region115: #{tpu_custom_call.1} parent=1 // pred_check_branch
      %192 = sbr.rel (0) target = $region117
    $region116: #{tpu_custom_call.1} parent=1 // pred_region
      %193 = dma.done [#allocation10], 128
    $region117: #{tpu_custom_call.1} parent=1 // pred_fallthru
      _
    // Predicated region
    $region118: #{tpu_custom_call.1} parent=1 // pred_check
      _
    $region119: #{tpu_custom_call.1} parent=1 // pred_check_branch
      %195 = sbr.rel (0) target = $region121
    $region120: #{tpu_custom_call.1} parent=1 // pred_region
      %196 = dma.done [#allocation13], 128
    $region121: #{tpu_custom_call.1} parent=1 // pred_fallthru
      _
    // Predicated region
    $region122: #{tpu_custom_call.1} parent=1 // pred_check
      _
    $region123: #{tpu_custom_call.1} parent=1 // pred_check_branch
      %198 = sbr.rel (0) target = $region125
    $region124: #{tpu_custom_call.1} parent=1 // pred_region
      %199 = dma.done [#allocation13], 256
    $region125: #{tpu_custom_call.1} parent=1 // pred_fallthru
      _
    // Predicated region
    $region126: #{tpu_custom_call.1} parent=1 // pred_check
      _
    $region127: #{tpu_custom_call.1} parent=1 // pred_check_branch
      %201 = sbr.rel (0) target = $region129
    $region128: #{tpu_custom_call.1} parent=1 // pred_region
      %202 = dma.done [#allocation16], 512
    $region129: #{tpu_custom_call.1} parent=1 // pred_fallthru
      _
    // Predicated region
    $region130: #{tpu_custom_call.1} parent=1 // pred_check
      _
    $region131: #{tpu_custom_call.1} parent=1 // pred_check_branch
      %204 = sbr.rel (0) target = $region133
    $region132: #{tpu_custom_call.1} parent=1 // pred_region
      %205 = dma.done [#allocation16], 16
    $region133: #{tpu_custom_call.1} parent=1 // pred_fallthru
      _
    // Predicated region
    $region134: #{tpu_custom_call.1} parent=1 // pred_check
      _
    $region135: #{tpu_custom_call.1} parent=1 // pred_check_branch
      %207 = sbr.rel (0) target = $region137
    $region136: #{tpu_custom_call.1} parent=1 // pred_region
      %208 = dma.done [#allocation19], 32
    $region137: #{tpu_custom_call.1} parent=1 // pred_fallthru
      _
    // Predicated region
    $region138: #{tpu_custom_call.1} parent=1 // pred_check
      _
    $region139: #{tpu_custom_call.1} parent=1 // pred_check_branch
      %210 = sbr.rel (0) target = $region141
    $region140: #{tpu_custom_call.1} parent=1 // pred_region
      %211 = dma.done [#allocation19], 16
    $region141: #{tpu_custom_call.1} parent=1 // pred_fallthru
      _
    %v212 = vld [vmem:[#allocation3] sm:$0xff]
    %v213 = vld [vmem:[%s12] sm:$0xff]
    %v214 = vld [vmem:[%s12 + $0x8] sm:$0xff]
    %v215 = vld [vmem:[%s12 + $0x10] sm:$0xff]
    %v216 = vld [vmem:[%s12 + $0x18] sm:$0xff]
    %v217 = vld [vmem:[%s12 + $0x20] sm:$0xff]
    %v218 = vld [vmem:[%s12 + $0x28] sm:$0xff]
    %v219 = vld [vmem:[%s12 + $0x30] sm:$0xff]
    %v220 = vld [vmem:[%s12 + $0x38] sm:$0xff]
    %v221 = vld [vmem:[%s12 + $0x40] sm:$0xff]
    %v222 = vld [vmem:[%s12 + $0x48] sm:$0xff]
    %v223 = vld [vmem:[%s13] sm:$0x1]
    %v225 = vlaneseq
    %v226 = vshrl.u32 %v225, 7
    %v227 = vsub.s32 0, %v226
    %v228 = vrot.slane %v223, %v227
    %vm230 = vcmask 654336
    %v232 = vsel %vm230, %v212, 0
    %234 = vmatprep.subr.mxu0 0.0
    %235 = vmatpush1.msra.mxu0 %v213
    %236 = vmatprep.subr.mxu0 0.0
    %237 = vmatpush1.msra.mxu0 %v214
    %238 = vmatprep.subr.mxu0 0.0
    %239 = vmatpush1.msra.mxu0 %v215
    %240 = vmatprep.subr.mxu0 0.0
    %241 = vmatpush1.msra.mxu0 %v216
    %242 = vmatprep.subr.mxu0 0.0
    %243 = vmatpush1.msra.mxu0 %v217
    %244 = vmatprep.subr.mxu0 0.0
    %245 = vmatpush1.msra.mxu0 %v218
    %246 = vmatprep.subr.mxu0 0.0
    %247 = vmatpush1.msra.mxu0 %v219
    %248 = vmatprep.subr.mxu0 0.0
    %249 = vmatpush1.msra.mxu0 %v220
    %250 = vmatprep.subr.mxu0 0.0
    %251 = vmatpush1.msra.mxu0 %v221
    %252 = vmatprep.subr.mxu0 0.0
    %253 = vmatpush1.msra.mxu0 %v222
    %254 = vmatprep.subr.mxu0 0.0
    %255 = vmatpush1.msra.mxu0 0.0
    %256 = vmatprep.subr.mxu0 0.0
    %257 = vmatpush1.msra.mxu0 0.0
    %258 = vmatprep.subr.mxu0 0.0
    %259 = vmatpush1.msra.mxu0 0.0
    %260 = vmatprep.subr.mxu0 0.0
    %261 = vmatpush1.msra.mxu0 0.0
    %262 = vmatprep.subr.mxu0 0.0
    %263 = vmatpush1.msra.mxu0 0.0
    %264 = vmatprep.subr.mxu0 0.0
    %265 = vmatpush1.msra.mxu0 0.0
    %266 = vmatprep.subr.mxu0 0.0
    %267 = vmatpush1.msra.mxu0 0.0
    %268 = vmatprep.subr.mxu0 0.0
    %269 = vmatpush1.msra.mxu0 0.0
    %270 = vmatprep.subr.mxu0 0.0
    %271 = vmatpush1.msra.mxu0 0.0
    %272 = vmatprep.subr.mxu0 0.0
    %273 = vmatpush1.msra.mxu0 0.0
    %274 = vmatprep.subr.mxu0 0.0
    %275 = vmatpush1.msra.mxu0 0.0
    %276 = vmatprep.subr.mxu0 0.0
    %277 = vmatpush1.msra.mxu0 0.0
    %278 = vmatprep.subr.mxu0 0.0
    %279 = vmatpush1.msra.mxu0 0.0
    %280 = vmatprep.subr.mxu0 0.0
    %281 = vmatpush1.msra.mxu0 0.0
    %282 = vmatprep.subr.mxu0 0.0
    %283 = vmatpush1.msra.mxu0 0.0
    %284 = vmatprep.subr.mxu0 0.0
    %285 = vmatpush1.msra.mxu0 0.0
    %286 = vmatprep.subr.mxu0 0.0
    %287 = vmatpush1.msra.mxu0 0.0
    %288 = vmatprep.subr.mxu0 0.0
    %289 = vmatpush1.msra.mxu0 0.0
    %290 = vmatprep.subr.mxu0 0.0
    %291 = vmatpush1.msra.mxu0 0.0
    %292 = vmatprep.subr.mxu0 0.0
    %293 = vmatpush1.msra.mxu0 0.0
    %294 = vmatprep.subr.mxu0 0.0
    %295 = vmatpush1.msra.mxu0 0.0
    %296 = vmatprep.subr.mxu0 0.0
    %297 = vmatpush1.msra.mxu0 0.0
    %298 = vmatprep.mubr.f32.mxu0 0.0
    %299 = vmatmul.mubr.f32.gmra.mrb[0].mxu0 %v232
    %v300 = vpop.f32.mrb[0].mxu0
    %v301 = vadd.f32 %v228, %v300
    %v302 = vpop.f32.mrb[0].mxu0
    %303 = vdwg.mxu0
    %v304 = vld [vmem:[#allocation14] sm:$0xff]
    %v305 = vld [vmem:[#allocation14 + $0x8] sm:$0xff]
    %v306 = vld [vmem:[#allocation6] sm:$0xff]
    %v307 = vld [vmem:[#allocation15] sm:$0xff]
    %v308 = vld [vmem:[#allocation15 + $0x8] sm:$0xff]
    %v309 = vld [vmem:[#allocation15 + $0x10] sm:$0xff]
    %v310 = vld [vmem:[#allocation15 + $0x18] sm:$0xff]
    %vm311 = vcmask 261120
    %v313 = vsel %vm311, %v306, 0
    %315 = vmatprep.subr.mxu0 0.0
    %316 = vmatpush1.msra.mxu0 %v307
    %317 = vmatprep.subr.mxu0 0.0
    %318 = vmatpush1.msra.mxu0 %v308
    %319 = vmatprep.subr.mxu0 0.0
    %320 = vmatpush1.msra.mxu0 %v309
    %321 = vmatprep.subr.mxu0 0.0
    %322 = vmatpush1.msra.mxu0 %v310
    %323 = vmatprep.subr.mxu0 0.0
    %324 = vmatpush1.msra.mxu0 0.0
    %325 = vmatprep.subr.mxu0 0.0
    %326 = vmatpush1.msra.mxu0 0.0
    %327 = vmatprep.subr.mxu0 0.0
    %328 = vmatpush1.msra.mxu0 0.0
    %329 = vmatprep.subr.mxu0 0.0
    %330 = vmatpush1.msra.mxu0 0.0
    %331 = vmatprep.subr.mxu0 0.0
    %332 = vmatpush1.msra.mxu0 0.0
    %333 = vmatprep.subr.mxu0 0.0
    %334 = vmatpush1.msra.mxu0 0.0
    %335 = vmatprep.subr.mxu0 0.0
    %336 = vmatpush1.msra.mxu0 0.0
    %337 = vmatprep.subr.mxu0 0.0
    %338 = vmatpush1.msra.mxu0 0.0
    %339 = vmatprep.subr.mxu0 0.0
    %340 = vmatpush1.msra.mxu0 0.0
    %341 = vmatprep.subr.mxu0 0.0
    %342 = vmatpush1.msra.mxu0 0.0
    %343 = vmatprep.subr.mxu0 0.0
    %344 = vmatpush1.msra.mxu0 0.0
    %345 = vmatprep.subr.mxu0 0.0
    %346 = vmatpush1.msra.mxu0 0.0
    %347 = vmatprep.subr.mxu0 0.0
    %348 = vmatpush1.msra.mxu0 0.0
    %349 = vmatprep.subr.mxu0 0.0
    %350 = vmatpush1.msra.mxu0 0.0
    %351 = vmatprep.subr.mxu0 0.0
    %352 = vmatpush1.msra.mxu0 0.0
    %353 = vmatprep.subr.mxu0 0.0
    %354 = vmatpush1.msra.mxu0 0.0
    %355 = vmatprep.subr.mxu0 0.0
    %356 = vmatpush1.msra.mxu0 0.0
    %357 = vmatprep.subr.mxu0 0.0
    %358 = vmatpush1.msra.mxu0 0.0
    %359 = vmatprep.subr.mxu0 0.0
    %360 = vmatpush1.msra.mxu0 0.0
    %361 = vmatprep.subr.mxu0 0.0
    %362 = vmatpush1.msra.mxu0 0.0
    %363 = vmatprep.subr.mxu0 0.0
    %364 = vmatpush1.msra.mxu0 0.0
    %365 = vmatprep.subr.mxu0 0.0
    %366 = vmatpush1.msra.mxu0 0.0
    %367 = vmatprep.subr.mxu0 0.0
    %368 = vmatpush1.msra.mxu0 0.0
    %369 = vmatprep.subr.mxu0 0.0
    %370 = vmatpush1.msra.mxu0 0.0
    %371 = vmatprep.subr.mxu0 0.0
    %372 = vmatpush1.msra.mxu0 0.0
    %373 = vmatprep.subr.mxu0 0.0
    %374 = vmatpush1.msra.mxu0 0.0
    %375 = vmatprep.subr.mxu0 0.0
    %376 = vmatpush1.msra.mxu0 0.0
    %377 = vmatprep.subr.mxu0 0.0
    %378 = vmatpush1.msra.mxu0 0.0
    %379 = vmatprep.mubr.f32.mxu0 0.0
    %380 = vmatmul.mubr.f32.gmra.mrb[0].mxu0 %v313
    %v381 = vpop.f32.mrb[0].mxu0
    %v382 = vadd.f32 0.0, %v381
    %v383 = vpop.f32.mrb[0].mxu0
    %384 = vdwg.mxu0
    %vm385 = vcmask 130048
    %v387 = vsel %vm385, %v301, 0
    %389 = vmatprep.subr.mxu0 0.0
    %390 = vmatpush1.msra.mxu0 %v304
    %391 = vmatprep.subr.mxu0 0.0
    %392 = vmatpush1.msra.mxu0 %v305
    %393 = vmatprep.subr.mxu0 0.0
    %394 = vmatpush1.msra.mxu0 0.0
    %395 = vmatprep.subr.mxu0 0.0
    %396 = vmatpush1.msra.mxu0 0.0
    %397 = vmatprep.subr.mxu0 0.0
    %398 = vmatpush1.msra.mxu0 0.0
    %399 = vmatprep.subr.mxu0 0.0
    %400 = vmatpush1.msra.mxu0 0.0
    %401 = vmatprep.subr.mxu0 0.0
    %402 = vmatpush1.msra.mxu0 0.0
    %403 = vmatprep.subr.mxu0 0.0
    %404 = vmatpush1.msra.mxu0 0.0
    %405 = vmatprep.subr.mxu0 0.0
    %406 = vmatpush1.msra.mxu0 0.0
    %407 = vmatprep.subr.mxu0 0.0
    %408 = vmatpush1.msra.mxu0 0.0
    %409 = vmatprep.subr.mxu0 0.0
    %410 = vmatpush1.msra.mxu0 0.0
    %411 = vmatprep.subr.mxu0 0.0
    %412 = vmatpush1.msra.mxu0 0.0
    %413 = vmatprep.subr.mxu0 0.0
    %414 = vmatpush1.msra.mxu0 0.0
    %415 = vmatprep.subr.mxu0 0.0
    %416 = vmatpush1.msra.mxu0 0.0
    %417 = vmatprep.subr.mxu0 0.0
    %418 = vmatpush1.msra.mxu0 0.0
    %419 = vmatprep.subr.mxu0 0.0
    %420 = vmatpush1.msra.mxu0 0.0
    %421 = vmatprep.subr.mxu0 0.0
    %422 = vmatpush1.msra.mxu0 0.0
    %423 = vmatprep.subr.mxu0 0.0
    %424 = vmatpush1.msra.mxu0 0.0
    %425 = vmatprep.subr.mxu0 0.0
    %426 = vmatpush1.msra.mxu0 0.0
    %427 = vmatprep.subr.mxu0 0.0
    %428 = vmatpush1.msra.mxu0 0.0
    %429 = vmatprep.subr.mxu0 0.0
    %430 = vmatpush1.msra.mxu0 0.0
    %431 = vmatprep.subr.mxu0 0.0
    %432 = vmatpush1.msra.mxu0 0.0
    %433 = vmatprep.subr.mxu0 0.0
    %434 = vmatpush1.msra.mxu0 0.0
    %435 = vmatprep.subr.mxu0 0.0
    %436 = vmatpush1.msra.mxu0 0.0
    %437 = vmatprep.subr.mxu0 0.0
    %438 = vmatpush1.msra.mxu0 0.0
    %439 = vmatprep.subr.mxu0 0.0
    %440 = vmatpush1.msra.mxu0 0.0
    %441 = vmatprep.subr.mxu0 0.0
    %442 = vmatpush1.msra.mxu0 0.0
    %443 = vmatprep.subr.mxu0 0.0
    %444 = vmatpush1.msra.mxu0 0.0
    %445 = vmatprep.subr.mxu0 0.0
    %446 = vmatpush1.msra.mxu0 0.0
    %447 = vmatprep.subr.mxu0 0.0
    %448 = vmatpush1.msra.mxu0 0.0
    %449 = vmatprep.subr.mxu0 0.0
    %450 = vmatpush1.msra.mxu0 0.0
    %451 = vmatprep.subr.mxu0 0.0
    %452 = vmatpush1.msra.mxu0 0.0
    %453 = vmatprep.mubr.f32.mxu0 0.0
    %454 = vmatmul.mubr.f32.gmra.mrb[0].mxu0 %v387
    %v455 = vpop.f32.mrb[0].mxu0
    %v456 = vadd.f32 %v382, %v455
    %v457 = vpop.f32.mrb[0].mxu0
    %458 = vdwg.mxu0
    %v459 = vld [vmem:[#allocation17] sm:$0x1]
    %v461 = vlaneseq
    %v462 = vshrl.u32 %v461, 7
    %v463 = vsub.s32 0, %v462
    %v464 = vrot.slane %v459, %v463
    %v466 = vadd.f32 %v456, %v464
    %v467 = vxor.u32 %v466, 2147483648
    %v468 = vmul.f32 %v467, 1.442695
    %v469 = vpow.pop %v468
    %v470 = vadd.f32 %v469, 1.0
    %v471 = vrcp.pop %v470
    %v472 = vmul.f32 1.0, %v471
    %v473 = vtanh.pop %v466
    %v474 = vld [vmem:[#allocation8] sm:$0xff]
    %476 = vrot.lane.b32.xlu0 %v474, 32
    %v477 = vpop.permute.xlu0 %476
    %v479 = vmul.f32 %v472, %v477
    %481 = vrot.lane.b32.xlu0 %v473, 64
    %v482 = vpop.permute.xlu0 %481
    %v484 = vmul.f32 %v472, %v482
    %486 = vrot.lane.b32.xlu0 %v484, 32
    %v487 = vpop.permute.xlu0 %486
    %v489 = vadd.f32 %v479, %v487
    %v490 = vtanh.pop %v489
    %492 = vrot.lane.b32.xlu0 %v490, 64
    %v493 = vpop.permute.xlu0 %492
    %v495 = vmul.f32 %v472, %v493
    %497 = vrot.lane.b32.xlu0 %v495, 32
    %v498 = vpop.permute.xlu0 %497
    %500 = vst.msk [vmem:[#allocation2] sm:$0xff] %vm311, %v498
    %vm501 = vcmask 523520
    %502 = vst.msk [vmem:[#allocation2] sm:$0xff] %vm501, %v489
    %v503 = vld [vmem:[#allocation2] sm:$0xff]
    %v504 = vld [vmem:[%s17] sm:$0xff]
    %v505 = vld [vmem:[%s17 + $0x8] sm:$0xff]
    %v506 = vld [vmem:[%s17 + $0x10] sm:$0xff]
    %v507 = vld [vmem:[%s17 + $0x18] sm:$0xff]
    %v508 = vld [vmem:[%s17 + $0x20] sm:$0xff]
    %v509 = vld [vmem:[%s17 + $0x28] sm:$0xff]
    %v510 = vld [vmem:[%s17 + $0x30] sm:$0xff]
    %v511 = vld [vmem:[%s17 + $0x38] sm:$0xff]
    %v512 = vld [vmem:[%s17 + $0x40] sm:$0xff]
    %v513 = vld [vmem:[%s17 + $0x48] sm:$0xff]
    %v514 = vld [vmem:[%s17 + $0x50] sm:$0xff]
    %v515 = vld [vmem:[%s17 + $0x58] sm:$0xff]
    %v516 = vld [vmem:[%s17 + $0x60] sm:$0xff]
    %v517 = vld [vmem:[%s17 + $0x68] sm:$0xff]
    %v518 = vld [vmem:[%s17 + $0x70] sm:$0xff]
    %v519 = vld [vmem:[%s17 + $0x78] sm:$0xff]
    %v520 = vld [vmem:[%s18] sm:$0x3]
    %v522 = vlaneseq
    %v523 = vshrl.u32 %v522, 7
    %v524 = vsub.s32 0, %v523
    %v525 = vrot.slane %v520, %v524
    %v526 = vlaneseq
    %v527 = vshrl.u32 %v526, 7
    %v528 = vsub.s32 1, %v527
    %v529 = vrot.slane %v520, %v528
    %vm532 = vcmask 523264
    %v534 = vsel %vm532, %v503, 0
    %536 = vmatprep.subr.mxu0 %v505
    %537 = vmatpush1.msra.mxu0 %v504
    %538 = vmatprep.subr.mxu0 %v507
    %539 = vmatpush1.msra.mxu0 %v506
    %540 = vmatprep.subr.mxu0 %v509
    %541 = vmatpush1.msra.mxu0 %v508
    %542 = vmatprep.subr.mxu0 %v511
    %543 = vmatpush1.msra.mxu0 %v510
    %544 = vmatprep.subr.mxu0 %v513
    %545 = vmatpush1.msra.mxu0 %v512
    %546 = vmatprep.subr.mxu0 %v515
    %547 = vmatpush1.msra.mxu0 %v514
    %548 = vmatprep.subr.mxu0 %v517
    %549 = vmatpush1.msra.mxu0 %v516
    %550 = vmatprep.subr.mxu0 %v519
    %551 = vmatpush1.msra.mxu0 %v518
    %552 = vmatprep.subr.mxu0 0.0
    %553 = vmatpush1.msra.mxu0 0.0
    %554 = vmatprep.subr.mxu0 0.0
    %555 = vmatpush1.msra.mxu0 0.0
    %556 = vmatprep.subr.mxu0 0.0
    %557 = vmatpush1.msra.mxu0 0.0
    %558 = vmatprep.subr.mxu0 0.0
    %559 = vmatpush1.msra.mxu0 0.0
    %560 = vmatprep.subr.mxu0 0.0
    %561 = vmatpush1.msra.mxu0 0.0
    %562 = vmatprep.subr.mxu0 0.0
    %563 = vmatpush1.msra.mxu0 0.0
    %564 = vmatprep.subr.mxu0 0.0
    %565 = vmatpush1.msra.mxu0 0.0
    %566 = vmatprep.subr.mxu0 0.0
    %567 = vmatpush1.msra.mxu0 0.0
    %568 = vmatprep.subr.mxu0 0.0
    %569 = vmatpush1.msra.mxu0 0.0
    %570 = vmatprep.subr.mxu0 0.0
    %571 = vmatpush1.msra.mxu0 0.0
    %572 = vmatprep.subr.mxu0 0.0
    %573 = vmatpush1.msra.mxu0 0.0
    %574 = vmatprep.subr.mxu0 0.0
    %575 = vmatpush1.msra.mxu0 0.0
    %576 = vmatprep.subr.mxu0 0.0
    %577 = vmatpush1.msra.mxu0 0.0
    %578 = vmatprep.subr.mxu0 0.0
    %579 = vmatpush1.msra.mxu0 0.0
    %580 = vmatprep.subr.mxu0 0.0
    %581 = vmatpush1.msra.mxu0 0.0
    %582 = vmatprep.subr.mxu0 0.0
    %583 = vmatpush1.msra.mxu0 0.0
    %584 = vmatprep.subr.mxu0 0.0
    %585 = vmatpush1.msra.mxu0 0.0
    %586 = vmatprep.subr.mxu0 0.0
    %587 = vmatpush1.msra.mxu0 0.0
    %588 = vmatprep.subr.mxu0 0.0
    %589 = vmatpush1.msra.mxu0 0.0
    %590 = vmatprep.subr.mxu0 0.0
    %591 = vmatpush1.msra.mxu0 0.0
    %592 = vmatprep.subr.mxu0 0.0
    %593 = vmatpush1.msra.mxu0 0.0
    %594 = vmatprep.subr.mxu0 0.0
    %595 = vmatpush1.msra.mxu0 0.0
    %596 = vmatprep.subr.mxu0 0.0
    %597 = vmatpush1.msra.mxu0 0.0
    %598 = vmatprep.subr.mxu0 0.0
    %599 = vmatpush1.msra.mxu0 0.0
    %600 = vmatprep.mubr.f32.mxu0 0.0
    %601 = vmatmul.mubr.f32.gmra.mrb[0].mxu0 %v534
    %v602 = vpop.f32.mrb[0].mxu0
    %v603 = vadd.f32 %v525, %v602
    %v604 = vpop.f32.mrb[0].mxu0
    %v605 = vadd.f32 %v529, %v604
    %606 = vdwg.mxu0
    %v607 = vld [vmem:[#allocation11] sm:$0xff]
    %vm608 = vcmask 64512
    %v610 = vsel %vm608, %v607, 0
    %612 = vmatprep.subr.mxu0 0.0
    %613 = vmatpush1.msra.mxu0 %v603
    %614 = vmatprep.subr.mxu0 0.0
    %615 = vmatpush1.msra.mxu0 0.0
    %616 = vmatprep.subr.mxu0 0.0
    %617 = vmatpush1.msra.mxu0 0.0
    %618 = vmatprep.subr.mxu0 0.0
    %619 = vmatpush1.msra.mxu0 0.0
    %620 = vmatprep.subr.mxu0 0.0
    %621 = vmatpush1.msra.mxu0 0.0
    %622 = vmatprep.subr.mxu0 0.0
    %623 = vmatpush1.msra.mxu0 0.0
    %624 = vmatprep.subr.mxu0 0.0
    %625 = vmatpush1.msra.mxu0 0.0
    %626 = vmatprep.subr.mxu0 0.0
    %627 = vmatpush1.msra.mxu0 0.0
    %628 = vmatprep.subr.mxu0 0.0
    %629 = vmatpush1.msra.mxu0 0.0
    %630 = vmatprep.subr.mxu0 0.0
    %631 = vmatpush1.msra.mxu0 0.0
    %632 = vmatprep.subr.mxu0 0.0
    %633 = vmatpush1.msra.mxu0 0.0
    %634 = vmatprep.subr.mxu0 0.0
    %635 = vmatpush1.msra.mxu0 0.0
    %636 = vmatprep.subr.mxu0 0.0
    %637 = vmatpush1.msra.mxu0 0.0
    %638 = vmatprep.subr.mxu0 0.0
    %639 = vmatpush1.msra.mxu0 0.0
    %640 = vmatprep.subr.mxu0 0.0
    %641 = vmatpush1.msra.mxu0 0.0
    %642 = vmatprep.subr.mxu0 0.0
    %643 = vmatpush1.msra.mxu0 0.0
    %644 = vmatprep.subr.mxu0 0.0
    %645 = vmatpush1.msra.mxu0 0.0
    %646 = vmatprep.subr.mxu0 0.0
    %647 = vmatpush1.msra.mxu0 0.0
    %648 = vmatprep.subr.mxu0 0.0
    %649 = vmatpush1.msra.mxu0 0.0
    %650 = vmatprep.subr.mxu0 0.0
    %651 = vmatpush1.msra.mxu0 0.0
    %652 = vmatprep.subr.mxu0 0.0
    %653 = vmatpush1.msra.mxu0 0.0
    %654 = vmatprep.subr.mxu0 0.0
    %655 = vmatpush1.msra.mxu0 0.0
    %656 = vmatprep.subr.mxu0 0.0
    %657 = vmatpush1.msra.mxu0 0.0
    %658 = vmatprep.subr.mxu0 0.0
    %659 = vmatpush1.msra.mxu0 0.0
    %660 = vmatprep.subr.mxu0 0.0
    %661 = vmatpush1.msra.mxu0 0.0
    %662 = vmatprep.subr.mxu0 0.0
    %663 = vmatpush1.msra.mxu0 0.0
    %664 = vmatprep.subr.mxu0 0.0
    %665 = vmatpush1.msra.mxu0 0.0
    %666 = vmatprep.subr.mxu0 0.0
    %667 = vmatpush1.msra.mxu0 0.0
    %668 = vmatprep.subr.mxu0 0.0
    %669 = vmatpush1.msra.mxu0 0.0
    %670 = vmatprep.subr.mxu0 0.0
    %671 = vmatpush1.msra.mxu0 0.0
    %672 = vmatprep.subr.mxu0 0.0
    %673 = vmatpush1.msra.mxu0 0.0
    %674 = vmatprep.subr.mxu0 0.0
    %675 = vmatpush1.msra.mxu0 0.0
    %676 = vmatprep.mubr.f32.mxu0 0.0
    %677 = vmatmul.mubr.f32.gmra.mrb[0].mxu0 %v610
    %v678 = vpop.f32.mrb[0].mxu0
    %v679 = vadd.f32 0.0, %v678
    %v680 = vpop.f32.mrb[0].mxu0
    %681 = vdwg.mxu0
    %v682 = vld [vmem:[%s4] sm:$0xff]
    %v683 = vld [vmem:[%s4 + $0x8] sm:$0xff]
    %v684 = vld [vmem:[%s4 + $0x10] sm:$0xff]
    %v685 = vld [vmem:[%s4 + $0x18] sm:$0xff]
    %v686 = vld [vmem:[%s4 + $0x20] sm:$0xff]
    %v687 = vld [vmem:[%s4 + $0x28] sm:$0xff]
    %v688 = vld [vmem:[%s4 + $0x30] sm:$0xff]
    %v689 = vld [vmem:[%s4 + $0x38] sm:$0xff]
    %v691 = vcombine.high %v679, %v679
    %v693 = vunpack.c.l.s4 1966171168
    %v694 = vunpack.c.0.s8 %v693
    %v695 = vlaneseq
    %v696 = vshrl.u32 %v695, 7
    %v697 = vsub.s32 %v694, %v696
    %v698 = vrot.slane %v679, %v697
    %v700 = vunpack.c.l.s4 1966171168
    %v701 = vunpack.c.0.s8 %v700
    %v702 = vlaneseq
    %v703 = vshrl.u32 %v702, 7
    %v704 = vsub.s32 %v701, %v703
    %v705 = vrot.slane %v691, %v704
    %v706 = vcombine.high %v698, %v698
    %v707 = vcombine.high %v705, %v705
    %v709 = vunpack.c.l.s4 1966171168
    %v710 = vunpack.c.0.s8 %v709
    %v711 = vlaneseq
    %v712 = vshrl.u32 %v711, 7
    %v713 = vsub.s32 %v710, %v712
    %v714 = vrot.slane %v698, %v713
    %v716 = vunpack.c.l.s4 1966171168
    %v717 = vunpack.c.0.s8 %v716
    %v718 = vlaneseq
    %v719 = vshrl.u32 %v718, 7
    %v720 = vsub.s32 %v717, %v719
    %v721 = vrot.slane %v705, %v720
    %v723 = vunpack.c.l.s4 1966171168
    %v724 = vunpack.c.0.s8 %v723
    %v725 = vlaneseq
    %v726 = vshrl.u32 %v725, 7
    %v727 = vsub.s32 %v724, %v726
    %v728 = vrot.slane %v706, %v727
    %v730 = vunpack.c.l.s4 1966171168
    %v731 = vunpack.c.0.s8 %v730
    %v732 = vlaneseq
    %v733 = vshrl.u32 %v732, 7
    %v734 = vsub.s32 %v731, %v733
    %v735 = vrot.slane %v707, %v734
    %v736 = vcombine.high %v714, %v714
    %v737 = vcombine.high %v721, %v721
    %v738 = vcombine.high %v728, %v728
    %v739 = vcombine.high %v735, %v735
    %v740 = vlaneseq
    %v741 = vshrl.u32 %v740, 7
    %v742 = vsub.s32 0, %v741
    %v743 = vrot.slane %v714, %v742
    %v744 = vlaneseq
    %v745 = vshrl.u32 %v744, 7
    %v746 = vsub.s32 0, %v745
    %v747 = vrot.slane %v728, %v746
    %v748 = vlaneseq
    %v749 = vshrl.u32 %v748, 7
    %v750 = vsub.s32 0, %v749
    %v751 = vrot.slane %v736, %v750
    %v752 = vlaneseq
    %v753 = vshrl.u32 %v752, 7
    %v754 = vsub.s32 0, %v753
    %v755 = vrot.slane %v738, %v754
    %v756 = vlaneseq
    %v757 = vshrl.u32 %v756, 7
    %v758 = vsub.s32 0, %v757
    %v759 = vrot.slane %v721, %v758
    %v760 = vlaneseq
    %v761 = vshrl.u32 %v760, 7
    %v762 = vsub.s32 0, %v761
    %v763 = vrot.slane %v735, %v762
    %v764 = vlaneseq
    %v765 = vshrl.u32 %v764, 7
    %v766 = vsub.s32 0, %v765
    %v767 = vrot.slane %v737, %v766
    %v768 = vlaneseq
    %v769 = vshrl.u32 %v768, 7
    %v770 = vsub.s32 0, %v769
    %v771 = vrot.slane %v739, %v770
    %v780 = vadd.f32 %v682, %v743
    %v781 = vadd.f32 %v683, %v747
    %v782 = vadd.f32 %v684, %v751
    %v783 = vadd.f32 %v685, %v755
    %v784 = vadd.f32 %v686, %v759
    %v785 = vadd.f32 %v687, %v763
    %v786 = vadd.f32 %v688, %v767
    %v787 = vadd.f32 %v689, %v771
    %v788 = vtanh.pop %v780
    %v789 = vtanh.pop %v781
    %v790 = vtanh.pop %v782
    %v791 = vtanh.pop %v783
    %v792 = vtanh.pop %v784
    %v793 = vtanh.pop %v785
    %v794 = vtanh.pop %v786
    %v795 = vtanh.pop %v787
    %v796 = vld [vmem:[#allocation18] sm:$0x1]
    %v797 = vlaneseq
    %v798 = vshrl.u32 %v797, 7
    %v799 = vsub.s32 0, %v798
    %v800 = vrot.slane %v796, %v799
    %v801 = vmul.f32 %v788, %v800
    %v802 = vmul.f32 %v789, %v800
    %v803 = vmul.f32 %v790, %v800
    %v804 = vmul.f32 %v791, %v800
    %v805 = vmul.f32 %v792, %v800
    %v806 = vmul.f32 %v793, %v800
    %v807 = vmul.f32 %v794, %v800
    %v808 = vmul.f32 %v795, %v800
    %v809 = vsel %vm532, %v801, 0.0
    %810 = vadd.xlane.f32.xlu0 %v809
    %v811 = vpop.xlane.xlu0 %810
    %v812 = vsel %vm532, %v802, 0.0
    %813 = vadd.xlane.f32.xlu0 %v812
    %v814 = vpop.xlane.xlu0 %813
    %v815 = vsel %vm532, %v803, 0.0
    %816 = vadd.xlane.f32.xlu0 %v815
    %v817 = vpop.xlane.xlu0 %816
    %v818 = vsel %vm532, %v804, 0.0
    %819 = vadd.xlane.f32.xlu0 %v818
    %v820 = vpop.xlane.xlu0 %819
    %v821 = vsel %vm532, %v805, 0.0
    %822 = vadd.xlane.f32.xlu0 %v821
    %v823 = vpop.xlane.xlu0 %822
    %v824 = vsel %vm532, %v806, 0.0
    %825 = vadd.xlane.f32.xlu0 %v824
    %v826 = vpop.xlane.xlu0 %825
    %v827 = vsel %vm532, %v807, 0.0
    %828 = vadd.xlane.f32.xlu0 %v827
    %v829 = vpop.xlane.xlu0 %828
    %v830 = vsel %vm532, %v808, 0.0
    %831 = vadd.xlane.f32.xlu0 %v830
    %v832 = vpop.xlane.xlu0 %831
    %v841 = vlaneseq
    %v842 = vand.u32 %v841, 127
    %v843 = vlaneseq
    %v844 = vshrl.u32 %v843, 7
    %v845 = vsub.s32 %v842, %v844
    %v846 = vrot.slane %v811, %v845
    %v847 = vlaneseq
    %v848 = vshrl.u32 %v847, 7
    %v849 = vsub.s32 %v842, %v848
    %v850 = vrot.slane %v814, %v849
    %v851 = vlaneseq
    %v852 = vshrl.u32 %v851, 7
    %v853 = vsub.s32 %v842, %v852
    %v854 = vrot.slane %v817, %v853
    %v855 = vlaneseq
    %v856 = vshrl.u32 %v855, 7
    %v857 = vsub.s32 %v842, %v856
    %v858 = vrot.slane %v820, %v857
    %v859 = vlaneseq
    %v860 = vshrl.u32 %v859, 7
    %v861 = vsub.s32 %v842, %v860
    %v862 = vrot.slane %v823, %v861
    %v863 = vlaneseq
    %v864 = vshrl.u32 %v863, 7
    %v865 = vsub.s32 %v842, %v864
    %v866 = vrot.slane %v826, %v865
    %v867 = vlaneseq
    %v868 = vshrl.u32 %v867, 7
    %v869 = vsub.s32 %v842, %v868
    %v870 = vrot.slane %v829, %v869
    %v871 = vlaneseq
    %v872 = vshrl.u32 %v871, 7
    %v873 = vsub.s32 %v842, %v872
    %v874 = vrot.slane %v832, %v873
    %vm875 = vcmask 1041409
    %v876 = vsel %vm875, %v850, %v846
    %vm877 = vcmask 1042434
    %v878 = vsel %vm877, %v854, %v876
    %vm879 = vcmask 1043459
    %v880 = vsel %vm879, %v858, %v878
    %vm881 = vcmask 1044484
    %v882 = vsel %vm881, %v862, %v880
    %vm883 = vcmask 1045509
    %v884 = vsel %vm883, %v866, %v882
    %vm885 = vcmask 1046534
    %v886 = vsel %vm885, %v870, %v884
    %vm887 = vcmask 1047559
    %v888 = vsel %vm887, %v874, %v886
    %v890 = vsel %vm608, %v888, -inf
    %891 = vmax.xlane.f32.xlu0 %v890
    %v892 = vpop.xlane.xlu0 %891
    %v894 = vlaneseq
    %v895 = vshrl.u32 %v894, 7
    %v896 = vsub.s32 0, %v895
    %v897 = vrot.slane %v892, %v896
    %v898 = vlaneseq
    %v899 = vshrl.u32 %v898, 7
    %v900 = vsub.s32 1, %v899
    %v901 = vrot.slane %v892, %v900
    %v902 = vlaneseq
    %v903 = vshrl.u32 %v902, 7
    %v904 = vsub.s32 2, %v903
    %v905 = vrot.slane %v892, %v904
    %v906 = vlaneseq
    %v907 = vshrl.u32 %v906, 7
    %v908 = vsub.s32 3, %v907
    %v909 = vrot.slane %v892, %v908
    %v910 = vlaneseq
    %v911 = vshrl.u32 %v910, 7
    %v912 = vsub.s32 4, %v911
    %v913 = vrot.slane %v892, %v912
    %v914 = vlaneseq
    %v915 = vshrl.u32 %v914, 7
    %v916 = vsub.s32 5, %v915
    %v917 = vrot.slane %v892, %v916
    %v918 = vlaneseq
    %v919 = vshrl.u32 %v918, 7
    %v920 = vsub.s32 6, %v919
    %v921 = vrot.slane %v892, %v920
    %v922 = vlaneseq
    %v923 = vshrl.u32 %v922, 7
    %v924 = vsub.s32 7, %v923
    %v925 = vrot.slane %v892, %v924
    %v934 = vsub.f32 %v811, %v897
    %v935 = vsub.f32 %v814, %v901
    %v936 = vsub.f32 %v817, %v905
    %v937 = vsub.f32 %v820, %v909
    %v938 = vsub.f32 %v823, %v913
    %v939 = vsub.f32 %v826, %v917
    %v940 = vsub.f32 %v829, %v921
    %v941 = vsub.f32 %v832, %v925
    %v942 = vmul.f32 %v934, 1.442695
    %v943 = vpow.pop %v942
    %v944 = vmul.f32 %v935, 1.442695
    %v945 = vpow.pop %v944
    %v946 = vmul.f32 %v936, 1.442695
    %v947 = vpow.pop %v946
    %v948 = vmul.f32 %v937, 1.442695
    %v949 = vpow.pop %v948
    %v950 = vmul.f32 %v938, 1.442695
    %v951 = vpow.pop %v950
    %v952 = vmul.f32 %v939, 1.442695
    %v953 = vpow.pop %v952
    %v954 = vmul.f32 %v940, 1.442695
    %v955 = vpow.pop %v954
    %v956 = vmul.f32 %v941, 1.442695
    %v957 = vpow.pop %v956
    %v958 = vld [vmem:[#allocation9] sm:$0xff]
    %v960 = vlaneseq
    %v961 = vshrl.u32 %v960, 7
    %v962 = vsub.s32 0, %v961
    %v963 = vrot.slane %v958, %v962
    %965 = vbcast.lane.b32.xlu0 %v963, 256
    %v966 = vpop.permute.xlu0 %965
    %v967 = vlaneseq
    %v968 = vshrl.u32 %v967, 7
    %v969 = vsub.s32 1, %v968
    %v970 = vrot.slane %v958, %v969
    %972 = vbcast.lane.b32.xlu0 %v970, 256
    %v973 = vpop.permute.xlu0 %972
    %v974 = vlaneseq
    %v975 = vshrl.u32 %v974, 7
    %v976 = vsub.s32 2, %v975
    %v977 = vrot.slane %v958, %v976
    %979 = vbcast.lane.b32.xlu0 %v977, 256
    %v980 = vpop.permute.xlu0 %979
    %v981 = vlaneseq
    %v982 = vshrl.u32 %v981, 7
    %v983 = vsub.s32 3, %v982
    %v984 = vrot.slane %v958, %v983
    %986 = vbcast.lane.b32.xlu0 %v984, 256
    %v987 = vpop.permute.xlu0 %986
    %v988 = vlaneseq
    %v989 = vshrl.u32 %v988, 7
    %v990 = vsub.s32 4, %v989
    %v991 = vrot.slane %v958, %v990
    %993 = vbcast.lane.b32.xlu0 %v991, 256
    %v994 = vpop.permute.xlu0 %993
    %v995 = vlaneseq
    %v996 = vshrl.u32 %v995, 7
    %v997 = vsub.s32 5, %v996
    %v998 = vrot.slane %v958, %v997
    %1000 = vbcast.lane.b32.xlu0 %v998, 256
    %v1001 = vpop.permute.xlu0 %1000
    %v1002 = vlaneseq
    %v1003 = vshrl.u32 %v1002, 7
    %v1004 = vsub.s32 6, %v1003
    %v1005 = vrot.slane %v958, %v1004
    %1007 = vbcast.lane.b32.xlu0 %v1005, 256
    %v1008 = vpop.permute.xlu0 %1007
    %v1009 = vlaneseq
    %v1010 = vshrl.u32 %v1009, 7
    %v1011 = vsub.s32 7, %v1010
    %v1012 = vrot.slane %v958, %v1011
    %1014 = vbcast.lane.b32.xlu0 %v1012, 256
    %v1015 = vpop.permute.xlu0 %1014
    %v1024 = vmul.f32 %v943, %v966
    %v1025 = vmul.f32 %v945, %v973
    %v1026 = vmul.f32 %v947, %v980
    %v1027 = vmul.f32 %v949, %v987
    %v1028 = vmul.f32 %v951, %v994
    %v1029 = vmul.f32 %v953, %v1001
    %v1030 = vmul.f32 %v955, %v1008
    %v1031 = vmul.f32 %v957, %v1015
    %1040 = vset.pattern.permute.xlu0 0
    %1041 = vperm.xlu0 %1040, %v1024
    %v1042 = vpop.permute.xlu0 %1041
    %1043 = vset.pattern.permute.xlu0 0
    %1044 = vperm.xlu0 %1043, %v1025
    %v1045 = vpop.permute.xlu0 %1044
    %1046 = vset.pattern.permute.xlu0 0
    %1047 = vperm.xlu0 %1046, %v1026
    %v1048 = vpop.permute.xlu0 %1047
    %1049 = vset.pattern.permute.xlu0 0
    %1050 = vperm.xlu0 %1049, %v1027
    %v1051 = vpop.permute.xlu0 %1050
    %1052 = vset.pattern.permute.xlu0 0
    %1053 = vperm.xlu0 %1052, %v1028
    %v1054 = vpop.permute.xlu0 %1053
    %1055 = vset.pattern.permute.xlu0 0
    %1056 = vperm.xlu0 %1055, %v1029
    %v1057 = vpop.permute.xlu0 %1056
    %1058 = vset.pattern.permute.xlu0 0
    %1059 = vperm.xlu0 %1058, %v1030
    %v1060 = vpop.permute.xlu0 %1059
    %1061 = vset.pattern.permute.xlu0 0
    %1062 = vperm.xlu0 %1061, %v1031
    %v1063 = vpop.permute.xlu0 %1062
    %v1064 = vlaneseq
    %v1065 = vshrl.u32 %v1064, 7
    %v1066 = vsub.s32 %v842, %v1065
    %v1067 = vrot.slane %v1042, %v1066
    %v1068 = vlaneseq
    %v1069 = vshrl.u32 %v1068, 7
    %v1070 = vsub.s32 %v842, %v1069
    %v1071 = vrot.slane %v1045, %v1070
    %v1072 = vlaneseq
    %v1073 = vshrl.u32 %v1072, 7
    %v1074 = vsub.s32 %v842, %v1073
    %v1075 = vrot.slane %v1048, %v1074
    %v1076 = vlaneseq
    %v1077 = vshrl.u32 %v1076, 7
    %v1078 = vsub.s32 %v842, %v1077
    %v1079 = vrot.slane %v1051, %v1078
    %v1080 = vlaneseq
    %v1081 = vshrl.u32 %v1080, 7
    %v1082 = vsub.s32 %v842, %v1081
    %v1083 = vrot.slane %v1054, %v1082
    %v1084 = vlaneseq
    %v1085 = vshrl.u32 %v1084, 7
    %v1086 = vsub.s32 %v842, %v1085
    %v1087 = vrot.slane %v1057, %v1086
    %v1088 = vlaneseq
    %v1089 = vshrl.u32 %v1088, 7
    %v1090 = vsub.s32 %v842, %v1089
    %v1091 = vrot.slane %v1060, %v1090
    %v1092 = vlaneseq
    %v1093 = vshrl.u32 %v1092, 7
    %v1094 = vsub.s32 %v842, %v1093
    %v1095 = vrot.slane %v1063, %v1094
    %v1096 = vsel %vm875, %v1071, %v1067
    %v1097 = vsel %vm877, %v1075, %v1096
    %v1098 = vsel %vm879, %v1079, %v1097
    %v1099 = vsel %vm881, %v1083, %v1098
    %v1100 = vsel %vm883, %v1087, %v1099
    %v1101 = vsel %vm885, %v1091, %v1100
    %v1102 = vsel %vm887, %v1095, %v1101
    %v1104 = vsel %vm608, %v1102, 0.0
    %1105 = vadd.xlane.f32.xlu0 %v1104
    %v1106 = vpop.xlane.xlu0 %1105
    %v1107 = vmax.f32 %v1106, 1e-12
    %v1109 = vlaneseq
    %v1110 = vshrl.u32 %v1109, 7
    %v1111 = vsub.s32 0, %v1110
    %v1112 = vrot.slane %v1107, %v1111
    %v1113 = vlaneseq
    %v1114 = vshrl.u32 %v1113, 7
    %v1115 = vsub.s32 1, %v1114
    %v1116 = vrot.slane %v1107, %v1115
    %v1117 = vlaneseq
    %v1118 = vshrl.u32 %v1117, 7
    %v1119 = vsub.s32 2, %v1118
    %v1120 = vrot.slane %v1107, %v1119
    %v1121 = vlaneseq
    %v1122 = vshrl.u32 %v1121, 7
    %v1123 = vsub.s32 3, %v1122
    %v1124 = vrot.slane %v1107, %v1123
    %v1125 = vlaneseq
    %v1126 = vshrl.u32 %v1125, 7
    %v1127 = vsub.s32 4, %v1126
    %v1128 = vrot.slane %v1107, %v1127
    %v1129 = vlaneseq
    %v1130 = vshrl.u32 %v1129, 7
    %v1131 = vsub.s32 5, %v1130
    %v1132 = vrot.slane %v1107, %v1131
    %v1133 = vlaneseq
    %v1134 = vshrl.u32 %v1133, 7
    %v1135 = vsub.s32 6, %v1134
    %v1136 = vrot.slane %v1107, %v1135
    %v1137 = vlaneseq
    %v1138 = vshrl.u32 %v1137, 7
    %v1139 = vsub.s32 7, %v1138
    %v1140 = vrot.slane %v1107, %v1139
    %v1149 = vrcp.pop %v1112
    %v1150 = vmul.f32 %v1024, %v1149
    %v1151 = vrcp.pop %v1116
    %v1152 = vmul.f32 %v1025, %v1151
    %v1153 = vrcp.pop %v1120
    %v1154 = vmul.f32 %v1026, %v1153
    %v1155 = vrcp.pop %v1124
    %v1156 = vmul.f32 %v1027, %v1155
    %v1157 = vrcp.pop %v1128
    %v1158 = vmul.f32 %v1028, %v1157
    %v1159 = vrcp.pop %v1132
    %v1160 = vmul.f32 %v1029, %v1159
    %v1161 = vrcp.pop %v1136
    %v1162 = vmul.f32 %v1030, %v1161
    %v1163 = vrcp.pop %v1140
    %v1164 = vmul.f32 %v1031, %v1163
    %v1165 = vld [vmem:[%s5] sm:$0x7]
    %v1166 = vld [vmem:[%s5 + $0x4] sm:$0x7]
    %v1167 = vld [vmem:[%s5 + $0x8] sm:$0x7]
    %v1168 = vld [vmem:[%s5 + $0xc] sm:$0x7]
    %v1169 = vld [vmem:[%s5 + $0x10] sm:$0x7]
    %v1170 = vld [vmem:[%s5 + $0x14] sm:$0x7]
    %v1171 = vld [vmem:[%s5 + $0x18] sm:$0x7]
    %v1172 = vld [vmem:[%s5 + $0x1c] sm:$0x7]
    %v1174 = vcombine.high %v603, %v603
    %v1176 = vunpack.c.l.s4 1966171168
    %v1177 = vunpack.c.0.s8 %v1176
    %v1178 = vlaneseq
    %v1179 = vshrl.u32 %v1178, 7
    %v1180 = vsub.s32 %v1177, %v1179
    %v1181 = vrot.slane %v603, %v1180
    %v1183 = vunpack.c.l.s4 1966171168
    %v1184 = vunpack.c.0.s8 %v1183
    %v1185 = vlaneseq
    %v1186 = vshrl.u32 %v1185, 7
    %v1187 = vsub.s32 %v1184, %v1186
    %v1188 = vrot.slane %v1174, %v1187
    %v1189 = vcombine.high %v1181, %v1181
    %v1190 = vcombine.high %v1188, %v1188
    %v1192 = vunpack.c.l.s4 1966171168
    %v1193 = vunpack.c.0.s8 %v1192
    %v1194 = vlaneseq
    %v1195 = vshrl.u32 %v1194, 7
    %v1196 = vsub.s32 %v1193, %v1195
    %v1197 = vrot.slane %v1181, %v1196
    %v1199 = vunpack.c.l.s4 1966171168
    %v1200 = vunpack.c.0.s8 %v1199
    %v1201 = vlaneseq
    %v1202 = vshrl.u32 %v1201, 7
    %v1203 = vsub.s32 %v1200, %v1202
    %v1204 = vrot.slane %v1188, %v1203
    %v1206 = vunpack.c.l.s4 1966171168
    %v1207 = vunpack.c.0.s8 %v1206
    %v1208 = vlaneseq
    %v1209 = vshrl.u32 %v1208, 7
    %v1210 = vsub.s32 %v1207, %v1209
    %v1211 = vrot.slane %v1189, %v1210
    %v1213 = vunpack.c.l.s4 1966171168
    %v1214 = vunpack.c.0.s8 %v1213
    %v1215 = vlaneseq
    %v1216 = vshrl.u32 %v1215, 7
    %v1217 = vsub.s32 %v1214, %v1216
    %v1218 = vrot.slane %v1190, %v1217
    %v1219 = vcombine.high %v1197, %v1197
    %v1220 = vcombine.high %v1204, %v1204
    %v1221 = vcombine.high %v1211, %v1211
    %v1222 = vcombine.high %v1218, %v1218
    %v1223 = vlaneseq
    %v1224 = vshrl.u32 %v1223, 7
    %v1225 = vsub.s32 0, %v1224
    %v1226 = vrot.slane %v1197, %v1225
    %v1227 = vlaneseq
    %v1228 = vshrl.u32 %v1227, 7
    %v1229 = vsub.s32 0, %v1228
    %v1230 = vrot.slane %v1211, %v1229
    %v1231 = vlaneseq
    %v1232 = vshrl.u32 %v1231, 7
    %v1233 = vsub.s32 0, %v1232
    %v1234 = vrot.slane %v1219, %v1233
    %v1235 = vlaneseq
    %v1236 = vshrl.u32 %v1235, 7
    %v1237 = vsub.s32 0, %v1236
    %v1238 = vrot.slane %v1221, %v1237
    %v1239 = vlaneseq
    %v1240 = vshrl.u32 %v1239, 7
    %v1241 = vsub.s32 0, %v1240
    %v1242 = vrot.slane %v1204, %v1241
    %v1243 = vlaneseq
    %v1244 = vshrl.u32 %v1243, 7
    %v1245 = vsub.s32 0, %v1244
    %v1246 = vrot.slane %v1218, %v1245
    %v1247 = vlaneseq
    %v1248 = vshrl.u32 %v1247, 7
    %v1249 = vsub.s32 0, %v1248
    %v1250 = vrot.slane %v1220, %v1249
    %v1251 = vlaneseq
    %v1252 = vshrl.u32 %v1251, 7
    %v1253 = vsub.s32 0, %v1252
    %v1254 = vrot.slane %v1222, %v1253
    %1255 = vrot.lane.b32.xlu0 %v1226, 64
    %v1256 = vpop.permute.xlu0 %1255
    %1257 = vrot.lane.b32.xlu0 %v1230, 64
    %v1258 = vpop.permute.xlu0 %1257
    %1259 = vrot.lane.b32.xlu0 %v1234, 64
    %v1260 = vpop.permute.xlu0 %1259
    %1261 = vrot.lane.b32.xlu0 %v1238, 64
    %v1262 = vpop.permute.xlu0 %1261
    %1263 = vrot.lane.b32.xlu0 %v1242, 64
    %v1264 = vpop.permute.xlu0 %1263
    %1265 = vrot.lane.b32.xlu0 %v1246, 64
    %v1266 = vpop.permute.xlu0 %1265
    %1267 = vrot.lane.b32.xlu0 %v1250, 64
    %v1268 = vpop.permute.xlu0 %1267
    %1269 = vrot.lane.b32.xlu0 %v1254, 64
    %v1270 = vpop.permute.xlu0 %1269
    %v1279 = vadd.f32 %v1165, %v1256
    %v1280 = vadd.f32 %v1166, %v1258
    %v1281 = vadd.f32 %v1167, %v1260
    %v1282 = vadd.f32 %v1168, %v1262
    %v1283 = vadd.f32 %v1169, %v1264
    %v1284 = vadd.f32 %v1170, %v1266
    %v1285 = vadd.f32 %v1171, %v1268
    %v1286 = vadd.f32 %v1172, %v1270
    %v1287 = vtanh.pop %v1279
    %v1288 = vtanh.pop %v1280
    %v1289 = vtanh.pop %v1281
    %v1290 = vtanh.pop %v1282
    %v1291 = vtanh.pop %v1283
    %v1292 = vtanh.pop %v1284
    %v1293 = vtanh.pop %v1285
    %v1294 = vtanh.pop %v1286
    %v1295 = vld [vmem:[#allocation18 + $0x1] sm:$0x1]
    %v1296 = vlaneseq
    %v1297 = vshrl.u32 %v1296, 7
    %v1298 = vsub.s32 0, %v1297
    %v1299 = vrot.slane %v1295, %v1298
    %v1300 = vmul.f32 %v1287, %v1299
    %v1301 = vmul.f32 %v1288, %v1299
    %v1302 = vmul.f32 %v1289, %v1299
    %v1303 = vmul.f32 %v1290, %v1299
    %v1304 = vmul.f32 %v1291, %v1299
    %v1305 = vmul.f32 %v1292, %v1299
    %v1306 = vmul.f32 %v1293, %v1299
    %v1307 = vmul.f32 %v1294, %v1299
    %vm1308 = vcmask 518144
    %v1309 = vsel %vm1308, %v1300, 0.0
    %1310 = vadd.xlane.f32.xlu0 %v1309
    %v1311 = vpop.xlane.xlu0 %1310
    %v1312 = vsel %vm1308, %v1301, 0.0
    %1313 = vadd.xlane.f32.xlu0 %v1312
    %v1314 = vpop.xlane.xlu0 %1313
    %v1315 = vsel %vm1308, %v1302, 0.0
    %1316 = vadd.xlane.f32.xlu0 %v1315
    %v1317 = vpop.xlane.xlu0 %1316
    %v1318 = vsel %vm1308, %v1303, 0.0
    %1319 = vadd.xlane.f32.xlu0 %v1318
    %v1320 = vpop.xlane.xlu0 %1319
    %v1321 = vsel %vm1308, %v1304, 0.0
    %1322 = vadd.xlane.f32.xlu0 %v1321
    %v1323 = vpop.xlane.xlu0 %1322
    %v1324 = vsel %vm1308, %v1305, 0.0
    %1325 = vadd.xlane.f32.xlu0 %v1324
    %v1326 = vpop.xlane.xlu0 %1325
    %v1327 = vsel %vm1308, %v1306, 0.0
    %1328 = vadd.xlane.f32.xlu0 %v1327
    %v1329 = vpop.xlane.xlu0 %1328
    %v1330 = vsel %vm1308, %v1307, 0.0
    %1331 = vadd.xlane.f32.xlu0 %v1330
    %v1332 = vpop.xlane.xlu0 %1331
    %v1341 = vlaneseq
    %v1342 = vshrl.u32 %v1341, 7
    %v1343 = vsub.s32 %v842, %v1342
    %v1344 = vrot.slane %v1311, %v1343
    %v1345 = vlaneseq
    %v1346 = vshrl.u32 %v1345, 7
    %v1347 = vsub.s32 %v842, %v1346
    %v1348 = vrot.slane %v1314, %v1347
    %v1349 = vlaneseq
    %v1350 = vshrl.u32 %v1349, 7
    %v1351 = vsub.s32 %v842, %v1350
    %v1352 = vrot.slane %v1317, %v1351
    %v1353 = vlaneseq
    %v1354 = vshrl.u32 %v1353, 7
    %v1355 = vsub.s32 %v842, %v1354
    %v1356 = vrot.slane %v1320, %v1355
    %v1357 = vlaneseq
    %v1358 = vshrl.u32 %v1357, 7
    %v1359 = vsub.s32 %v842, %v1358
    %v1360 = vrot.slane %v1323, %v1359
    %v1361 = vlaneseq
    %v1362 = vshrl.u32 %v1361, 7
    %v1363 = vsub.s32 %v842, %v1362
    %v1364 = vrot.slane %v1326, %v1363
    %v1365 = vlaneseq
    %v1366 = vshrl.u32 %v1365, 7
    %v1367 = vsub.s32 %v842, %v1366
    %v1368 = vrot.slane %v1329, %v1367
    %v1369 = vlaneseq
    %v1370 = vshrl.u32 %v1369, 7
    %v1371 = vsub.s32 %v842, %v1370
    %v1372 = vrot.slane %v1332, %v1371
    %v1373 = vsel %vm875, %v1348, %v1344
    %v1374 = vsel %vm877, %v1352, %v1373
    %v1375 = vsel %vm879, %v1356, %v1374
    %v1376 = vsel %vm881, %v1360, %v1375
    %v1377 = vsel %vm883, %v1364, %v1376
    %v1378 = vsel %vm885, %v1368, %v1377
    %v1379 = vsel %vm887, %v1372, %v1378
    %vm1381 = vcmask 23552
    %v1382 = vsel %vm1381, %v1379, -inf
    %1383 = vmax.xlane.f32.xlu0 %v1382
    %v1384 = vpop.xlane.xlu0 %1383
    %v1386 = vlaneseq
    %v1387 = vshrl.u32 %v1386, 7
    %v1388 = vsub.s32 0, %v1387
    %v1389 = vrot.slane %v1384, %v1388
    %v1390 = vlaneseq
    %v1391 = vshrl.u32 %v1390, 7
    %v1392 = vsub.s32 1, %v1391
    %v1393 = vrot.slane %v1384, %v1392
    %v1394 = vlaneseq
    %v1395 = vshrl.u32 %v1394, 7
    %v1396 = vsub.s32 2, %v1395
    %v1397 = vrot.slane %v1384, %v1396
    %v1398 = vlaneseq
    %v1399 = vshrl.u32 %v1398, 7
    %v1400 = vsub.s32 3, %v1399
    %v1401 = vrot.slane %v1384, %v1400
    %v1402 = vlaneseq
    %v1403 = vshrl.u32 %v1402, 7
    %v1404 = vsub.s32 4, %v1403
    %v1405 = vrot.slane %v1384, %v1404
    %v1406 = vlaneseq
    %v1407 = vshrl.u32 %v1406, 7
    %v1408 = vsub.s32 5, %v1407
    %v1409 = vrot.slane %v1384, %v1408
    %v1410 = vlaneseq
    %v1411 = vshrl.u32 %v1410, 7
    %v1412 = vsub.s32 6, %v1411
    %v1413 = vrot.slane %v1384, %v1412
    %v1414 = vlaneseq
    %v1415 = vshrl.u32 %v1414, 7
    %v1416 = vsub.s32 7, %v1415
    %v1417 = vrot.slane %v1384, %v1416
    %v1426 = vsub.f32 %v1311, %v1389
    %v1427 = vsub.f32 %v1314, %v1393
    %v1428 = vsub.f32 %v1317, %v1397
    %v1429 = vsub.f32 %v1320, %v1401
    %v1430 = vsub.f32 %v1323, %v1405
    %v1431 = vsub.f32 %v1326, %v1409
    %v1432 = vsub.f32 %v1329, %v1413
    %v1433 = vsub.f32 %v1332, %v1417
    %v1434 = vmul.f32 %v1426, 1.442695
    %v1435 = vpow.pop %v1434
    %v1436 = vmul.f32 %v1427, 1.442695
    %v1437 = vpow.pop %v1436
    %v1438 = vmul.f32 %v1428, 1.442695
    %v1439 = vpow.pop %v1438
    %v1440 = vmul.f32 %v1429, 1.442695
    %v1441 = vpow.pop %v1440
    %v1442 = vmul.f32 %v1430, 1.442695
    %v1443 = vpow.pop %v1442
    %v1444 = vmul.f32 %v1431, 1.442695
    %v1445 = vpow.pop %v1444
    %v1446 = vmul.f32 %v1432, 1.442695
    %v1447 = vpow.pop %v1446
    %v1448 = vmul.f32 %v1433, 1.442695
    %v1449 = vpow.pop %v1448
    %v1450 = vld [vmem:[%s7] sm:$0xff]
    %v1452 = vlaneseq
    %v1453 = vshrl.u32 %v1452, 7
    %v1454 = vsub.s32 0, %v1453
    %v1455 = vrot.slane %v1450, %v1454
    %1457 = vbcast.lane.b32.xlu0 %v1455, 256
    %v1458 = vpop.permute.xlu0 %1457
    %v1459 = vlaneseq
    %v1460 = vshrl.u32 %v1459, 7
    %v1461 = vsub.s32 1, %v1460
    %v1462 = vrot.slane %v1450, %v1461
    %1464 = vbcast.lane.b32.xlu0 %v1462, 256
    %v1465 = vpop.permute.xlu0 %1464
    %v1466 = vlaneseq
    %v1467 = vshrl.u32 %v1466, 7
    %v1468 = vsub.s32 2, %v1467
    %v1469 = vrot.slane %v1450, %v1468
    %1471 = vbcast.lane.b32.xlu0 %v1469, 256
    %v1472 = vpop.permute.xlu0 %1471
    %v1473 = vlaneseq
    %v1474 = vshrl.u32 %v1473, 7
    %v1475 = vsub.s32 3, %v1474
    %v1476 = vrot.slane %v1450, %v1475
    %1478 = vbcast.lane.b32.xlu0 %v1476, 256
    %v1479 = vpop.permute.xlu0 %1478
    %v1480 = vlaneseq
    %v1481 = vshrl.u32 %v1480, 7
    %v1482 = vsub.s32 4, %v1481
    %v1483 = vrot.slane %v1450, %v1482
    %1485 = vbcast.lane.b32.xlu0 %v1483, 256
    %v1486 = vpop.permute.xlu0 %1485
    %v1487 = vlaneseq
    %v1488 = vshrl.u32 %v1487, 7
    %v1489 = vsub.s32 5, %v1488
    %v1490 = vrot.slane %v1450, %v1489
    %1492 = vbcast.lane.b32.xlu0 %v1490, 256
    %v1493 = vpop.permute.xlu0 %1492
    %v1494 = vlaneseq
    %v1495 = vshrl.u32 %v1494, 7
    %v1496 = vsub.s32 6, %v1495
    %v1497 = vrot.slane %v1450, %v1496
    %1499 = vbcast.lane.b32.xlu0 %v1497, 256
    %v1500 = vpop.permute.xlu0 %1499
    %v1501 = vlaneseq
    %v1502 = vshrl.u32 %v1501, 7
    %v1503 = vsub.s32 7, %v1502
    %v1504 = vrot.slane %v1450, %v1503
    %1506 = vbcast.lane.b32.xlu0 %v1504, 256
    %v1507 = vpop.permute.xlu0 %1506
    %v1516 = vmul.f32 %v1435, %v1458
    %v1517 = vmul.f32 %v1437, %v1465
    %v1518 = vmul.f32 %v1439, %v1472
    %v1519 = vmul.f32 %v1441, %v1479
    %v1520 = vmul.f32 %v1443, %v1486
    %v1521 = vmul.f32 %v1445, %v1493
    %v1522 = vmul.f32 %v1447, %v1500
    %v1523 = vmul.f32 %v1449, %v1507
    %1532 = vset.pattern.permute.xlu0 0
    %1533 = vperm.xlu0 %1532, %v1516
    %v1534 = vpop.permute.xlu0 %1533
    %1535 = vset.pattern.permute.xlu0 0
    %1536 = vperm.xlu0 %1535, %v1517
    %v1537 = vpop.permute.xlu0 %1536
    %1538 = vset.pattern.permute.xlu0 0
    %1539 = vperm.xlu0 %1538, %v1518
    %v1540 = vpop.permute.xlu0 %1539
    %1541 = vset.pattern.permute.xlu0 0
    %1542 = vperm.xlu0 %1541, %v1519
    %v1543 = vpop.permute.xlu0 %1542
    %1544 = vset.pattern.permute.xlu0 0
    %1545 = vperm.xlu0 %1544, %v1520
    %v1546 = vpop.permute.xlu0 %1545
    %1547 = vset.pattern.permute.xlu0 0
    %1548 = vperm.xlu0 %1547, %v1521
    %v1549 = vpop.permute.xlu0 %1548
    %1550 = vset.pattern.permute.xlu0 0
    %1551 = vperm.xlu0 %1550, %v1522
    %v1552 = vpop.permute.xlu0 %1551
    %1553 = vset.pattern.permute.xlu0 0
    %1554 = vperm.xlu0 %1553, %v1523
    %v1555 = vpop.permute.xlu0 %1554
    %v1556 = vlaneseq
    %v1557 = vshrl.u32 %v1556, 7
    %v1558 = vsub.s32 %v842, %v1557
    %v1559 = vrot.slane %v1534, %v1558
    %v1560 = vlaneseq
    %v1561 = vshrl.u32 %v1560, 7
    %v1562 = vsub.s32 %v842, %v1561
    %v1563 = vrot.slane %v1537, %v1562
    %v1564 = vlaneseq
    %v1565 = vshrl.u32 %v1564, 7
    %v1566 = vsub.s32 %v842, %v1565
    %v1567 = vrot.slane %v1540, %v1566
    %v1568 = vlaneseq
    %v1569 = vshrl.u32 %v1568, 7
    %v1570 = vsub.s32 %v842, %v1569
    %v1571 = vrot.slane %v1543, %v1570
    %v1572 = vlaneseq
    %v1573 = vshrl.u32 %v1572, 7
    %v1574 = vsub.s32 %v842, %v1573
    %v1575 = vrot.slane %v1546, %v1574
    %v1576 = vlaneseq
    %v1577 = vshrl.u32 %v1576, 7
    %v1578 = vsub.s32 %v842, %v1577
    %v1579 = vrot.slane %v1549, %v1578
    %v1580 = vlaneseq
    %v1581 = vshrl.u32 %v1580, 7
    %v1582 = vsub.s32 %v842, %v1581
    %v1583 = vrot.slane %v1552, %v1582
    %v1584 = vlaneseq
    %v1585 = vshrl.u32 %v1584, 7
    %v1586 = vsub.s32 %v842, %v1585
    %v1587 = vrot.slane %v1555, %v1586
    %v1588 = vsel %vm875, %v1563, %v1559
    %v1589 = vsel %vm877, %v1567, %v1588
    %v1590 = vsel %vm879, %v1571, %v1589
    %v1591 = vsel %vm881, %v1575, %v1590
    %v1592 = vsel %vm883, %v1579, %v1591
    %v1593 = vsel %vm885, %v1583, %v1592
    %v1594 = vsel %vm887, %v1587, %v1593
    %v1596 = vsel %vm1381, %v1594, 0.0
    %1597 = vadd.xlane.f32.xlu0 %v1596
    %v1598 = vpop.xlane.xlu0 %1597
    %v1599 = vmax.f32 %v1598, 1e-12
    %v1601 = vlaneseq
    %v1602 = vshrl.u32 %v1601, 7
    %v1603 = vsub.s32 0, %v1602
    %v1604 = vrot.slane %v1599, %v1603
    %v1605 = vlaneseq
    %v1606 = vshrl.u32 %v1605, 7
    %v1607 = vsub.s32 1, %v1606
    %v1608 = vrot.slane %v1599, %v1607
    %v1609 = vlaneseq
    %v1610 = vshrl.u32 %v1609, 7
    %v1611 = vsub.s32 2, %v1610
    %v1612 = vrot.slane %v1599, %v1611
    %v1613 = vlaneseq
    %v1614 = vshrl.u32 %v1613, 7
    %v1615 = vsub.s32 3, %v1614
    %v1616 = vrot.slane %v1599, %v1615
    %v1617 = vlaneseq
    %v1618 = vshrl.u32 %v1617, 7
    %v1619 = vsub.s32 4, %v1618
    %v1620 = vrot.slane %v1599, %v1619
    %v1621 = vlaneseq
    %v1622 = vshrl.u32 %v1621, 7
    %v1623 = vsub.s32 5, %v1622
    %v1624 = vrot.slane %v1599, %v1623
    %v1625 = vlaneseq
    %v1626 = vshrl.u32 %v1625, 7
    %v1627 = vsub.s32 6, %v1626
    %v1628 = vrot.slane %v1599, %v1627
    %v1629 = vlaneseq
    %v1630 = vshrl.u32 %v1629, 7
    %v1631 = vsub.s32 7, %v1630
    %v1632 = vrot.slane %v1599, %v1631
    %v1641 = vrcp.pop %v1604
    %v1642 = vmul.f32 %v1516, %v1641
    %v1643 = vrcp.pop %v1608
    %v1644 = vmul.f32 %v1517, %v1643
    %v1645 = vrcp.pop %v1612
    %v1646 = vmul.f32 %v1518, %v1645
    %v1647 = vrcp.pop %v1616
    %v1648 = vmul.f32 %v1519, %v1647
    %v1649 = vrcp.pop %v1620
    %v1650 = vmul.f32 %v1520, %v1649
    %v1651 = vrcp.pop %v1624
    %v1652 = vmul.f32 %v1521, %v1651
    %v1653 = vrcp.pop %v1628
    %v1654 = vmul.f32 %v1522, %v1653
    %v1655 = vrcp.pop %v1632
    %v1656 = vmul.f32 %v1523, %v1655
    %1665 = vset.pattern.permute.xlu0 0
    %1666 = vperm.xlu0 %1665, %v1642
    %v1667 = vpop.permute.xlu0 %1666
    %1668 = vset.pattern.permute.xlu0 0
    %1669 = vperm.xlu0 %1668, %v1644
    %v1670 = vpop.permute.xlu0 %1669
    %1671 = vset.pattern.permute.xlu0 0
    %1672 = vperm.xlu0 %1671, %v1646
    %v1673 = vpop.permute.xlu0 %1672
    %1674 = vset.pattern.permute.xlu0 0
    %1675 = vperm.xlu0 %1674, %v1648
    %v1676 = vpop.permute.xlu0 %1675
    %1677 = vset.pattern.permute.xlu0 0
    %1678 = vperm.xlu0 %1677, %v1650
    %v1679 = vpop.permute.xlu0 %1678
    %1680 = vset.pattern.permute.xlu0 0
    %1681 = vperm.xlu0 %1680, %v1652
    %v1682 = vpop.permute.xlu0 %1681
    %1683 = vset.pattern.permute.xlu0 0
    %1684 = vperm.xlu0 %1683, %v1654
    %v1685 = vpop.permute.xlu0 %1684
    %1686 = vset.pattern.permute.xlu0 0
    %1687 = vperm.xlu0 %1686, %v1656
    %v1688 = vpop.permute.xlu0 %1687
    %v1689 = vlaneseq
    %v1690 = vshrl.u32 %v1689, 7
    %v1691 = vsub.s32 %v842, %v1690
    %v1692 = vrot.slane %v1667, %v1691
    %v1693 = vlaneseq
    %v1694 = vshrl.u32 %v1693, 7
    %v1695 = vsub.s32 %v842, %v1694
    %v1696 = vrot.slane %v1670, %v1695
    %v1697 = vlaneseq
    %v1698 = vshrl.u32 %v1697, 7
    %v1699 = vsub.s32 %v842, %v1698
    %v1700 = vrot.slane %v1673, %v1699
    %v1701 = vlaneseq
    %v1702 = vshrl.u32 %v1701, 7
    %v1703 = vsub.s32 %v842, %v1702
    %v1704 = vrot.slane %v1676, %v1703
    %v1705 = vlaneseq
    %v1706 = vshrl.u32 %v1705, 7
    %v1707 = vsub.s32 %v842, %v1706
    %v1708 = vrot.slane %v1679, %v1707
    %v1709 = vlaneseq
    %v1710 = vshrl.u32 %v1709, 7
    %v1711 = vsub.s32 %v842, %v1710
    %v1712 = vrot.slane %v1682, %v1711
    %v1713 = vlaneseq
    %v1714 = vshrl.u32 %v1713, 7
    %v1715 = vsub.s32 %v842, %v1714
    %v1716 = vrot.slane %v1685, %v1715
    %v1717 = vlaneseq
    %v1718 = vshrl.u32 %v1717, 7
    %v1719 = vsub.s32 %v842, %v1718
    %v1720 = vrot.slane %v1688, %v1719
    %v1721 = vsel %vm875, %v1696, %v1692
    %v1722 = vsel %vm877, %v1700, %v1721
    %v1723 = vsel %vm879, %v1704, %v1722
    %v1724 = vsel %vm881, %v1708, %v1723
    %v1725 = vsel %vm883, %v1712, %v1724
    %v1726 = vsel %vm885, %v1716, %v1725
    %v1727 = vsel %vm887, %v1720, %v1726
    %1729 = vmatprep.subr.mxu0 0.0
    %1730 = vmatpush1.msra.mxu0 %v1727
    %1731 = vmatprep.subr.mxu0 0.0
    %1732 = vmatpush1.msra.mxu0 0.0
    %1733 = vmatprep.subr.mxu0 0.0
    %1734 = vmatpush1.msra.mxu0 0.0
    %1735 = vmatprep.subr.mxu0 0.0
    %1736 = vmatpush1.msra.mxu0 0.0
    %1737 = vmatprep.subr.mxu0 0.0
    %1738 = vmatpush1.msra.mxu0 0.0
    %1739 = vmatprep.subr.mxu0 0.0
    %1740 = vmatpush1.msra.mxu0 0.0
    %1741 = vmatprep.subr.mxu0 0.0
    %1742 = vmatpush1.msra.mxu0 0.0
    %1743 = vmatprep.subr.mxu0 0.0
    %1744 = vmatpush1.msra.mxu0 0.0
    %1745 = vmatprep.subr.mxu0 0.0
    %1746 = vmatpush1.msra.mxu0 0.0
    %1747 = vmatprep.subr.mxu0 0.0
    %1748 = vmatpush1.msra.mxu0 0.0
    %1749 = vmatprep.subr.mxu0 0.0
    %1750 = vmatpush1.msra.mxu0 0.0
    %1751 = vmatprep.subr.mxu0 0.0
    %1752 = vmatpush1.msra.mxu0 0.0
    %1753 = vmatprep.subr.mxu0 0.0
    %1754 = vmatpush1.msra.mxu0 0.0
    %1755 = vmatprep.subr.mxu0 0.0
    %1756 = vmatpush1.msra.mxu0 0.0
    %1757 = vmatprep.subr.mxu0 0.0
    %1758 = vmatpush1.msra.mxu0 0.0
    %1759 = vmatprep.subr.mxu0 0.0
    %1760 = vmatpush1.msra.mxu0 0.0
    %1761 = vmatprep.subr.mxu0 0.0
    %1762 = vmatpush1.msra.mxu0 0.0
    %1763 = vmatprep.subr.mxu0 0.0
    %1764 = vmatpush1.msra.mxu0 0.0
    %1765 = vmatprep.subr.mxu0 0.0
    %1766 = vmatpush1.msra.mxu0 0.0
    %1767 = vmatprep.subr.mxu0 0.0
    %1768 = vmatpush1.msra.mxu0 0.0
    %1769 = vmatprep.subr.mxu0 0.0
    %1770 = vmatpush1.msra.mxu0 0.0
    %1771 = vmatprep.subr.mxu0 0.0
    %1772 = vmatpush1.msra.mxu0 0.0
    %1773 = vmatprep.subr.mxu0 0.0
    %1774 = vmatpush1.msra.mxu0 0.0
    %1775 = vmatprep.subr.mxu0 0.0
    %1776 = vmatpush1.msra.mxu0 0.0
    %1777 = vmatprep.subr.mxu0 0.0
    %1778 = vmatpush1.msra.mxu0 0.0
    %1779 = vmatprep.subr.mxu0 0.0
    %1780 = vmatpush1.msra.mxu0 0.0
    %1781 = vmatprep.subr.mxu0 0.0
    %1782 = vmatpush1.msra.mxu0 0.0
    %1783 = vmatprep.subr.mxu0 0.0
    %1784 = vmatpush1.msra.mxu0 0.0
    %1785 = vmatprep.subr.mxu0 0.0
    %1786 = vmatpush1.msra.mxu0 0.0
    %1787 = vmatprep.subr.mxu0 0.0
    %1788 = vmatpush1.msra.mxu0 0.0
    %1789 = vmatprep.subr.mxu0 0.0
    %1790 = vmatpush1.msra.mxu0 0.0
    %1791 = vmatprep.subr.mxu0 0.0
    %1792 = vmatpush1.msra.mxu0 0.0
    %1793 = vmatprep.mubr.f32.mxu0 0.0
    %1794 = vmatmul.mubr.f32.gmra.mrb[0].mxu0 %v610
    %v1795 = vpop.f32.mrb[0].mxu0
    %v1796 = vadd.f32 0.0, %v1795
    %v1797 = vpop.f32.mrb[0].mxu0
    %1798 = vdwg.mxu0
    %v1799 = vld [vmem:[%s10] sm:$0xff]
    %v1800 = vmul.f32 %v1796, %v1799
    %v1801 = vsel %vm1381, %v1800, 0.0
    %1802 = vadd.xlane.f32.xlu0 %v1801
    %v1803 = vpop.xlane.xlu0 %1802
    %v1805 = vlaneseq
    %v1806 = vshrl.u32 %v1805, 7
    %v1807 = vsub.s32 0, %v1806
    %v1808 = vrot.slane %v1803, %v1807
    %v1809 = vlaneseq
    %v1810 = vshrl.u32 %v1809, 7
    %v1811 = vsub.s32 1, %v1810
    %v1812 = vrot.slane %v1803, %v1811
    %v1813 = vlaneseq
    %v1814 = vshrl.u32 %v1813, 7
    %v1815 = vsub.s32 2, %v1814
    %v1816 = vrot.slane %v1803, %v1815
    %v1817 = vlaneseq
    %v1818 = vshrl.u32 %v1817, 7
    %v1819 = vsub.s32 3, %v1818
    %v1820 = vrot.slane %v1803, %v1819
    %v1821 = vlaneseq
    %v1822 = vshrl.u32 %v1821, 7
    %v1823 = vsub.s32 4, %v1822
    %v1824 = vrot.slane %v1803, %v1823
    %v1825 = vlaneseq
    %v1826 = vshrl.u32 %v1825, 7
    %v1827 = vsub.s32 5, %v1826
    %v1828 = vrot.slane %v1803, %v1827
    %v1829 = vlaneseq
    %v1830 = vshrl.u32 %v1829, 7
    %v1831 = vsub.s32 6, %v1830
    %v1832 = vrot.slane %v1803, %v1831
    %v1833 = vlaneseq
    %v1834 = vshrl.u32 %v1833, 7
    %v1835 = vsub.s32 7, %v1834
    %v1836 = vrot.slane %v1803, %v1835
    %v1845 = vmul.f32 %v1150, %v1808
    %v1846 = vmul.f32 %v1152, %v1812
    %v1847 = vmul.f32 %v1154, %v1816
    %v1848 = vmul.f32 %v1156, %v1820
    %v1849 = vmul.f32 %v1158, %v1824
    %v1850 = vmul.f32 %v1160, %v1828
    %v1851 = vmul.f32 %v1162, %v1832
    %v1852 = vmul.f32 %v1164, %v1836
    %v1853 = vld [vmem:[%s11] sm:$0xff]
    %v1854 = vld [vmem:[%s11 + $0x8] sm:$0xff]
    %v1855 = vld [vmem:[%s11 + $0x10] sm:$0xff]
    %v1856 = vld [vmem:[%s11 + $0x18] sm:$0xff]
    %v1857 = vld [vmem:[%s11 + $0x20] sm:$0xff]
    %v1858 = vld [vmem:[%s11 + $0x28] sm:$0xff]
    %v1859 = vld [vmem:[%s11 + $0x30] sm:$0xff]
    %v1860 = vld [vmem:[%s11 + $0x38] sm:$0xff]
    %1862 = vset.pattern.permute.xlu0 0
    %1863 = vperm.xlu0 %1862, %v1845
    %v1864 = vpop.permute.xlu0 %1863
    %v1865 = vlaneseq
    %v1866 = vshrl.u32 %v1865, 7
    %v1867 = vsub.s32 %v842, %v1866
    %v1868 = vrot.slane %v1864, %v1867
    %v1869 = vsel %vm608, %v1868, 0
    %1871 = vmatprep.subr.mxu0 0.0
    %1872 = vmatpush1.msra.mxu0 %v1853
    %1873 = vmatprep.subr.mxu0 0.0
    %1874 = vmatpush1.msra.mxu0 0.0
    %1875 = vmatprep.subr.mxu0 0.0
    %1876 = vmatpush1.msra.mxu0 0.0
    %1877 = vmatprep.subr.mxu0 0.0
    %1878 = vmatpush1.msra.mxu0 0.0
    %1879 = vmatprep.subr.mxu0 0.0
    %1880 = vmatpush1.msra.mxu0 0.0
    %1881 = vmatprep.subr.mxu0 0.0
    %1882 = vmatpush1.msra.mxu0 0.0
    %1883 = vmatprep.subr.mxu0 0.0
    %1884 = vmatpush1.msra.mxu0 0.0
    %1885 = vmatprep.subr.mxu0 0.0
    %1886 = vmatpush1.msra.mxu0 0.0
    %1887 = vmatprep.subr.mxu0 0.0
    %1888 = vmatpush1.msra.mxu0 0.0
    %1889 = vmatprep.subr.mxu0 0.0
    %1890 = vmatpush1.msra.mxu0 0.0
    %1891 = vmatprep.subr.mxu0 0.0
    %1892 = vmatpush1.msra.mxu0 0.0
    %1893 = vmatprep.subr.mxu0 0.0
    %1894 = vmatpush1.msra.mxu0 0.0
    %1895 = vmatprep.subr.mxu0 0.0
    %1896 = vmatpush1.msra.mxu0 0.0
    %1897 = vmatprep.subr.mxu0 0.0
    %1898 = vmatpush1.msra.mxu0 0.0
    %1899 = vmatprep.subr.mxu0 0.0
    %1900 = vmatpush1.msra.mxu0 0.0
    %1901 = vmatprep.subr.mxu0 0.0
    %1902 = vmatpush1.msra.mxu0 0.0
    %1903 = vmatprep.subr.mxu0 0.0
    %1904 = vmatpush1.msra.mxu0 0.0
    %1905 = vmatprep.subr.mxu0 0.0
    %1906 = vmatpush1.msra.mxu0 0.0
    %1907 = vmatprep.subr.mxu0 0.0
    %1908 = vmatpush1.msra.mxu0 0.0
    %1909 = vmatprep.subr.mxu0 0.0
    %1910 = vmatpush1.msra.mxu0 0.0
    %1911 = vmatprep.subr.mxu0 0.0
    %1912 = vmatpush1.msra.mxu0 0.0
    %1913 = vmatprep.subr.mxu0 0.0
    %1914 = vmatpush1.msra.mxu0 0.0
    %1915 = vmatprep.subr.mxu0 0.0
    %1916 = vmatpush1.msra.mxu0 0.0
    %1917 = vmatprep.subr.mxu0 0.0
    %1918 = vmatpush1.msra.mxu0 0.0
    %1919 = vmatprep.subr.mxu0 0.0
    %1920 = vmatpush1.msra.mxu0 0.0
    %1921 = vmatprep.subr.mxu0 0.0
    %1922 = vmatpush1.msra.mxu0 0.0
    %1923 = vmatprep.subr.mxu0 0.0
    %1924 = vmatpush1.msra.mxu0 0.0
    %1925 = vmatprep.subr.mxu0 0.0
    %1926 = vmatpush1.msra.mxu0 0.0
    %1927 = vmatprep.subr.mxu0 0.0
    %1928 = vmatpush1.msra.mxu0 0.0
    %1929 = vmatprep.subr.mxu0 0.0
    %1930 = vmatpush1.msra.mxu0 0.0
    %1931 = vmatprep.subr.mxu0 0.0
    %1932 = vmatpush1.msra.mxu0 0.0
    %1933 = vmatprep.subr.mxu0 0.0
    %1934 = vmatpush1.msra.mxu0 0.0
    %1935 = vmatprep.mubr.f32.mxu0 0.0
    %1936 = vmatmul.mubr.f32.gmra.mrb[0].mxu0 %v1869
    %v1937 = vpop.f32.mrb[0].mxu0
    %v1938 = vadd.f32 0.0, %v1937
    %v1939 = vpop.f32.mrb[0].mxu0
    %1940 = vdwg.mxu0
    %1942 = vset.pattern.permute.xlu0 0
    %1943 = vperm.xlu0 %1942, %v1846
    %v1944 = vpop.permute.xlu0 %1943
    %v1945 = vlaneseq
    %v1946 = vshrl.u32 %v1945, 7
    %v1947 = vsub.s32 %v842, %v1946
    %v1948 = vrot.slane %v1944, %v1947
    %v1949 = vsel %vm608, %v1948, 0
    %1951 = vmatprep.subr.mxu0 0.0
    %1952 = vmatpush1.msra.mxu0 %v1854
    %1953 = vmatprep.subr.mxu0 0.0
    %1954 = vmatpush1.msra.mxu0 0.0
    %1955 = vmatprep.subr.mxu0 0.0
    %1956 = vmatpush1.msra.mxu0 0.0
    %1957 = vmatprep.subr.mxu0 0.0
    %1958 = vmatpush1.msra.mxu0 0.0
    %1959 = vmatprep.subr.mxu0 0.0
    %1960 = vmatpush1.msra.mxu0 0.0
    %1961 = vmatprep.subr.mxu0 0.0
    %1962 = vmatpush1.msra.mxu0 0.0
    %1963 = vmatprep.subr.mxu0 0.0
    %1964 = vmatpush1.msra.mxu0 0.0
    %1965 = vmatprep.subr.mxu0 0.0
    %1966 = vmatpush1.msra.mxu0 0.0
    %1967 = vmatprep.subr.mxu0 0.0
    %1968 = vmatpush1.msra.mxu0 0.0
    %1969 = vmatprep.subr.mxu0 0.0
    %1970 = vmatpush1.msra.mxu0 0.0
    %1971 = vmatprep.subr.mxu0 0.0
    %1972 = vmatpush1.msra.mxu0 0.0
    %1973 = vmatprep.subr.mxu0 0.0
    %1974 = vmatpush1.msra.mxu0 0.0
    %1975 = vmatprep.subr.mxu0 0.0
    %1976 = vmatpush1.msra.mxu0 0.0
    %1977 = vmatprep.subr.mxu0 0.0
    %1978 = vmatpush1.msra.mxu0 0.0
    %1979 = vmatprep.subr.mxu0 0.0
    %1980 = vmatpush1.msra.mxu0 0.0
    %1981 = vmatprep.subr.mxu0 0.0
    %1982 = vmatpush1.msra.mxu0 0.0
    %1983 = vmatprep.subr.mxu0 0.0
    %1984 = vmatpush1.msra.mxu0 0.0
    %1985 = vmatprep.subr.mxu0 0.0
    %1986 = vmatpush1.msra.mxu0 0.0
    %1987 = vmatprep.subr.mxu0 0.0
    %1988 = vmatpush1.msra.mxu0 0.0
    %1989 = vmatprep.subr.mxu0 0.0
    %1990 = vmatpush1.msra.mxu0 0.0
    %1991 = vmatprep.subr.mxu0 0.0
    %1992 = vmatpush1.msra.mxu0 0.0
    %1993 = vmatprep.subr.mxu0 0.0
    %1994 = vmatpush1.msra.mxu0 0.0
    %1995 = vmatprep.subr.mxu0 0.0
    %1996 = vmatpush1.msra.mxu0 0.0
    %1997 = vmatprep.subr.mxu0 0.0
    %1998 = vmatpush1.msra.mxu0 0.0
    %1999 = vmatprep.subr.mxu0 0.0
    %2000 = vmatpush1.msra.mxu0 0.0
    %2001 = vmatprep.subr.mxu0 0.0
    %2002 = vmatpush1.msra.mxu0 0.0
    %2003 = vmatprep.subr.mxu0 0.0
    %2004 = vmatpush1.msra.mxu0 0.0
    %2005 = vmatprep.subr.mxu0 0.0
    %2006 = vmatpush1.msra.mxu0 0.0
    %2007 = vmatprep.subr.mxu0 0.0
    %2008 = vmatpush1.msra.mxu0 0.0
    %2009 = vmatprep.subr.mxu0 0.0
    %2010 = vmatpush1.msra.mxu0 0.0
    %2011 = vmatprep.subr.mxu0 0.0
    %2012 = vmatpush1.msra.mxu0 0.0
    %2013 = vmatprep.subr.mxu0 0.0
    %2014 = vmatpush1.msra.mxu0 0.0
    %2015 = vmatprep.mubr.f32.mxu0 0.0
    %2016 = vmatmul.mubr.f32.gmra.mrb[0].mxu0 %v1949
    %v2017 = vpop.f32.mrb[0].mxu0
    %v2018 = vadd.f32 0.0, %v2017
    %v2019 = vpop.f32.mrb[0].mxu0
    %2020 = vdwg.mxu0
    %2022 = vset.pattern.permute.xlu0 0
    %2023 = vperm.xlu0 %2022, %v1847
    %v2024 = vpop.permute.xlu0 %2023
    %v2025 = vlaneseq
    %v2026 = vshrl.u32 %v2025, 7
    %v2027 = vsub.s32 %v842, %v2026
    %v2028 = vrot.slane %v2024, %v2027
    %v2029 = vsel %vm608, %v2028, 0
    %2031 = vmatprep.subr.mxu0 0.0
    %2032 = vmatpush1.msra.mxu0 %v1855
    %2033 = vmatprep.subr.mxu0 0.0
    %2034 = vmatpush1.msra.mxu0 0.0
    %2035 = vmatprep.subr.mxu0 0.0
    %2036 = vmatpush1.msra.mxu0 0.0
    %2037 = vmatprep.subr.mxu0 0.0
    %2038 = vmatpush1.msra.mxu0 0.0
    %2039 = vmatprep.subr.mxu0 0.0
    %2040 = vmatpush1.msra.mxu0 0.0
    %2041 = vmatprep.subr.mxu0 0.0
    %2042 = vmatpush1.msra.mxu0 0.0
    %2043 = vmatprep.subr.mxu0 0.0
    %2044 = vmatpush1.msra.mxu0 0.0
    %2045 = vmatprep.subr.mxu0 0.0
    %2046 = vmatpush1.msra.mxu0 0.0
    %2047 = vmatprep.subr.mxu0 0.0
    %2048 = vmatpush1.msra.mxu0 0.0
    %2049 = vmatprep.subr.mxu0 0.0
    %2050 = vmatpush1.msra.mxu0 0.0
    %2051 = vmatprep.subr.mxu0 0.0
    %2052 = vmatpush1.msra.mxu0 0.0
    %2053 = vmatprep.subr.mxu0 0.0
    %2054 = vmatpush1.msra.mxu0 0.0
    %2055 = vmatprep.subr.mxu0 0.0
    %2056 = vmatpush1.msra.mxu0 0.0
    %2057 = vmatprep.subr.mxu0 0.0
    %2058 = vmatpush1.msra.mxu0 0.0
    %2059 = vmatprep.subr.mxu0 0.0
    %2060 = vmatpush1.msra.mxu0 0.0
    %2061 = vmatprep.subr.mxu0 0.0
    %2062 = vmatpush1.msra.mxu0 0.0
    %2063 = vmatprep.subr.mxu0 0.0
    %2064 = vmatpush1.msra.mxu0 0.0
    %2065 = vmatprep.subr.mxu0 0.0
    %2066 = vmatpush1.msra.mxu0 0.0
    %2067 = vmatprep.subr.mxu0 0.0
    %2068 = vmatpush1.msra.mxu0 0.0
    %2069 = vmatprep.subr.mxu0 0.0
    %2070 = vmatpush1.msra.mxu0 0.0
    %2071 = vmatprep.subr.mxu0 0.0
    %2072 = vmatpush1.msra.mxu0 0.0
    %2073 = vmatprep.subr.mxu0 0.0
    %2074 = vmatpush1.msra.mxu0 0.0
    %2075 = vmatprep.subr.mxu0 0.0
    %2076 = vmatpush1.msra.mxu0 0.0
    %2077 = vmatprep.subr.mxu0 0.0
    %2078 = vmatpush1.msra.mxu0 0.0
    %2079 = vmatprep.subr.mxu0 0.0
    %2080 = vmatpush1.msra.mxu0 0.0
    %2081 = vmatprep.subr.mxu0 0.0
    %2082 = vmatpush1.msra.mxu0 0.0
    %2083 = vmatprep.subr.mxu0 0.0
    %2084 = vmatpush1.msra.mxu0 0.0
    %2085 = vmatprep.subr.mxu0 0.0
    %2086 = vmatpush1.msra.mxu0 0.0
    %2087 = vmatprep.subr.mxu0 0.0
    %2088 = vmatpush1.msra.mxu0 0.0
    %2089 = vmatprep.subr.mxu0 0.0
    %2090 = vmatpush1.msra.mxu0 0.0
    %2091 = vmatprep.subr.mxu0 0.0
    %2092 = vmatpush1.msra.mxu0 0.0
    %2093 = vmatprep.subr.mxu0 0.0
    %2094 = vmatpush1.msra.mxu0 0.0
    %2095 = vmatprep.mubr.f32.mxu0 0.0
    %2096 = vmatmul.mubr.f32.gmra.mrb[0].mxu0 %v2029
    %v2097 = vpop.f32.mrb[0].mxu0
    %v2098 = vadd.f32 0.0, %v2097
    %v2099 = vpop.f32.mrb[0].mxu0
    %2100 = vdwg.mxu0
    %2102 = vset.pattern.permute.xlu0 0
    %2103 = vperm.xlu0 %2102, %v1848
    %v2104 = vpop.permute.xlu0 %2103
    %v2105 = vlaneseq
    %v2106 = vshrl.u32 %v2105, 7
    %v2107 = vsub.s32 %v842, %v2106
    %v2108 = vrot.slane %v2104, %v2107
    %v2109 = vsel %vm608, %v2108, 0
    %2111 = vmatprep.subr.mxu0 0.0
    %2112 = vmatpush1.msra.mxu0 %v1856
    %2113 = vmatprep.subr.mxu0 0.0
    %2114 = vmatpush1.msra.mxu0 0.0
    %2115 = vmatprep.subr.mxu0 0.0
    %2116 = vmatpush1.msra.mxu0 0.0
    %2117 = vmatprep.subr.mxu0 0.0
    %2118 = vmatpush1.msra.mxu0 0.0
    %2119 = vmatprep.subr.mxu0 0.0
    %2120 = vmatpush1.msra.mxu0 0.0
    %2121 = vmatprep.subr.mxu0 0.0
    %2122 = vmatpush1.msra.mxu0 0.0
    %2123 = vmatprep.subr.mxu0 0.0
    %2124 = vmatpush1.msra.mxu0 0.0
    %2125 = vmatprep.subr.mxu0 0.0
    %2126 = vmatpush1.msra.mxu0 0.0
    %2127 = vmatprep.subr.mxu0 0.0
    %2128 = vmatpush1.msra.mxu0 0.0
    %2129 = vmatprep.subr.mxu0 0.0
    %2130 = vmatpush1.msra.mxu0 0.0
    %2131 = vmatprep.subr.mxu0 0.0
    %2132 = vmatpush1.msra.mxu0 0.0
    %2133 = vmatprep.subr.mxu0 0.0
    %2134 = vmatpush1.msra.mxu0 0.0
    %2135 = vmatprep.subr.mxu0 0.0
    %2136 = vmatpush1.msra.mxu0 0.0
    %2137 = vmatprep.subr.mxu0 0.0
    %2138 = vmatpush1.msra.mxu0 0.0
    %2139 = vmatprep.subr.mxu0 0.0
    %2140 = vmatpush1.msra.mxu0 0.0
    %2141 = vmatprep.subr.mxu0 0.0
    %2142 = vmatpush1.msra.mxu0 0.0
    %2143 = vmatprep.subr.mxu0 0.0
    %2144 = vmatpush1.msra.mxu0 0.0
    %2145 = vmatprep.subr.mxu0 0.0
    %2146 = vmatpush1.msra.mxu0 0.0
    %2147 = vmatprep.subr.mxu0 0.0
    %2148 = vmatpush1.msra.mxu0 0.0
    %2149 = vmatprep.subr.mxu0 0.0
    %2150 = vmatpush1.msra.mxu0 0.0
    %2151 = vmatprep.subr.mxu0 0.0
    %2152 = vmatpush1.msra.mxu0 0.0
    %2153 = vmatprep.subr.mxu0 0.0
    %2154 = vmatpush1.msra.mxu0 0.0
    %2155 = vmatprep.subr.mxu0 0.0
    %2156 = vmatpush1.msra.mxu0 0.0
    %2157 = vmatprep.subr.mxu0 0.0
    %2158 = vmatpush1.msra.mxu0 0.0
    %2159 = vmatprep.subr.mxu0 0.0
    %2160 = vmatpush1.msra.mxu0 0.0
    %2161 = vmatprep.subr.mxu0 0.0
    %2162 = vmatpush1.msra.mxu0 0.0
    %2163 = vmatprep.subr.mxu0 0.0
    %2164 = vmatpush1.msra.mxu0 0.0
    %2165 = vmatprep.subr.mxu0 0.0
    %2166 = vmatpush1.msra.mxu0 0.0
    %2167 = vmatprep.subr.mxu0 0.0
    %2168 = vmatpush1.msra.mxu0 0.0
    %2169 = vmatprep.subr.mxu0 0.0
    %2170 = vmatpush1.msra.mxu0 0.0
    %2171 = vmatprep.subr.mxu0 0.0
    %2172 = vmatpush1.msra.mxu0 0.0
    %2173 = vmatprep.subr.mxu0 0.0
    %2174 = vmatpush1.msra.mxu0 0.0
    %2175 = vmatprep.mubr.f32.mxu0 0.0
    %2176 = vmatmul.mubr.f32.gmra.mrb[0].mxu0 %v2109
    %v2177 = vpop.f32.mrb[0].mxu0
    %v2178 = vadd.f32 0.0, %v2177
    %v2179 = vpop.f32.mrb[0].mxu0
    %2180 = vdwg.mxu0
    %2182 = vset.pattern.permute.xlu0 0
    %2183 = vperm.xlu0 %2182, %v1849
    %v2184 = vpop.permute.xlu0 %2183
    %v2185 = vlaneseq
    %v2186 = vshrl.u32 %v2185, 7
    %v2187 = vsub.s32 %v842, %v2186
    %v2188 = vrot.slane %v2184, %v2187
    %v2189 = vsel %vm608, %v2188, 0
    %2191 = vmatprep.subr.mxu0 0.0
    %2192 = vmatpush1.msra.mxu0 %v1857
    %2193 = vmatprep.subr.mxu0 0.0
    %2194 = vmatpush1.msra.mxu0 0.0
    %2195 = vmatprep.subr.mxu0 0.0
    %2196 = vmatpush1.msra.mxu0 0.0
    %2197 = vmatprep.subr.mxu0 0.0
    %2198 = vmatpush1.msra.mxu0 0.0
    %2199 = vmatprep.subr.mxu0 0.0
    %2200 = vmatpush1.msra.mxu0 0.0
    %2201 = vmatprep.subr.mxu0 0.0
    %2202 = vmatpush1.msra.mxu0 0.0
    %2203 = vmatprep.subr.mxu0 0.0
    %2204 = vmatpush1.msra.mxu0 0.0
    %2205 = vmatprep.subr.mxu0 0.0
    %2206 = vmatpush1.msra.mxu0 0.0
    %2207 = vmatprep.subr.mxu0 0.0
    %2208 = vmatpush1.msra.mxu0 0.0
    %2209 = vmatprep.subr.mxu0 0.0
    %2210 = vmatpush1.msra.mxu0 0.0
    %2211 = vmatprep.subr.mxu0 0.0
    %2212 = vmatpush1.msra.mxu0 0.0
    %2213 = vmatprep.subr.mxu0 0.0
    %2214 = vmatpush1.msra.mxu0 0.0
    %2215 = vmatprep.subr.mxu0 0.0
    %2216 = vmatpush1.msra.mxu0 0.0
    %2217 = vmatprep.subr.mxu0 0.0
    %2218 = vmatpush1.msra.mxu0 0.0
    %2219 = vmatprep.subr.mxu0 0.0
    %2220 = vmatpush1.msra.mxu0 0.0
    %2221 = vmatprep.subr.mxu0 0.0
    %2222 = vmatpush1.msra.mxu0 0.0
    %2223 = vmatprep.subr.mxu0 0.0
    %2224 = vmatpush1.msra.mxu0 0.0
    %2225 = vmatprep.subr.mxu0 0.0
    %2226 = vmatpush1.msra.mxu0 0.0
    %2227 = vmatprep.subr.mxu0 0.0
    %2228 = vmatpush1.msra.mxu0 0.0
    %2229 = vmatprep.subr.mxu0 0.0
    %2230 = vmatpush1.msra.mxu0 0.0
    %2231 = vmatprep.subr.mxu0 0.0
    %2232 = vmatpush1.msra.mxu0 0.0
    %2233 = vmatprep.subr.mxu0 0.0
    %2234 = vmatpush1.msra.mxu0 0.0
    %2235 = vmatprep.subr.mxu0 0.0
    %2236 = vmatpush1.msra.mxu0 0.0
    %2237 = vmatprep.subr.mxu0 0.0
    %2238 = vmatpush1.msra.mxu0 0.0
    %2239 = vmatprep.subr.mxu0 0.0
    %2240 = vmatpush1.msra.mxu0 0.0
    %2241 = vmatprep.subr.mxu0 0.0
    %2242 = vmatpush1.msra.mxu0 0.0
    %2243 = vmatprep.subr.mxu0 0.0
    %2244 = vmatpush1.msra.mxu0 0.0
    %2245 = vmatprep.subr.mxu0 0.0
    %2246 = vmatpush1.msra.mxu0 0.0
    %2247 = vmatprep.subr.mxu0 0.0
    %2248 = vmatpush1.msra.mxu0 0.0
    %2249 = vmatprep.subr.mxu0 0.0
    %2250 = vmatpush1.msra.mxu0 0.0
    %2251 = vmatprep.subr.mxu0 0.0
    %2252 = vmatpush1.msra.mxu0 0.0
    %2253 = vmatprep.subr.mxu0 0.0
    %2254 = vmatpush1.msra.mxu0 0.0
    %2255 = vmatprep.mubr.f32.mxu0 0.0
    %2256 = vmatmul.mubr.f32.gmra.mrb[0].mxu0 %v2189
    %v2257 = vpop.f32.mrb[0].mxu0
    %v2258 = vadd.f32 0.0, %v2257
    %v2259 = vpop.f32.mrb[0].mxu0
    %2260 = vdwg.mxu0
    %2262 = vset.pattern.permute.xlu0 0
    %2263 = vperm.xlu0 %2262, %v1850
    %v2264 = vpop.permute.xlu0 %2263
    %v2265 = vlaneseq
    %v2266 = vshrl.u32 %v2265, 7
    %v2267 = vsub.s32 %v842, %v2266
    %v2268 = vrot.slane %v2264, %v2267
    %v2269 = vsel %vm608, %v2268, 0
    %2271 = vmatprep.subr.mxu0 0.0
    %2272 = vmatpush1.msra.mxu0 %v1858
    %2273 = vmatprep.subr.mxu0 0.0
    %2274 = vmatpush1.msra.mxu0 0.0
    %2275 = vmatprep.subr.mxu0 0.0
    %2276 = vmatpush1.msra.mxu0 0.0
    %2277 = vmatprep.subr.mxu0 0.0
    %2278 = vmatpush1.msra.mxu0 0.0
    %2279 = vmatprep.subr.mxu0 0.0
    %2280 = vmatpush1.msra.mxu0 0.0
    %2281 = vmatprep.subr.mxu0 0.0
    %2282 = vmatpush1.msra.mxu0 0.0
    %2283 = vmatprep.subr.mxu0 0.0
    %2284 = vmatpush1.msra.mxu0 0.0
    %2285 = vmatprep.subr.mxu0 0.0
    %2286 = vmatpush1.msra.mxu0 0.0
    %2287 = vmatprep.subr.mxu0 0.0
    %2288 = vmatpush1.msra.mxu0 0.0
    %2289 = vmatprep.subr.mxu0 0.0
    %2290 = vmatpush1.msra.mxu0 0.0
    %2291 = vmatprep.subr.mxu0 0.0
    %2292 = vmatpush1.msra.mxu0 0.0
    %2293 = vmatprep.subr.mxu0 0.0
    %2294 = vmatpush1.msra.mxu0 0.0
    %2295 = vmatprep.subr.mxu0 0.0
    %2296 = vmatpush1.msra.mxu0 0.0
    %2297 = vmatprep.subr.mxu0 0.0
    %2298 = vmatpush1.msra.mxu0 0.0
    %2299 = vmatprep.subr.mxu0 0.0
    %2300 = vmatpush1.msra.mxu0 0.0
    %2301 = vmatprep.subr.mxu0 0.0
    %2302 = vmatpush1.msra.mxu0 0.0
    %2303 = vmatprep.subr.mxu0 0.0
    %2304 = vmatpush1.msra.mxu0 0.0
    %2305 = vmatprep.subr.mxu0 0.0
    %2306 = vmatpush1.msra.mxu0 0.0
    %2307 = vmatprep.subr.mxu0 0.0
    %2308 = vmatpush1.msra.mxu0 0.0
    %2309 = vmatprep.subr.mxu0 0.0
    %2310 = vmatpush1.msra.mxu0 0.0
    %2311 = vmatprep.subr.mxu0 0.0
    %2312 = vmatpush1.msra.mxu0 0.0
    %2313 = vmatprep.subr.mxu0 0.0
    %2314 = vmatpush1.msra.mxu0 0.0
    %2315 = vmatprep.subr.mxu0 0.0
    %2316 = vmatpush1.msra.mxu0 0.0
    %2317 = vmatprep.subr.mxu0 0.0
    %2318 = vmatpush1.msra.mxu0 0.0
    %2319 = vmatprep.subr.mxu0 0.0
    %2320 = vmatpush1.msra.mxu0 0.0
    %2321 = vmatprep.subr.mxu0 0.0
    %2322 = vmatpush1.msra.mxu0 0.0
    %2323 = vmatprep.subr.mxu0 0.0
    %2324 = vmatpush1.msra.mxu0 0.0
    %2325 = vmatprep.subr.mxu0 0.0
    %2326 = vmatpush1.msra.mxu0 0.0
    %2327 = vmatprep.subr.mxu0 0.0
    %2328 = vmatpush1.msra.mxu0 0.0
    %2329 = vmatprep.subr.mxu0 0.0
    %2330 = vmatpush1.msra.mxu0 0.0
    %2331 = vmatprep.subr.mxu0 0.0
    %2332 = vmatpush1.msra.mxu0 0.0
    %2333 = vmatprep.subr.mxu0 0.0
    %2334 = vmatpush1.msra.mxu0 0.0
    %2335 = vmatprep.mubr.f32.mxu0 0.0
    %2336 = vmatmul.mubr.f32.gmra.mrb[0].mxu0 %v2269
    %v2337 = vpop.f32.mrb[0].mxu0
    %v2338 = vadd.f32 0.0, %v2337
    %v2339 = vpop.f32.mrb[0].mxu0
    %2340 = vdwg.mxu0
    %2342 = vset.pattern.permute.xlu0 0
    %2343 = vperm.xlu0 %2342, %v1851
    %v2344 = vpop.permute.xlu0 %2343
    %v2345 = vlaneseq
    %v2346 = vshrl.u32 %v2345, 7
    %v2347 = vsub.s32 %v842, %v2346
    %v2348 = vrot.slane %v2344, %v2347
    %v2349 = vsel %vm608, %v2348, 0
    %2351 = vmatprep.subr.mxu0 0.0
    %2352 = vmatpush1.msra.mxu0 %v1859
    %2353 = vmatprep.subr.mxu0 0.0
    %2354 = vmatpush1.msra.mxu0 0.0
    %2355 = vmatprep.subr.mxu0 0.0
    %2356 = vmatpush1.msra.mxu0 0.0
    %2357 = vmatprep.subr.mxu0 0.0
    %2358 = vmatpush1.msra.mxu0 0.0
    %2359 = vmatprep.subr.mxu0 0.0
    %2360 = vmatpush1.msra.mxu0 0.0
    %2361 = vmatprep.subr.mxu0 0.0
    %2362 = vmatpush1.msra.mxu0 0.0
    %2363 = vmatprep.subr.mxu0 0.0
    %2364 = vmatpush1.msra.mxu0 0.0
    %2365 = vmatprep.subr.mxu0 0.0
    %2366 = vmatpush1.msra.mxu0 0.0
    %2367 = vmatprep.subr.mxu0 0.0
    %2368 = vmatpush1.msra.mxu0 0.0
    %2369 = vmatprep.subr.mxu0 0.0
    %2370 = vmatpush1.msra.mxu0 0.0
    %2371 = vmatprep.subr.mxu0 0.0
    %2372 = vmatpush1.msra.mxu0 0.0
    %2373 = vmatprep.subr.mxu0 0.0
    %2374 = vmatpush1.msra.mxu0 0.0
    %2375 = vmatprep.subr.mxu0 0.0
    %2376 = vmatpush1.msra.mxu0 0.0
    %2377 = vmatprep.subr.mxu0 0.0
    %2378 = vmatpush1.msra.mxu0 0.0
    %2379 = vmatprep.subr.mxu0 0.0
    %2380 = vmatpush1.msra.mxu0 0.0
    %2381 = vmatprep.subr.mxu0 0.0
    %2382 = vmatpush1.msra.mxu0 0.0
    %2383 = vmatprep.subr.mxu0 0.0
    %2384 = vmatpush1.msra.mxu0 0.0
    %2385 = vmatprep.subr.mxu0 0.0
    %2386 = vmatpush1.msra.mxu0 0.0
    %2387 = vmatprep.subr.mxu0 0.0
    %2388 = vmatpush1.msra.mxu0 0.0
    %2389 = vmatprep.subr.mxu0 0.0
    %2390 = vmatpush1.msra.mxu0 0.0
    %2391 = vmatprep.subr.mxu0 0.0
    %2392 = vmatpush1.msra.mxu0 0.0
    %2393 = vmatprep.subr.mxu0 0.0
    %2394 = vmatpush1.msra.mxu0 0.0
    %2395 = vmatprep.subr.mxu0 0.0
    %2396 = vmatpush1.msra.mxu0 0.0
    %2397 = vmatprep.subr.mxu0 0.0
    %2398 = vmatpush1.msra.mxu0 0.0
    %2399 = vmatprep.subr.mxu0 0.0
    %2400 = vmatpush1.msra.mxu0 0.0
    %2401 = vmatprep.subr.mxu0 0.0
    %2402 = vmatpush1.msra.mxu0 0.0
    %2403 = vmatprep.subr.mxu0 0.0
    %2404 = vmatpush1.msra.mxu0 0.0
    %2405 = vmatprep.subr.mxu0 0.0
    %2406 = vmatpush1.msra.mxu0 0.0
    %2407 = vmatprep.subr.mxu0 0.0
    %2408 = vmatpush1.msra.mxu0 0.0
    %2409 = vmatprep.subr.mxu0 0.0
    %2410 = vmatpush1.msra.mxu0 0.0
    %2411 = vmatprep.subr.mxu0 0.0
    %2412 = vmatpush1.msra.mxu0 0.0
    %2413 = vmatprep.subr.mxu0 0.0
    %2414 = vmatpush1.msra.mxu0 0.0
    %2415 = vmatprep.mubr.f32.mxu0 0.0
    %2416 = vmatmul.mubr.f32.gmra.mrb[0].mxu0 %v2349
    %v2417 = vpop.f32.mrb[0].mxu0
    %v2418 = vadd.f32 0.0, %v2417
    %v2419 = vpop.f32.mrb[0].mxu0
    %2420 = vdwg.mxu0
    %2422 = vset.pattern.permute.xlu0 0
    %2423 = vperm.xlu0 %2422, %v1852
    %v2424 = vpop.permute.xlu0 %2423
    %v2425 = vlaneseq
    %v2426 = vshrl.u32 %v2425, 7
    %v2427 = vsub.s32 %v842, %v2426
    %v2428 = vrot.slane %v2424, %v2427
    %v2429 = vsel %vm608, %v2428, 0
    %2431 = vmatprep.subr.mxu0 0.0
    %2432 = vmatpush1.msra.mxu0 %v1860
    %2433 = vmatprep.subr.mxu0 0.0
    %2434 = vmatpush1.msra.mxu0 0.0
    %2435 = vmatprep.subr.mxu0 0.0
    %2436 = vmatpush1.msra.mxu0 0.0
    %2437 = vmatprep.subr.mxu0 0.0
    %2438 = vmatpush1.msra.mxu0 0.0
    %2439 = vmatprep.subr.mxu0 0.0
    %2440 = vmatpush1.msra.mxu0 0.0
    %2441 = vmatprep.subr.mxu0 0.0
    %2442 = vmatpush1.msra.mxu0 0.0
    %2443 = vmatprep.subr.mxu0 0.0
    %2444 = vmatpush1.msra.mxu0 0.0
    %2445 = vmatprep.subr.mxu0 0.0
    %2446 = vmatpush1.msra.mxu0 0.0
    %2447 = vmatprep.subr.mxu0 0.0
    %2448 = vmatpush1.msra.mxu0 0.0
    %2449 = vmatprep.subr.mxu0 0.0
    %2450 = vmatpush1.msra.mxu0 0.0
    %2451 = vmatprep.subr.mxu0 0.0
    %2452 = vmatpush1.msra.mxu0 0.0
    %2453 = vmatprep.subr.mxu0 0.0
    %2454 = vmatpush1.msra.mxu0 0.0
    %2455 = vmatprep.subr.mxu0 0.0
    %2456 = vmatpush1.msra.mxu0 0.0
    %2457 = vmatprep.subr.mxu0 0.0
    %2458 = vmatpush1.msra.mxu0 0.0
    %2459 = vmatprep.subr.mxu0 0.0
    %2460 = vmatpush1.msra.mxu0 0.0
    %2461 = vmatprep.subr.mxu0 0.0
    %2462 = vmatpush1.msra.mxu0 0.0
    %2463 = vmatprep.subr.mxu0 0.0
    %2464 = vmatpush1.msra.mxu0 0.0
    %2465 = vmatprep.subr.mxu0 0.0
    %2466 = vmatpush1.msra.mxu0 0.0
    %2467 = vmatprep.subr.mxu0 0.0
    %2468 = vmatpush1.msra.mxu0 0.0
    %2469 = vmatprep.subr.mxu0 0.0
    %2470 = vmatpush1.msra.mxu0 0.0
    %2471 = vmatprep.subr.mxu0 0.0
    %2472 = vmatpush1.msra.mxu0 0.0
    %2473 = vmatprep.subr.mxu0 0.0
    %2474 = vmatpush1.msra.mxu0 0.0
    %2475 = vmatprep.subr.mxu0 0.0
    %2476 = vmatpush1.msra.mxu0 0.0
    %2477 = vmatprep.subr.mxu0 0.0
    %2478 = vmatpush1.msra.mxu0 0.0
    %2479 = vmatprep.subr.mxu0 0.0
    %2480 = vmatpush1.msra.mxu0 0.0
    %2481 = vmatprep.subr.mxu0 0.0
    %2482 = vmatpush1.msra.mxu0 0.0
    %2483 = vmatprep.subr.mxu0 0.0
    %2484 = vmatpush1.msra.mxu0 0.0
    %2485 = vmatprep.subr.mxu0 0.0
    %2486 = vmatpush1.msra.mxu0 0.0
    %2487 = vmatprep.subr.mxu0 0.0
    %2488 = vmatpush1.msra.mxu0 0.0
    %2489 = vmatprep.subr.mxu0 0.0
    %2490 = vmatpush1.msra.mxu0 0.0
    %2491 = vmatprep.subr.mxu0 0.0
    %2492 = vmatpush1.msra.mxu0 0.0
    %2493 = vmatprep.subr.mxu0 0.0
    %2494 = vmatpush1.msra.mxu0 0.0
    %2495 = vmatprep.mubr.f32.mxu0 0.0
    %2496 = vmatmul.mubr.f32.gmra.mrb[0].mxu0 %v2429
    %v2497 = vpop.f32.mrb[0].mxu0
    %v2498 = vadd.f32 0.0, %v2497
    %v2499 = vpop.f32.mrb[0].mxu0
    %2500 = vdwg.mxu0
    %v2501 = vld [vmem:[#allocation12] sm:$0xff]
    %v2510 = vrot.slane %v2018, 7
    %v2511 = vsel %vm875, %v2510, %v1938
    %v2512 = vrot.slane %v2098, 6
    %v2513 = vsel %vm877, %v2512, %v2511
    %v2514 = vrot.slane %v2178, 5
    %v2515 = vsel %vm879, %v2514, %v2513
    %v2516 = vrot.slane %v2258, 4
    %v2517 = vsel %vm881, %v2516, %v2515
    %v2518 = vrot.slane %v2338, 3
    %v2519 = vsel %vm883, %v2518, %v2517
    %v2520 = vrot.slane %v2418, 2
    %v2521 = vsel %vm885, %v2520, %v2519
    %v2522 = vrot.slane %v2498, 1
    %v2523 = vsel %vm887, %v2522, %v2521
    %v2526 = vsel %vm608, %v2501, 0
    %2528 = vmatprep.subr.mxu0 0.0
    %2529 = vmatpush1.msra.mxu0 %v2523
    %2530 = vmatprep.subr.mxu0 0.0
    %2531 = vmatpush1.msra.mxu0 0.0
    %2532 = vmatprep.subr.mxu0 0.0
    %2533 = vmatpush1.msra.mxu0 0.0
    %2534 = vmatprep.subr.mxu0 0.0
    %2535 = vmatpush1.msra.mxu0 0.0
    %2536 = vmatprep.subr.mxu0 0.0
    %2537 = vmatpush1.msra.mxu0 0.0
    %2538 = vmatprep.subr.mxu0 0.0
    %2539 = vmatpush1.msra.mxu0 0.0
    %2540 = vmatprep.subr.mxu0 0.0
    %2541 = vmatpush1.msra.mxu0 0.0
    %2542 = vmatprep.subr.mxu0 0.0
    %2543 = vmatpush1.msra.mxu0 0.0
    %2544 = vmatprep.subr.mxu0 0.0
    %2545 = vmatpush1.msra.mxu0 0.0
    %2546 = vmatprep.subr.mxu0 0.0
    %2547 = vmatpush1.msra.mxu0 0.0
    %2548 = vmatprep.subr.mxu0 0.0
    %2549 = vmatpush1.msra.mxu0 0.0
    %2550 = vmatprep.subr.mxu0 0.0
    %2551 = vmatpush1.msra.mxu0 0.0
    %2552 = vmatprep.subr.mxu0 0.0
    %2553 = vmatpush1.msra.mxu0 0.0
    %2554 = vmatprep.subr.mxu0 0.0
    %2555 = vmatpush1.msra.mxu0 0.0
    %2556 = vmatprep.subr.mxu0 0.0
    %2557 = vmatpush1.msra.mxu0 0.0
    %2558 = vmatprep.subr.mxu0 0.0
    %2559 = vmatpush1.msra.mxu0 0.0
    %2560 = vmatprep.subr.mxu0 0.0
    %2561 = vmatpush1.msra.mxu0 0.0
    %2562 = vmatprep.subr.mxu0 0.0
    %2563 = vmatpush1.msra.mxu0 0.0
    %2564 = vmatprep.subr.mxu0 0.0
    %2565 = vmatpush1.msra.mxu0 0.0
    %2566 = vmatprep.subr.mxu0 0.0
    %2567 = vmatpush1.msra.mxu0 0.0
    %2568 = vmatprep.subr.mxu0 0.0
    %2569 = vmatpush1.msra.mxu0 0.0
    %2570 = vmatprep.subr.mxu0 0.0
    %2571 = vmatpush1.msra.mxu0 0.0
    %2572 = vmatprep.subr.mxu0 0.0
    %2573 = vmatpush1.msra.mxu0 0.0
    %2574 = vmatprep.subr.mxu0 0.0
    %2575 = vmatpush1.msra.mxu0 0.0
    %2576 = vmatprep.subr.mxu0 0.0
    %2577 = vmatpush1.msra.mxu0 0.0
    %2578 = vmatprep.subr.mxu0 0.0
    %2579 = vmatpush1.msra.mxu0 0.0
    %2580 = vmatprep.subr.mxu0 0.0
    %2581 = vmatpush1.msra.mxu0 0.0
    %2582 = vmatprep.subr.mxu0 0.0
    %2583 = vmatpush1.msra.mxu0 0.0
    %2584 = vmatprep.subr.mxu0 0.0
    %2585 = vmatpush1.msra.mxu0 0.0
    %2586 = vmatprep.subr.mxu0 0.0
    %2587 = vmatpush1.msra.mxu0 0.0
    %2588 = vmatprep.subr.mxu0 0.0
    %2589 = vmatpush1.msra.mxu0 0.0
    %2590 = vmatprep.subr.mxu0 0.0
    %2591 = vmatpush1.msra.mxu0 0.0
    %2592 = vmatprep.mubr.f32.mxu0 0.0
    %2593 = vmatmul.mubr.f32.gmra.mrb[0].mxu0 %v2526
    %v2594 = vpop.f32.mrb[0].mxu0
    %v2595 = vadd.f32 0.0, %v2594
    %v2596 = vpop.f32.mrb[0].mxu0
    %2597 = vdwg.mxu0
    %v2598 = vld [vmem:[%s3] sm:$0xff]
    %v2599 = vld [vmem:[%s3 + $0x8] sm:$0xff]
    %v2600 = vld [vmem:[%s3 + $0x10] sm:$0xff]
    %v2601 = vld [vmem:[%s3 + $0x18] sm:$0xff]
    %v2602 = vld [vmem:[%s3 + $0x20] sm:$0xff]
    %v2603 = vld [vmem:[%s3 + $0x28] sm:$0xff]
    %v2604 = vld [vmem:[%s3 + $0x30] sm:$0xff]
    %v2605 = vld [vmem:[%s3 + $0x38] sm:$0xff]
    %2607 = vset.pattern.permute.xlu0 0
    %2608 = vperm.xlu0 %2607, %v1150
    %v2609 = vpop.permute.xlu0 %2608
    %v2610 = vlaneseq
    %v2611 = vshrl.u32 %v2610, 7
    %v2612 = vsub.s32 %v842, %v2611
    %v2613 = vrot.slane %v2609, %v2612
    %v2614 = vsel %vm608, %v2613, 0
    %2616 = vmatprep.subr.mxu0 0.0
    %2617 = vmatpush1.msra.mxu0 %v2598
    %2618 = vmatprep.subr.mxu0 0.0
    %2619 = vmatpush1.msra.mxu0 0.0
    %2620 = vmatprep.subr.mxu0 0.0
    %2621 = vmatpush1.msra.mxu0 0.0
    %2622 = vmatprep.subr.mxu0 0.0
    %2623 = vmatpush1.msra.mxu0 0.0
    %2624 = vmatprep.subr.mxu0 0.0
    %2625 = vmatpush1.msra.mxu0 0.0
    %2626 = vmatprep.subr.mxu0 0.0
    %2627 = vmatpush1.msra.mxu0 0.0
    %2628 = vmatprep.subr.mxu0 0.0
    %2629 = vmatpush1.msra.mxu0 0.0
    %2630 = vmatprep.subr.mxu0 0.0
    %2631 = vmatpush1.msra.mxu0 0.0
    %2632 = vmatprep.subr.mxu0 0.0
    %2633 = vmatpush1.msra.mxu0 0.0
    %2634 = vmatprep.subr.mxu0 0.0
    %2635 = vmatpush1.msra.mxu0 0.0
    %2636 = vmatprep.subr.mxu0 0.0
    %2637 = vmatpush1.msra.mxu0 0.0
    %2638 = vmatprep.subr.mxu0 0.0
    %2639 = vmatpush1.msra.mxu0 0.0
    %2640 = vmatprep.subr.mxu0 0.0
    %2641 = vmatpush1.msra.mxu0 0.0
    %2642 = vmatprep.subr.mxu0 0.0
    %2643 = vmatpush1.msra.mxu0 0.0
    %2644 = vmatprep.subr.mxu0 0.0
    %2645 = vmatpush1.msra.mxu0 0.0
    %2646 = vmatprep.subr.mxu0 0.0
    %2647 = vmatpush1.msra.mxu0 0.0
    %2648 = vmatprep.subr.mxu0 0.0
    %2649 = vmatpush1.msra.mxu0 0.0
    %2650 = vmatprep.subr.mxu0 0.0
    %2651 = vmatpush1.msra.mxu0 0.0
    %2652 = vmatprep.subr.mxu0 0.0
    %2653 = vmatpush1.msra.mxu0 0.0
    %2654 = vmatprep.subr.mxu0 0.0
    %2655 = vmatpush1.msra.mxu0 0.0
    %2656 = vmatprep.subr.mxu0 0.0
    %2657 = vmatpush1.msra.mxu0 0.0
    %2658 = vmatprep.subr.mxu0 0.0
    %2659 = vmatpush1.msra.mxu0 0.0
    %2660 = vmatprep.subr.mxu0 0.0
    %2661 = vmatpush1.msra.mxu0 0.0
    %2662 = vmatprep.subr.mxu0 0.0
    %2663 = vmatpush1.msra.mxu0 0.0
    %2664 = vmatprep.subr.mxu0 0.0
    %2665 = vmatpush1.msra.mxu0 0.0
    %2666 = vmatprep.subr.mxu0 0.0
    %2667 = vmatpush1.msra.mxu0 0.0
    %2668 = vmatprep.subr.mxu0 0.0
    %2669 = vmatpush1.msra.mxu0 0.0
    %2670 = vmatprep.subr.mxu0 0.0
    %2671 = vmatpush1.msra.mxu0 0.0
    %2672 = vmatprep.subr.mxu0 0.0
    %2673 = vmatpush1.msra.mxu0 0.0
    %2674 = vmatprep.subr.mxu0 0.0
    %2675 = vmatpush1.msra.mxu0 0.0
    %2676 = vmatprep.subr.mxu0 0.0
    %2677 = vmatpush1.msra.mxu0 0.0
    %2678 = vmatprep.subr.mxu0 0.0
    %2679 = vmatpush1.msra.mxu0 0.0
    %2680 = vmatprep.mubr.f32.mxu0 0.0
    %2681 = vmatmul.mubr.f32.gmra.mrb[0].mxu0 %v2614
    %v2682 = vpop.f32.mrb[0].mxu0
    %v2683 = vadd.f32 0.0, %v2682
    %v2684 = vpop.f32.mrb[0].mxu0
    %2685 = vdwg.mxu0
    %2687 = vset.pattern.permute.xlu0 0
    %2688 = vperm.xlu0 %2687, %v1152
    %v2689 = vpop.permute.xlu0 %2688
    %v2690 = vlaneseq
    %v2691 = vshrl.u32 %v2690, 7
    %v2692 = vsub.s32 %v842, %v2691
    %v2693 = vrot.slane %v2689, %v2692
    %v2694 = vsel %vm608, %v2693, 0
    %2696 = vmatprep.subr.mxu0 0.0
    %2697 = vmatpush1.msra.mxu0 %v2599
    %2698 = vmatprep.subr.mxu0 0.0
    %2699 = vmatpush1.msra.mxu0 0.0
    %2700 = vmatprep.subr.mxu0 0.0
    %2701 = vmatpush1.msra.mxu0 0.0
    %2702 = vmatprep.subr.mxu0 0.0
    %2703 = vmatpush1.msra.mxu0 0.0
    %2704 = vmatprep.subr.mxu0 0.0
    %2705 = vmatpush1.msra.mxu0 0.0
    %2706 = vmatprep.subr.mxu0 0.0
    %2707 = vmatpush1.msra.mxu0 0.0
    %2708 = vmatprep.subr.mxu0 0.0
    %2709 = vmatpush1.msra.mxu0 0.0
    %2710 = vmatprep.subr.mxu0 0.0
    %2711 = vmatpush1.msra.mxu0 0.0
    %2712 = vmatprep.subr.mxu0 0.0
    %2713 = vmatpush1.msra.mxu0 0.0
    %2714 = vmatprep.subr.mxu0 0.0
    %2715 = vmatpush1.msra.mxu0 0.0
    %2716 = vmatprep.subr.mxu0 0.0
    %2717 = vmatpush1.msra.mxu0 0.0
    %2718 = vmatprep.subr.mxu0 0.0
    %2719 = vmatpush1.msra.mxu0 0.0
    %2720 = vmatprep.subr.mxu0 0.0
    %2721 = vmatpush1.msra.mxu0 0.0
    %2722 = vmatprep.subr.mxu0 0.0
    %2723 = vmatpush1.msra.mxu0 0.0
    %2724 = vmatprep.subr.mxu0 0.0
    %2725 = vmatpush1.msra.mxu0 0.0
    %2726 = vmatprep.subr.mxu0 0.0
    %2727 = vmatpush1.msra.mxu0 0.0
    %2728 = vmatprep.subr.mxu0 0.0
    %2729 = vmatpush1.msra.mxu0 0.0
    %2730 = vmatprep.subr.mxu0 0.0
    %2731 = vmatpush1.msra.mxu0 0.0
    %2732 = vmatprep.subr.mxu0 0.0
    %2733 = vmatpush1.msra.mxu0 0.0
    %2734 = vmatprep.subr.mxu0 0.0
    %2735 = vmatpush1.msra.mxu0 0.0
    %2736 = vmatprep.subr.mxu0 0.0
    %2737 = vmatpush1.msra.mxu0 0.0
    %2738 = vmatprep.subr.mxu0 0.0
    %2739 = vmatpush1.msra.mxu0 0.0
    %2740 = vmatprep.subr.mxu0 0.0
    %2741 = vmatpush1.msra.mxu0 0.0
    %2742 = vmatprep.subr.mxu0 0.0
    %2743 = vmatpush1.msra.mxu0 0.0
    %2744 = vmatprep.subr.mxu0 0.0
    %2745 = vmatpush1.msra.mxu0 0.0
    %2746 = vmatprep.subr.mxu0 0.0
    %2747 = vmatpush1.msra.mxu0 0.0
    %2748 = vmatprep.subr.mxu0 0.0
    %2749 = vmatpush1.msra.mxu0 0.0
    %2750 = vmatprep.subr.mxu0 0.0
    %2751 = vmatpush1.msra.mxu0 0.0
    %2752 = vmatprep.subr.mxu0 0.0
    %2753 = vmatpush1.msra.mxu0 0.0
    %2754 = vmatprep.subr.mxu0 0.0
    %2755 = vmatpush1.msra.mxu0 0.0
    %2756 = vmatprep.subr.mxu0 0.0
    %2757 = vmatpush1.msra.mxu0 0.0
    %2758 = vmatprep.subr.mxu0 0.0
    %2759 = vmatpush1.msra.mxu0 0.0
    %2760 = vmatprep.mubr.f32.mxu0 0.0
    %2761 = vmatmul.mubr.f32.gmra.mrb[0].mxu0 %v2694
    %v2762 = vpop.f32.mrb[0].mxu0
    %v2763 = vadd.f32 0.0, %v2762
    %v2764 = vpop.f32.mrb[0].mxu0
    %2765 = vdwg.mxu0
    %2767 = vset.pattern.permute.xlu0 0
    %2768 = vperm.xlu0 %2767, %v1154
    %v2769 = vpop.permute.xlu0 %2768
    %v2770 = vlaneseq
    %v2771 = vshrl.u32 %v2770, 7
    %v2772 = vsub.s32 %v842, %v2771
    %v2773 = vrot.slane %v2769, %v2772
    %v2774 = vsel %vm608, %v2773, 0
    %2776 = vmatprep.subr.mxu0 0.0
    %2777 = vmatpush1.msra.mxu0 %v2600
    %2778 = vmatprep.subr.mxu0 0.0
    %2779 = vmatpush1.msra.mxu0 0.0
    %2780 = vmatprep.subr.mxu0 0.0
    %2781 = vmatpush1.msra.mxu0 0.0
    %2782 = vmatprep.subr.mxu0 0.0
    %2783 = vmatpush1.msra.mxu0 0.0
    %2784 = vmatprep.subr.mxu0 0.0
    %2785 = vmatpush1.msra.mxu0 0.0
    %2786 = vmatprep.subr.mxu0 0.0
    %2787 = vmatpush1.msra.mxu0 0.0
    %2788 = vmatprep.subr.mxu0 0.0
    %2789 = vmatpush1.msra.mxu0 0.0
    %2790 = vmatprep.subr.mxu0 0.0
    %2791 = vmatpush1.msra.mxu0 0.0
    %2792 = vmatprep.subr.mxu0 0.0
    %2793 = vmatpush1.msra.mxu0 0.0
    %2794 = vmatprep.subr.mxu0 0.0
    %2795 = vmatpush1.msra.mxu0 0.0
    %2796 = vmatprep.subr.mxu0 0.0
    %2797 = vmatpush1.msra.mxu0 0.0
    %2798 = vmatprep.subr.mxu0 0.0
    %2799 = vmatpush1.msra.mxu0 0.0
    %2800 = vmatprep.subr.mxu0 0.0
    %2801 = vmatpush1.msra.mxu0 0.0
    %2802 = vmatprep.subr.mxu0 0.0
    %2803 = vmatpush1.msra.mxu0 0.0
    %2804 = vmatprep.subr.mxu0 0.0
    %2805 = vmatpush1.msra.mxu0 0.0
    %2806 = vmatprep.subr.mxu0 0.0
    %2807 = vmatpush1.msra.mxu0 0.0
    %2808 = vmatprep.subr.mxu0 0.0
    %2809 = vmatpush1.msra.mxu0 0.0
    %2810 = vmatprep.subr.mxu0 0.0
    %2811 = vmatpush1.msra.mxu0 0.0
    %2812 = vmatprep.subr.mxu0 0.0
    %2813 = vmatpush1.msra.mxu0 0.0
    %2814 = vmatprep.subr.mxu0 0.0
    %2815 = vmatpush1.msra.mxu0 0.0
    %2816 = vmatprep.subr.mxu0 0.0
    %2817 = vmatpush1.msra.mxu0 0.0
    %2818 = vmatprep.subr.mxu0 0.0
    %2819 = vmatpush1.msra.mxu0 0.0
    %2820 = vmatprep.subr.mxu0 0.0
    %2821 = vmatpush1.msra.mxu0 0.0
    %2822 = vmatprep.subr.mxu0 0.0
    %2823 = vmatpush1.msra.mxu0 0.0
    %2824 = vmatprep.subr.mxu0 0.0
    %2825 = vmatpush1.msra.mxu0 0.0
    %2826 = vmatprep.subr.mxu0 0.0
    %2827 = vmatpush1.msra.mxu0 0.0
    %2828 = vmatprep.subr.mxu0 0.0
    %2829 = vmatpush1.msra.mxu0 0.0
    %2830 = vmatprep.subr.mxu0 0.0
    %2831 = vmatpush1.msra.mxu0 0.0
    %2832 = vmatprep.subr.mxu0 0.0
    %2833 = vmatpush1.msra.mxu0 0.0
    %2834 = vmatprep.subr.mxu0 0.0
    %2835 = vmatpush1.msra.mxu0 0.0
    %2836 = vmatprep.subr.mxu0 0.0
    %2837 = vmatpush1.msra.mxu0 0.0
    %2838 = vmatprep.subr.mxu0 0.0
    %2839 = vmatpush1.msra.mxu0 0.0
    %2840 = vmatprep.mubr.f32.mxu0 0.0
    %2841 = vmatmul.mubr.f32.gmra.mrb[0].mxu0 %v2774
    %v2842 = vpop.f32.mrb[0].mxu0
    %v2843 = vadd.f32 0.0, %v2842
    %v2844 = vpop.f32.mrb[0].mxu0
    %2845 = vdwg.mxu0
    %2847 = vset.pattern.permute.xlu0 0
    %2848 = vperm.xlu0 %2847, %v1156
    %v2849 = vpop.permute.xlu0 %2848
    %v2850 = vlaneseq
    %v2851 = vshrl.u32 %v2850, 7
    %v2852 = vsub.s32 %v842, %v2851
    %v2853 = vrot.slane %v2849, %v2852
    %v2854 = vsel %vm608, %v2853, 0
    %2856 = vmatprep.subr.mxu0 0.0
    %2857 = vmatpush1.msra.mxu0 %v2601
    %2858 = vmatprep.subr.mxu0 0.0
    %2859 = vmatpush1.msra.mxu0 0.0
    %2860 = vmatprep.subr.mxu0 0.0
    %2861 = vmatpush1.msra.mxu0 0.0
    %2862 = vmatprep.subr.mxu0 0.0
    %2863 = vmatpush1.msra.mxu0 0.0
    %2864 = vmatprep.subr.mxu0 0.0
    %2865 = vmatpush1.msra.mxu0 0.0
    %2866 = vmatprep.subr.mxu0 0.0
    %2867 = vmatpush1.msra.mxu0 0.0
    %2868 = vmatprep.subr.mxu0 0.0
    %2869 = vmatpush1.msra.mxu0 0.0
    %2870 = vmatprep.subr.mxu0 0.0
    %2871 = vmatpush1.msra.mxu0 0.0
    %2872 = vmatprep.subr.mxu0 0.0
    %2873 = vmatpush1.msra.mxu0 0.0
    %2874 = vmatprep.subr.mxu0 0.0
    %2875 = vmatpush1.msra.mxu0 0.0
    %2876 = vmatprep.subr.mxu0 0.0
    %2877 = vmatpush1.msra.mxu0 0.0
    %2878 = vmatprep.subr.mxu0 0.0
    %2879 = vmatpush1.msra.mxu0 0.0
    %2880 = vmatprep.subr.mxu0 0.0
    %2881 = vmatpush1.msra.mxu0 0.0
    %2882 = vmatprep.subr.mxu0 0.0
    %2883 = vmatpush1.msra.mxu0 0.0
    %2884 = vmatprep.subr.mxu0 0.0
    %2885 = vmatpush1.msra.mxu0 0.0
    %2886 = vmatprep.subr.mxu0 0.0
    %2887 = vmatpush1.msra.mxu0 0.0
    %2888 = vmatprep.subr.mxu0 0.0
    %2889 = vmatpush1.msra.mxu0 0.0
    %2890 = vmatprep.subr.mxu0 0.0
    %2891 = vmatpush1.msra.mxu0 0.0
    %2892 = vmatprep.subr.mxu0 0.0
    %2893 = vmatpush1.msra.mxu0 0.0
    %2894 = vmatprep.subr.mxu0 0.0
    %2895 = vmatpush1.msra.mxu0 0.0
    %2896 = vmatprep.subr.mxu0 0.0
    %2897 = vmatpush1.msra.mxu0 0.0
    %2898 = vmatprep.subr.mxu0 0.0
    %2899 = vmatpush1.msra.mxu0 0.0
    %2900 = vmatprep.subr.mxu0 0.0
    %2901 = vmatpush1.msra.mxu0 0.0
    %2902 = vmatprep.subr.mxu0 0.0
    %2903 = vmatpush1.msra.mxu0 0.0
    %2904 = vmatprep.subr.mxu0 0.0
    %2905 = vmatpush1.msra.mxu0 0.0
    %2906 = vmatprep.subr.mxu0 0.0
    %2907 = vmatpush1.msra.mxu0 0.0
    %2908 = vmatprep.subr.mxu0 0.0
    %2909 = vmatpush1.msra.mxu0 0.0
    %2910 = vmatprep.subr.mxu0 0.0
    %2911 = vmatpush1.msra.mxu0 0.0
    %2912 = vmatprep.subr.mxu0 0.0
    %2913 = vmatpush1.msra.mxu0 0.0
    %2914 = vmatprep.subr.mxu0 0.0
    %2915 = vmatpush1.msra.mxu0 0.0
    %2916 = vmatprep.subr.mxu0 0.0
    %2917 = vmatpush1.msra.mxu0 0.0
    %2918 = vmatprep.subr.mxu0 0.0
    %2919 = vmatpush1.msra.mxu0 0.0
    %2920 = vmatprep.mubr.f32.mxu0 0.0
    %2921 = vmatmul.mubr.f32.gmra.mrb[0].mxu0 %v2854
    %v2922 = vpop.f32.mrb[0].mxu0
    %v2923 = vadd.f32 0.0, %v2922
    %v2924 = vpop.f32.mrb[0].mxu0
    %2925 = vdwg.mxu0
    %2927 = vset.pattern.permute.xlu0 0
    %2928 = vperm.xlu0 %2927, %v1158
    %v2929 = vpop.permute.xlu0 %2928
    %v2930 = vlaneseq
    %v2931 = vshrl.u32 %v2930, 7
    %v2932 = vsub.s32 %v842, %v2931
    %v2933 = vrot.slane %v2929, %v2932
    %v2934 = vsel %vm608, %v2933, 0
    %2936 = vmatprep.subr.mxu0 0.0
    %2937 = vmatpush1.msra.mxu0 %v2602
    %2938 = vmatprep.subr.mxu0 0.0
    %2939 = vmatpush1.msra.mxu0 0.0
    %2940 = vmatprep.subr.mxu0 0.0
    %2941 = vmatpush1.msra.mxu0 0.0
    %2942 = vmatprep.subr.mxu0 0.0
    %2943 = vmatpush1.msra.mxu0 0.0
    %2944 = vmatprep.subr.mxu0 0.0
    %2945 = vmatpush1.msra.mxu0 0.0
    %2946 = vmatprep.subr.mxu0 0.0
    %2947 = vmatpush1.msra.mxu0 0.0
    %2948 = vmatprep.subr.mxu0 0.0
    %2949 = vmatpush1.msra.mxu0 0.0
    %2950 = vmatprep.subr.mxu0 0.0
    %2951 = vmatpush1.msra.mxu0 0.0
    %2952 = vmatprep.subr.mxu0 0.0
    %2953 = vmatpush1.msra.mxu0 0.0
    %2954 = vmatprep.subr.mxu0 0.0
    %2955 = vmatpush1.msra.mxu0 0.0
    %2956 = vmatprep.subr.mxu0 0.0
    %2957 = vmatpush1.msra.mxu0 0.0
    %2958 = vmatprep.subr.mxu0 0.0
    %2959 = vmatpush1.msra.mxu0 0.0
    %2960 = vmatprep.subr.mxu0 0.0
    %2961 = vmatpush1.msra.mxu0 0.0
    %2962 = vmatprep.subr.mxu0 0.0
    %2963 = vmatpush1.msra.mxu0 0.0
    %2964 = vmatprep.subr.mxu0 0.0
    %2965 = vmatpush1.msra.mxu0 0.0
    %2966 = vmatprep.subr.mxu0 0.0
    %2967 = vmatpush1.msra.mxu0 0.0
    %2968 = vmatprep.subr.mxu0 0.0
    %2969 = vmatpush1.msra.mxu0 0.0
    %2970 = vmatprep.subr.mxu0 0.0
    %2971 = vmatpush1.msra.mxu0 0.0
    %2972 = vmatprep.subr.mxu0 0.0
    %2973 = vmatpush1.msra.mxu0 0.0
    %2974 = vmatprep.subr.mxu0 0.0
    %2975 = vmatpush1.msra.mxu0 0.0
    %2976 = vmatprep.subr.mxu0 0.0
    %2977 = vmatpush1.msra.mxu0 0.0
    %2978 = vmatprep.subr.mxu0 0.0
    %2979 = vmatpush1.msra.mxu0 0.0
    %2980 = vmatprep.subr.mxu0 0.0
    %2981 = vmatpush1.msra.mxu0 0.0
    %2982 = vmatprep.subr.mxu0 0.0
    %2983 = vmatpush1.msra.mxu0 0.0
    %2984 = vmatprep.subr.mxu0 0.0
    %2985 = vmatpush1.msra.mxu0 0.0
    %2986 = vmatprep.subr.mxu0 0.0
    %2987 = vmatpush1.msra.mxu0 0.0
    %2988 = vmatprep.subr.mxu0 0.0
    %2989 = vmatpush1.msra.mxu0 0.0
    %2990 = vmatprep.subr.mxu0 0.0
    %2991 = vmatpush1.msra.mxu0 0.0
    %2992 = vmatprep.subr.mxu0 0.0
    %2993 = vmatpush1.msra.mxu0 0.0
    %2994 = vmatprep.subr.mxu0 0.0
    %2995 = vmatpush1.msra.mxu0 0.0
    %2996 = vmatprep.subr.mxu0 0.0
    %2997 = vmatpush1.msra.mxu0 0.0
    %2998 = vmatprep.subr.mxu0 0.0
    %2999 = vmatpush1.msra.mxu0 0.0
    %3000 = vmatprep.mubr.f32.mxu0 0.0
    %3001 = vmatmul.mubr.f32.gmra.mrb[0].mxu0 %v2934
    %v3002 = vpop.f32.mrb[0].mxu0
    %v3003 = vadd.f32 0.0, %v3002
    %v3004 = vpop.f32.mrb[0].mxu0
    %3005 = vdwg.mxu0
    %3007 = vset.pattern.permute.xlu0 0
    %3008 = vperm.xlu0 %3007, %v1160
    %v3009 = vpop.permute.xlu0 %3008
    %v3010 = vlaneseq
    %v3011 = vshrl.u32 %v3010, 7
    %v3012 = vsub.s32 %v842, %v3011
    %v3013 = vrot.slane %v3009, %v3012
    %v3014 = vsel %vm608, %v3013, 0
    %3016 = vmatprep.subr.mxu0 0.0
    %3017 = vmatpush1.msra.mxu0 %v2603
    %3018 = vmatprep.subr.mxu0 0.0
    %3019 = vmatpush1.msra.mxu0 0.0
    %3020 = vmatprep.subr.mxu0 0.0
    %3021 = vmatpush1.msra.mxu0 0.0
    %3022 = vmatprep.subr.mxu0 0.0
    %3023 = vmatpush1.msra.mxu0 0.0
    %3024 = vmatprep.subr.mxu0 0.0
    %3025 = vmatpush1.msra.mxu0 0.0
    %3026 = vmatprep.subr.mxu0 0.0
    %3027 = vmatpush1.msra.mxu0 0.0
    %3028 = vmatprep.subr.mxu0 0.0
    %3029 = vmatpush1.msra.mxu0 0.0
    %3030 = vmatprep.subr.mxu0 0.0
    %3031 = vmatpush1.msra.mxu0 0.0
    %3032 = vmatprep.subr.mxu0 0.0
    %3033 = vmatpush1.msra.mxu0 0.0
    %3034 = vmatprep.subr.mxu0 0.0
    %3035 = vmatpush1.msra.mxu0 0.0
    %3036 = vmatprep.subr.mxu0 0.0
    %3037 = vmatpush1.msra.mxu0 0.0
    %3038 = vmatprep.subr.mxu0 0.0
    %3039 = vmatpush1.msra.mxu0 0.0
    %3040 = vmatprep.subr.mxu0 0.0
    %3041 = vmatpush1.msra.mxu0 0.0
    %3042 = vmatprep.subr.mxu0 0.0
    %3043 = vmatpush1.msra.mxu0 0.0
    %3044 = vmatprep.subr.mxu0 0.0
    %3045 = vmatpush1.msra.mxu0 0.0
    %3046 = vmatprep.subr.mxu0 0.0
    %3047 = vmatpush1.msra.mxu0 0.0
    %3048 = vmatprep.subr.mxu0 0.0
    %3049 = vmatpush1.msra.mxu0 0.0
    %3050 = vmatprep.subr.mxu0 0.0
    %3051 = vmatpush1.msra.mxu0 0.0
    %3052 = vmatprep.subr.mxu0 0.0
    %3053 = vmatpush1.msra.mxu0 0.0
    %3054 = vmatprep.subr.mxu0 0.0
    %3055 = vmatpush1.msra.mxu0 0.0
    %3056 = vmatprep.subr.mxu0 0.0
    %3057 = vmatpush1.msra.mxu0 0.0
    %3058 = vmatprep.subr.mxu0 0.0
    %3059 = vmatpush1.msra.mxu0 0.0
    %3060 = vmatprep.subr.mxu0 0.0
    %3061 = vmatpush1.msra.mxu0 0.0
    %3062 = vmatprep.subr.mxu0 0.0
    %3063 = vmatpush1.msra.mxu0 0.0
    %3064 = vmatprep.subr.mxu0 0.0
    %3065 = vmatpush1.msra.mxu0 0.0
    %3066 = vmatprep.subr.mxu0 0.0
    %3067 = vmatpush1.msra.mxu0 0.0
    %3068 = vmatprep.subr.mxu0 0.0
    %3069 = vmatpush1.msra.mxu0 0.0
    %3070 = vmatprep.subr.mxu0 0.0
    %3071 = vmatpush1.msra.mxu0 0.0
    %3072 = vmatprep.subr.mxu0 0.0
    %3073 = vmatpush1.msra.mxu0 0.0
    %3074 = vmatprep.subr.mxu0 0.0
    %3075 = vmatpush1.msra.mxu0 0.0
    %3076 = vmatprep.subr.mxu0 0.0
    %3077 = vmatpush1.msra.mxu0 0.0
    %3078 = vmatprep.subr.mxu0 0.0
    %3079 = vmatpush1.msra.mxu0 0.0
    %3080 = vmatprep.mubr.f32.mxu0 0.0
    %3081 = vmatmul.mubr.f32.gmra.mrb[0].mxu0 %v3014
    %v3082 = vpop.f32.mrb[0].mxu0
    %v3083 = vadd.f32 0.0, %v3082
    %v3084 = vpop.f32.mrb[0].mxu0
    %3085 = vdwg.mxu0
    %3087 = vset.pattern.permute.xlu0 0
    %3088 = vperm.xlu0 %3087, %v1162
    %v3089 = vpop.permute.xlu0 %3088
    %v3090 = vlaneseq
    %v3091 = vshrl.u32 %v3090, 7
    %v3092 = vsub.s32 %v842, %v3091
    %v3093 = vrot.slane %v3089, %v3092
    %v3094 = vsel %vm608, %v3093, 0
    %3096 = vmatprep.subr.mxu0 0.0
    %3097 = vmatpush1.msra.mxu0 %v2604
    %3098 = vmatprep.subr.mxu0 0.0
    %3099 = vmatpush1.msra.mxu0 0.0
    %3100 = vmatprep.subr.mxu0 0.0
    %3101 = vmatpush1.msra.mxu0 0.0
    %3102 = vmatprep.subr.mxu0 0.0
    %3103 = vmatpush1.msra.mxu0 0.0
    %3104 = vmatprep.subr.mxu0 0.0
    %3105 = vmatpush1.msra.mxu0 0.0
    %3106 = vmatprep.subr.mxu0 0.0
    %3107 = vmatpush1.msra.mxu0 0.0
    %3108 = vmatprep.subr.mxu0 0.0
    %3109 = vmatpush1.msra.mxu0 0.0
    %3110 = vmatprep.subr.mxu0 0.0
    %3111 = vmatpush1.msra.mxu0 0.0
    %3112 = vmatprep.subr.mxu0 0.0
    %3113 = vmatpush1.msra.mxu0 0.0
    %3114 = vmatprep.subr.mxu0 0.0
    %3115 = vmatpush1.msra.mxu0 0.0
    %3116 = vmatprep.subr.mxu0 0.0
    %3117 = vmatpush1.msra.mxu0 0.0
    %3118 = vmatprep.subr.mxu0 0.0
    %3119 = vmatpush1.msra.mxu0 0.0
    %3120 = vmatprep.subr.mxu0 0.0
    %3121 = vmatpush1.msra.mxu0 0.0
    %3122 = vmatprep.subr.mxu0 0.0
    %3123 = vmatpush1.msra.mxu0 0.0
    %3124 = vmatprep.subr.mxu0 0.0
    %3125 = vmatpush1.msra.mxu0 0.0
    %3126 = vmatprep.subr.mxu0 0.0
    %3127 = vmatpush1.msra.mxu0 0.0
    %3128 = vmatprep.subr.mxu0 0.0
    %3129 = vmatpush1.msra.mxu0 0.0
    %3130 = vmatprep.subr.mxu0 0.0
    %3131 = vmatpush1.msra.mxu0 0.0
    %3132 = vmatprep.subr.mxu0 0.0
    %3133 = vmatpush1.msra.mxu0 0.0
    %3134 = vmatprep.subr.mxu0 0.0
    %3135 = vmatpush1.msra.mxu0 0.0
    %3136 = vmatprep.subr.mxu0 0.0
    %3137 = vmatpush1.msra.mxu0 0.0
    %3138 = vmatprep.subr.mxu0 0.0
    %3139 = vmatpush1.msra.mxu0 0.0
    %3140 = vmatprep.subr.mxu0 0.0
    %3141 = vmatpush1.msra.mxu0 0.0
    %3142 = vmatprep.subr.mxu0 0.0
    %3143 = vmatpush1.msra.mxu0 0.0
    %3144 = vmatprep.subr.mxu0 0.0
    %3145 = vmatpush1.msra.mxu0 0.0
    %3146 = vmatprep.subr.mxu0 0.0
    %3147 = vmatpush1.msra.mxu0 0.0
    %3148 = vmatprep.subr.mxu0 0.0
    %3149 = vmatpush1.msra.mxu0 0.0
    %3150 = vmatprep.subr.mxu0 0.0
    %3151 = vmatpush1.msra.mxu0 0.0
    %3152 = vmatprep.subr.mxu0 0.0
    %3153 = vmatpush1.msra.mxu0 0.0
    %3154 = vmatprep.subr.mxu0 0.0
    %3155 = vmatpush1.msra.mxu0 0.0
    %3156 = vmatprep.subr.mxu0 0.0
    %3157 = vmatpush1.msra.mxu0 0.0
    %3158 = vmatprep.subr.mxu0 0.0
    %3159 = vmatpush1.msra.mxu0 0.0
    %3160 = vmatprep.mubr.f32.mxu0 0.0
    %3161 = vmatmul.mubr.f32.gmra.mrb[0].mxu0 %v3094
    %v3162 = vpop.f32.mrb[0].mxu0
    %v3163 = vadd.f32 0.0, %v3162
    %v3164 = vpop.f32.mrb[0].mxu0
    %3165 = vdwg.mxu0
    %3167 = vset.pattern.permute.xlu0 0
    %3168 = vperm.xlu0 %3167, %v1164
    %v3169 = vpop.permute.xlu0 %3168
    %v3170 = vlaneseq
    %v3171 = vshrl.u32 %v3170, 7
    %v3172 = vsub.s32 %v842, %v3171
    %v3173 = vrot.slane %v3169, %v3172
    %v3174 = vsel %vm608, %v3173, 0
    %3176 = vmatprep.subr.mxu0 0.0
    %3177 = vmatpush1.msra.mxu0 %v2605
    %3178 = vmatprep.subr.mxu0 0.0
    %3179 = vmatpush1.msra.mxu0 0.0
    %3180 = vmatprep.subr.mxu0 0.0
    %3181 = vmatpush1.msra.mxu0 0.0
    %3182 = vmatprep.subr.mxu0 0.0
    %3183 = vmatpush1.msra.mxu0 0.0
    %3184 = vmatprep.subr.mxu0 0.0
    %3185 = vmatpush1.msra.mxu0 0.0
    %3186 = vmatprep.subr.mxu0 0.0
    %3187 = vmatpush1.msra.mxu0 0.0
    %3188 = vmatprep.subr.mxu0 0.0
    %3189 = vmatpush1.msra.mxu0 0.0
    %3190 = vmatprep.subr.mxu0 0.0
    %3191 = vmatpush1.msra.mxu0 0.0
    %3192 = vmatprep.subr.mxu0 0.0
    %3193 = vmatpush1.msra.mxu0 0.0
    %3194 = vmatprep.subr.mxu0 0.0
    %3195 = vmatpush1.msra.mxu0 0.0
    %3196 = vmatprep.subr.mxu0 0.0
    %3197 = vmatpush1.msra.mxu0 0.0
    %3198 = vmatprep.subr.mxu0 0.0
    %3199 = vmatpush1.msra.mxu0 0.0
    %3200 = vmatprep.subr.mxu0 0.0
    %3201 = vmatpush1.msra.mxu0 0.0
    %3202 = vmatprep.subr.mxu0 0.0
    %3203 = vmatpush1.msra.mxu0 0.0
    %3204 = vmatprep.subr.mxu0 0.0
    %3205 = vmatpush1.msra.mxu0 0.0
    %3206 = vmatprep.subr.mxu0 0.0
    %3207 = vmatpush1.msra.mxu0 0.0
    %3208 = vmatprep.subr.mxu0 0.0
    %3209 = vmatpush1.msra.mxu0 0.0
    %3210 = vmatprep.subr.mxu0 0.0
    %3211 = vmatpush1.msra.mxu0 0.0
    %3212 = vmatprep.subr.mxu0 0.0
    %3213 = vmatpush1.msra.mxu0 0.0
    %3214 = vmatprep.subr.mxu0 0.0
    %3215 = vmatpush1.msra.mxu0 0.0
    %3216 = vmatprep.subr.mxu0 0.0
    %3217 = vmatpush1.msra.mxu0 0.0
    %3218 = vmatprep.subr.mxu0 0.0
    %3219 = vmatpush1.msra.mxu0 0.0
    %3220 = vmatprep.subr.mxu0 0.0
    %3221 = vmatpush1.msra.mxu0 0.0
    %3222 = vmatprep.subr.mxu0 0.0
    %3223 = vmatpush1.msra.mxu0 0.0
    %3224 = vmatprep.subr.mxu0 0.0
    %3225 = vmatpush1.msra.mxu0 0.0
    %3226 = vmatprep.subr.mxu0 0.0
    %3227 = vmatpush1.msra.mxu0 0.0
    %3228 = vmatprep.subr.mxu0 0.0
    %3229 = vmatpush1.msra.mxu0 0.0
    %3230 = vmatprep.subr.mxu0 0.0
    %3231 = vmatpush1.msra.mxu0 0.0
    %3232 = vmatprep.subr.mxu0 0.0
    %3233 = vmatpush1.msra.mxu0 0.0
    %3234 = vmatprep.subr.mxu0 0.0
    %3235 = vmatpush1.msra.mxu0 0.0
    %3236 = vmatprep.subr.mxu0 0.0
    %3237 = vmatpush1.msra.mxu0 0.0
    %3238 = vmatprep.subr.mxu0 0.0
    %3239 = vmatpush1.msra.mxu0 0.0
    %3240 = vmatprep.mubr.f32.mxu0 0.0
    %3241 = vmatmul.mubr.f32.gmra.mrb[0].mxu0 %v3174
    %v3242 = vpop.f32.mrb[0].mxu0
    %v3243 = vadd.f32 0.0, %v3242
    %v3244 = vpop.f32.mrb[0].mxu0
    %3245 = vdwg.mxu0
    %v3246 = vld [vmem:[#allocation12] sm:$0xff]
    %v3255 = vrot.slane %v2763, 7
    %v3256 = vsel %vm875, %v3255, %v2683
    %v3257 = vrot.slane %v2843, 6
    %v3258 = vsel %vm877, %v3257, %v3256
    %v3259 = vrot.slane %v2923, 5
    %v3260 = vsel %vm879, %v3259, %v3258
    %v3261 = vrot.slane %v3003, 4
    %v3262 = vsel %vm881, %v3261, %v3260
    %v3263 = vrot.slane %v3083, 3
    %v3264 = vsel %vm883, %v3263, %v3262
    %v3265 = vrot.slane %v3163, 2
    %v3266 = vsel %vm885, %v3265, %v3264
    %v3267 = vrot.slane %v3243, 1
    %v3268 = vsel %vm887, %v3267, %v3266
    %v3270 = vmul.f32 %v1803, %v3268
    %v3272 = vsel %vm608, %v3246, 0
    %3274 = vmatprep.subr.mxu0 0.0
    %3275 = vmatpush1.msra.mxu0 %v3270
    %3276 = vmatprep.subr.mxu0 0.0
    %3277 = vmatpush1.msra.mxu0 0.0
    %3278 = vmatprep.subr.mxu0 0.0
    %3279 = vmatpush1.msra.mxu0 0.0
    %3280 = vmatprep.subr.mxu0 0.0
    %3281 = vmatpush1.msra.mxu0 0.0
    %3282 = vmatprep.subr.mxu0 0.0
    %3283 = vmatpush1.msra.mxu0 0.0
    %3284 = vmatprep.subr.mxu0 0.0
    %3285 = vmatpush1.msra.mxu0 0.0
    %3286 = vmatprep.subr.mxu0 0.0
    %3287 = vmatpush1.msra.mxu0 0.0
    %3288 = vmatprep.subr.mxu0 0.0
    %3289 = vmatpush1.msra.mxu0 0.0
    %3290 = vmatprep.subr.mxu0 0.0
    %3291 = vmatpush1.msra.mxu0 0.0
    %3292 = vmatprep.subr.mxu0 0.0
    %3293 = vmatpush1.msra.mxu0 0.0
    %3294 = vmatprep.subr.mxu0 0.0
    %3295 = vmatpush1.msra.mxu0 0.0
    %3296 = vmatprep.subr.mxu0 0.0
    %3297 = vmatpush1.msra.mxu0 0.0
    %3298 = vmatprep.subr.mxu0 0.0
    %3299 = vmatpush1.msra.mxu0 0.0
    %3300 = vmatprep.subr.mxu0 0.0
    %3301 = vmatpush1.msra.mxu0 0.0
    %3302 = vmatprep.subr.mxu0 0.0
    %3303 = vmatpush1.msra.mxu0 0.0
    %3304 = vmatprep.subr.mxu0 0.0
    %3305 = vmatpush1.msra.mxu0 0.0
    %3306 = vmatprep.subr.mxu0 0.0
    %3307 = vmatpush1.msra.mxu0 0.0
    %3308 = vmatprep.subr.mxu0 0.0
    %3309 = vmatpush1.msra.mxu0 0.0
    %3310 = vmatprep.subr.mxu0 0.0
    %3311 = vmatpush1.msra.mxu0 0.0
    %3312 = vmatprep.subr.mxu0 0.0
    %3313 = vmatpush1.msra.mxu0 0.0
    %3314 = vmatprep.subr.mxu0 0.0
    %3315 = vmatpush1.msra.mxu0 0.0
    %3316 = vmatprep.subr.mxu0 0.0
    %3317 = vmatpush1.msra.mxu0 0.0
    %3318 = vmatprep.subr.mxu0 0.0
    %3319 = vmatpush1.msra.mxu0 0.0
    %3320 = vmatprep.subr.mxu0 0.0
    %3321 = vmatpush1.msra.mxu0 0.0
    %3322 = vmatprep.subr.mxu0 0.0
    %3323 = vmatpush1.msra.mxu0 0.0
    %3324 = vmatprep.subr.mxu0 0.0
    %3325 = vmatpush1.msra.mxu0 0.0
    %3326 = vmatprep.subr.mxu0 0.0
    %3327 = vmatpush1.msra.mxu0 0.0
    %3328 = vmatprep.subr.mxu0 0.0
    %3329 = vmatpush1.msra.mxu0 0.0
    %3330 = vmatprep.subr.mxu0 0.0
    %3331 = vmatpush1.msra.mxu0 0.0
    %3332 = vmatprep.subr.mxu0 0.0
    %3333 = vmatpush1.msra.mxu0 0.0
    %3334 = vmatprep.subr.mxu0 0.0
    %3335 = vmatpush1.msra.mxu0 0.0
    %3336 = vmatprep.subr.mxu0 0.0
    %3337 = vmatpush1.msra.mxu0 0.0
    %3338 = vmatprep.mubr.f32.mxu0 0.0
    %3339 = vmatmul.mubr.f32.gmra.mrb[0].mxu0 %v3272
    %v3340 = vpop.f32.mrb[0].mxu0
    %v3341 = vadd.f32 0.0, %v3340
    %v3342 = vpop.f32.mrb[0].mxu0
    %3343 = vdwg.mxu0
    %3345 = vrot.lane.b32.xlu0 %v3341, 32
    %v3346 = vpop.permute.xlu0 %3345
    %vm3348 = vcmask 785664
    %3349 = vst.msk [vmem:[#allocation2] sm:$0xff] %vm3348, %v3346
    %v3350 = vld [vmem:[#allocation2] sm:$0xff]
    %v3351 = vld [vmem:[%s20] sm:$0xff]
    %v3352 = vld [vmem:[%s20 + $0x8] sm:$0xff]
    %v3353 = vld [vmem:[%s20 + $0x10] sm:$0xff]
    %v3354 = vld [vmem:[%s20 + $0x18] sm:$0xff]
    %v3355 = vld [vmem:[%s20 + $0x20] sm:$0xff]
    %v3356 = vld [vmem:[%s20 + $0x28] sm:$0xff]
    %v3357 = vld [vmem:[%s20 + $0x30] sm:$0xff]
    %v3358 = vld [vmem:[%s20 + $0x38] sm:$0xff]
    %v3359 = vld [vmem:[%s20 + $0x40] sm:$0xff]
    %v3360 = vld [vmem:[%s20 + $0x48] sm:$0xff]
    %v3361 = vld [vmem:[%s20 + $0x50] sm:$0xff]
    %v3362 = vld [vmem:[%s20 + $0x58] sm:$0xff]
    %v3363 = vld [vmem:[#allocation20] sm:$0x1]
    %v3365 = vlaneseq
    %v3366 = vshrl.u32 %v3365, 7
    %v3367 = vsub.s32 0, %v3366
    %v3368 = vrot.slane %v3363, %v3367
    %vm3370 = vcmask 785408
    %v3372 = vsel %vm3370, %v3350, 0
    %3374 = vmatprep.subr.mxu0 0.0
    %3375 = vmatpush1.msra.mxu0 %v3351
    %3376 = vmatprep.subr.mxu0 0.0
    %3377 = vmatpush1.msra.mxu0 %v3352
    %3378 = vmatprep.subr.mxu0 0.0
    %3379 = vmatpush1.msra.mxu0 %v3353
    %3380 = vmatprep.subr.mxu0 0.0
    %3381 = vmatpush1.msra.mxu0 %v3354
    %3382 = vmatprep.subr.mxu0 0.0
    %3383 = vmatpush1.msra.mxu0 %v3355
    %3384 = vmatprep.subr.mxu0 0.0
    %3385 = vmatpush1.msra.mxu0 %v3356
    %3386 = vmatprep.subr.mxu0 0.0
    %3387 = vmatpush1.msra.mxu0 %v3357
    %3388 = vmatprep.subr.mxu0 0.0
    %3389 = vmatpush1.msra.mxu0 %v3358
    %3390 = vmatprep.subr.mxu0 0.0
    %3391 = vmatpush1.msra.mxu0 %v3359
    %3392 = vmatprep.subr.mxu0 0.0
    %3393 = vmatpush1.msra.mxu0 %v3360
    %3394 = vmatprep.subr.mxu0 0.0
    %3395 = vmatpush1.msra.mxu0 %v3361
    %3396 = vmatprep.subr.mxu0 0.0
    %3397 = vmatpush1.msra.mxu0 %v3362
    %3398 = vmatprep.subr.mxu0 0.0
    %3399 = vmatpush1.msra.mxu0 0.0
    %3400 = vmatprep.subr.mxu0 0.0
    %3401 = vmatpush1.msra.mxu0 0.0
    %3402 = vmatprep.subr.mxu0 0.0
    %3403 = vmatpush1.msra.mxu0 0.0
    %3404 = vmatprep.subr.mxu0 0.0
    %3405 = vmatpush1.msra.mxu0 0.0
    %3406 = vmatprep.subr.mxu0 0.0
    %3407 = vmatpush1.msra.mxu0 0.0
    %3408 = vmatprep.subr.mxu0 0.0
    %3409 = vmatpush1.msra.mxu0 0.0
    %3410 = vmatprep.subr.mxu0 0.0
    %3411 = vmatpush1.msra.mxu0 0.0
    %3412 = vmatprep.subr.mxu0 0.0
    %3413 = vmatpush1.msra.mxu0 0.0
    %3414 = vmatprep.subr.mxu0 0.0
    %3415 = vmatpush1.msra.mxu0 0.0
    %3416 = vmatprep.subr.mxu0 0.0
    %3417 = vmatpush1.msra.mxu0 0.0
    %3418 = vmatprep.subr.mxu0 0.0
    %3419 = vmatpush1.msra.mxu0 0.0
    %3420 = vmatprep.subr.mxu0 0.0
    %3421 = vmatpush1.msra.mxu0 0.0
    %3422 = vmatprep.subr.mxu0 0.0
    %3423 = vmatpush1.msra.mxu0 0.0
    %3424 = vmatprep.subr.mxu0 0.0
    %3425 = vmatpush1.msra.mxu0 0.0
    %3426 = vmatprep.subr.mxu0 0.0
    %3427 = vmatpush1.msra.mxu0 0.0
    %3428 = vmatprep.subr.mxu0 0.0
    %3429 = vmatpush1.msra.mxu0 0.0
    %3430 = vmatprep.subr.mxu0 0.0
    %3431 = vmatpush1.msra.mxu0 0.0
    %3432 = vmatprep.subr.mxu0 0.0
    %3433 = vmatpush1.msra.mxu0 0.0
    %3434 = vmatprep.subr.mxu0 0.0
    %3435 = vmatpush1.msra.mxu0 0.0
    %3436 = vmatprep.subr.mxu0 0.0
    %3437 = vmatpush1.msra.mxu0 0.0
    %3438 = vmatprep.mubr.f32.mxu0 0.0
    %3439 = vmatmul.mubr.f32.gmra.mrb[0].mxu0 %v3372
    %v3440 = vpop.f32.mrb[0].mxu0
    %v3441 = vadd.f32 %v3368, %v3440
    %v3442 = vpop.f32.mrb[0].mxu0
    %3443 = vdwg.mxu0
    %3445 = vrot.lane.b32.xlu0 %v605, 16
    %v3446 = vpop.permute.xlu0 %3445
    %v3448 = vadd.f32 %v301, %v3446
    %3450 = vrot.lane.b32.xlu0 %v3441, 112
    %v3451 = vpop.permute.xlu0 %3450
    %v3453 = vadd.f32 %v3448, %v3451
    %v3454 = vxor.u32 %v3453, 2147483648
    %v3455 = vmul.f32 %v3454, 1.442695
    %v3456 = vpow.pop %v3455
    %v3457 = vadd.f32 %v3456, 1.0
    %v3458 = vrcp.pop %v3457
    %v3459 = vmul.f32 1.0, %v3458
    %v3460 = vld [vmem:[%s22] sm:$0xff]
    %v3461 = vld [vmem:[%s22 + $0x8] sm:$0xff]
    %v3462 = vld [vmem:[%s22 + $0x10] sm:$0xff]
    %v3463 = vld [vmem:[%s22 + $0x18] sm:$0xff]
    %v3464 = vld [vmem:[%s23] sm:$0x1]
    %v3466 = vlaneseq
    %v3467 = vshrl.u32 %v3466, 7
    %v3468 = vsub.s32 0, %v3467
    %v3469 = vrot.slane %v3464, %v3468
    %v3471 = vsel %vm311, %v3441, 0
    %3473 = vmatprep.subr.mxu0 0.0
    %3474 = vmatpush1.msra.mxu0 %v3460
    %3475 = vmatprep.subr.mxu0 0.0
    %3476 = vmatpush1.msra.mxu0 %v3461
    %3477 = vmatprep.subr.mxu0 0.0
    %3478 = vmatpush1.msra.mxu0 %v3462
    %3479 = vmatprep.subr.mxu0 0.0
    %3480 = vmatpush1.msra.mxu0 %v3463
    %3481 = vmatprep.subr.mxu0 0.0
    %3482 = vmatpush1.msra.mxu0 0.0
    %3483 = vmatprep.subr.mxu0 0.0
    %3484 = vmatpush1.msra.mxu0 0.0
    %3485 = vmatprep.subr.mxu0 0.0
    %3486 = vmatpush1.msra.mxu0 0.0
    %3487 = vmatprep.subr.mxu0 0.0
    %3488 = vmatpush1.msra.mxu0 0.0
    %3489 = vmatprep.subr.mxu0 0.0
    %3490 = vmatpush1.msra.mxu0 0.0
    %3491 = vmatprep.subr.mxu0 0.0
    %3492 = vmatpush1.msra.mxu0 0.0
    %3493 = vmatprep.subr.mxu0 0.0
    %3494 = vmatpush1.msra.mxu0 0.0
    %3495 = vmatprep.subr.mxu0 0.0
    %3496 = vmatpush1.msra.mxu0 0.0
    %3497 = vmatprep.subr.mxu0 0.0
    %3498 = vmatpush1.msra.mxu0 0.0
    %3499 = vmatprep.subr.mxu0 0.0
    %3500 = vmatpush1.msra.mxu0 0.0
    %3501 = vmatprep.subr.mxu0 0.0
    %3502 = vmatpush1.msra.mxu0 0.0
    %3503 = vmatprep.subr.mxu0 0.0
    %3504 = vmatpush1.msra.mxu0 0.0
    %3505 = vmatprep.subr.mxu0 0.0
    %3506 = vmatpush1.msra.mxu0 0.0
    %3507 = vmatprep.subr.mxu0 0.0
    %3508 = vmatpush1.msra.mxu0 0.0
    %3509 = vmatprep.subr.mxu0 0.0
    %3510 = vmatpush1.msra.mxu0 0.0
    %3511 = vmatprep.subr.mxu0 0.0
    %3512 = vmatpush1.msra.mxu0 0.0
    %3513 = vmatprep.subr.mxu0 0.0
    %3514 = vmatpush1.msra.mxu0 0.0
    %3515 = vmatprep.subr.mxu0 0.0
    %3516 = vmatpush1.msra.mxu0 0.0
    %3517 = vmatprep.subr.mxu0 0.0
    %3518 = vmatpush1.msra.mxu0 0.0
    %3519 = vmatprep.subr.mxu0 0.0
    %3520 = vmatpush1.msra.mxu0 0.0
    %3521 = vmatprep.subr.mxu0 0.0
    %3522 = vmatpush1.msra.mxu0 0.0
    %3523 = vmatprep.subr.mxu0 0.0
    %3524 = vmatpush1.msra.mxu0 0.0
    %3525 = vmatprep.subr.mxu0 0.0
    %3526 = vmatpush1.msra.mxu0 0.0
    %3527 = vmatprep.subr.mxu0 0.0
    %3528 = vmatpush1.msra.mxu0 0.0
    %3529 = vmatprep.subr.mxu0 0.0
    %3530 = vmatpush1.msra.mxu0 0.0
    %3531 = vmatprep.subr.mxu0 0.0
    %3532 = vmatpush1.msra.mxu0 0.0
    %3533 = vmatprep.subr.mxu0 0.0
    %3534 = vmatpush1.msra.mxu0 0.0
    %3535 = vmatprep.subr.mxu0 0.0
    %3536 = vmatpush1.msra.mxu0 0.0
    %3537 = vmatprep.mubr.f32.mxu0 0.0
    %3538 = vmatmul.mubr.f32.gmra.mrb[0].mxu0 %v3471
    %v3539 = vpop.f32.mrb[0].mxu0
    %v3540 = vadd.f32 %v3469, %v3539
    %v3541 = vpop.f32.mrb[0].mxu0
    %3542 = vdwg.mxu0
    %3543 = vmax.xlane.f32.xlu0 %v3540
    %v3544 = vpop.xlane.xlu0 %3543
    %v3545 = vsub.f32 %v3540, %v3544
    %v3546 = vmul.f32 %v3545, 1.442695
    %v3547 = vpow.pop %v3546
    %3548 = vadd.xlane.f32.xlu0 %v3547
    %v3549 = vpop.xlane.xlu0 %3548
    %v3550 = vrcp.pop %v3549
    %v3551 = vmul.f32 %v3547, %v3550
    %3553 = vset.pattern.permute.xlu0 16
    %3554 = vperm.xlu0 %3553, %v3459
    %v3555 = vpop.permute.xlu0 %3554
    %v3557 = vmul.f32 %v3555, %v3551
    %3558 = vst [vmem:[#allocation22] sm:$0xff] %v3557
    %3559 = vst [vmem:[#allocation21] sm:$0xff] 0.0
    %3560 = vst [vmem:[#allocation21 + $0x8] sm:$0xff] 0.0
    %3561 = vst.msk [vmem:[#allocation21] sm:$0xff] %vm311, %v498
    %3562 = vst.msk [vmem:[#allocation21] sm:$0xff] %vm501, %v489
    %3563 = vrot.lane.b32.xlu0 %v3341, 64
    %v3564 = vpop.permute.xlu0 %3563
    %vm3566 = vcmask 1048064
    %3567 = vst.msk [vmem:[#allocation21] sm:$0xff] %vm3566, %v3564
    %3568 = vst.msk [vmem:[#allocation21 + $0x8] sm:$0xff] %vm385, %v2595
    %v3569 = vsub.f32 1.0, %v3459
    %3571 = vset.pattern.permute.xlu0 16
    %3572 = vperm.xlu0 %3571, %v3569
    %v3573 = vpop.permute.xlu0 %3572
    %v3575 = vmul.f32 %v3573, %v2595
    %3577 = vrot.lane.b32.xlu0 %v3575, 16
    %v3578 = vpop.permute.xlu0 %3577
    %vm3580 = vcmask 261248
    %3581 = vst.msk [vmem:[#allocation21 + $0x8] sm:$0xff] %vm3580, %v3578
    %3582 = vrot.lane.b32.xlu0 %v3459, 16
    %v3583 = vpop.permute.xlu0 %3582
    %vm3585 = vcmask 269568
    %3586 = vst.msk [vmem:[#allocation21 + $0x8] sm:$0xff] %vm3585, %v3583
    // Predicated region
    $region142: #{tpu_custom_call.1} parent=1 // pred_check
      _
    $region143: #{tpu_custom_call.1} parent=1 // pred_check_branch
      %3588 = sbr.rel (0) target = $region145
    $region144: #{tpu_custom_call.1} parent=1 // pred_region
      %s3590 = ssub.s32 256, 256
      %3591 = vsyncadd [#allocation5], %s3590
      %s3593 = sshll.u32 [#allocation21], 4
      %s3594 = int_to_ptr.vmem [resolvable:$true] %s3593
      %3596 = dma.vmem_to_hbm [thread:$0]  %s3594, 256, %s24, [#allocation5]
    $region145: #{tpu_custom_call.1} parent=1 // pred_fallthru
      _
    // Predicated region
    $region146: #{tpu_custom_call.1} parent=1 // pred_check
      _
    $region147: #{tpu_custom_call.1} parent=1 // pred_check_branch
      %3598 = sbr.rel (0) target = $region149
    $region148: #{tpu_custom_call.1} parent=1 // pred_region
      %s3600 = ssub.s32 128, 128
      %3601 = vsyncadd [#allocation23], %s3600
      %s3603 = sshll.u32 [#allocation22], 4
      %s3604 = int_to_ptr.vmem [resolvable:$true] %s3603
      %3606 = dma.vmem_to_hbm [thread:$0]  %s3604, 128, %s25, [#allocation23]
    $region149: #{tpu_custom_call.1} parent=1 // pred_fallthru
      _
    // Predicated region
    $region150: #{tpu_custom_call.1} parent=1 // pred_check
      _
    $region151: #{tpu_custom_call.1} parent=1 // pred_check_branch
      %3608 = sbr.rel (0) target = $region153
    $region152: #{tpu_custom_call.1} parent=1 // pred_region
      %3609 = dma.done [#allocation5], 256
    $region153: #{tpu_custom_call.1} parent=1 // pred_fallthru
      _
    // Predicated region
    $region154: #{tpu_custom_call.1} parent=1 // pred_check
      _
    $region155: #{tpu_custom_call.1} parent=1 // pred_check_branch
      %3611 = sbr.rel (0) target = $region157
    $region156: #{tpu_custom_call.1} parent=1 // pred_region
      %3612 = dma.done [#allocation23], 128
    $region157: #{tpu_custom_call.1} parent=1 // pred_fallthru
      _
    %3613 = vsyncpa [#allocation4], 1
    %3614 = vsyncpa [#allocation7], 1
    %3615 = vsyncpa [#allocation10], 1
    %3616 = vsyncpa [#allocation13], 1
    %3617 = vsyncpa [#allocation16], 1
    %3618 = vsyncpa [#allocation19], 1
    %3619 = vsyncpa [#allocation5], 1
    %3620 = vsyncpa [#allocation23], 1

</llo_original>
